<compile_context>
chip_gen: v5e
topology: v5e:2x2
jax: 0.10.0
libtpu: 0.0.40
codegen_flags: <defaults>
</compile_context>

<pallas_src>
import functools

import jax
import jax.numpy as jnp
from jax.experimental import pallas as pl
from jax.experimental.pallas import tpu as pltpu


def _round_up(x, m):
    return ((x + m - 1) // m) * m


def _gru_recurrence_kernel(
    gi_f_ref,        # (Tc, B, 3*Hp)  precomputed input gates, forward dir, chunk c
    gi_b_ref,        # (Tc, B, 3*Hp)  precomputed input gates, backward dir, chunk nc-1-c
    bhn_ref,         # (2, B, Hp)     b_hn per direction, pre-broadcast to (B, Hp)
    whh_hbm_ref,     # (2, Hp, 3*Hp)  fused per-direction W_hh^T (left in HBM)
    of_ref,          # (Tc, B, Hp)    forward-dir output (forward time order)
    ob_ref,          # (Tc, B, Hp)    backward-dir output (forward time order)
    whh_vmem,        # scratch (2, Hp, 3*Hp)  weights, single-buffered, DMA'd once
    dma_sem,         # scratch DMA semaphore (1,)
    hf_scratch,      # (B, Hp) hidden-state carry across chunks, forward
    hb_scratch,      # (B, Hp) hidden-state carry across chunks, backward
    *, t_chunk, t_real, hp, unroll, mask_tail,
):
    c = pl.program_id(0)
    nc = pl.num_programs(0)

    @pl.when(c == 0)
    def _():
        # Copy the constant weights into single-buffered VMEM scratch exactly once.
        cp = pltpu.make_async_copy(whh_hbm_ref, whh_vmem, dma_sem.at[0])
        cp.start()
        cp.wait()
        hf_scratch[...] = jnp.zeros_like(hf_scratch)
        hb_scratch[...] = jnp.zeros_like(hb_scratch)

    # Loaded once per chunk (constant across the inner loop).
    whh_f = whh_vmem[0]          # (Hp, 3*Hp)
    whh_b = whh_vmem[1]
    bhn_f = bhn_ref[0]           # (B, Hp) -- already broadcast, nothing re-emitted per step
    bhn_b = bhn_ref[1]

    def sigmoid(x):              # 1 EUP op (tanh) instead of 2 (exp + reciprocal)
        return 0.5 * (1.0 + jnp.tanh(0.5 * x))

    def cell(h, gi, whh, bhn):
        # One fused MXU push per step: (B,Hp) x (Hp,3Hp); lane-aligned gate slices.
        gh = jnp.dot(h.astype(whh.dtype), whh, preferred_element_type=jnp.float32)
        gi = gi.astype(jnp.float32)
        r = sigmoid(gi[:, :hp] + gh[:, :hp])
        z = sigmoid(gi[:, hp:2 * hp] + gh[:, hp:2 * hp])
        n = jnp.tanh(gi[:, 2 * hp:] + r * (gh[:, 2 * hp:] + bhn))
        return (1.0 - z) * n + z * h

    def body(j, carry):
        h_f, h_b = carry
        # Forward direction: local time j (global time c*Tc + j).
        h_f = cell(h_f, gi_f_ref[j], whh_f, bhn_f)
        of_ref[j] = h_f
        # Backward direction: reversed local time inside the (reversed) chunk.
        jb = t_chunk - 1 - j
        h_b_new = cell(h_b, gi_b_ref[jb], whh_b, bhn_b)
        if mask_tail:
            # Padded tail steps (global time >= t_real) must not perturb the
            # backward recurrence: keep h_b unchanged through them.
            t_b = (nc - 1 - c) * t_chunk + jb
            m = (t_b < t_real).astype(jnp.float32)
            h_b = m * h_b_new + (1.0 - m) * h_b
        else:
            h_b = h_b_new
        ob_ref[jb] = h_b
        return (h_f, h_b)

    h_f, h_b = jax.lax.fori_loop(
        0, t_chunk, body, (hf_scratch[...], hb_scratch[...]), unroll=unroll)
    hf_scratch[...] = h_f
    hb_scratch[...] = h_b


def _pick_time_chunk(T, per_t_bytes, max_chunk=64, vmem_budget=12 << 20):
    """Pick a time-chunk size capped by a VMEM budget; pad-and-mask if no divisor."""
    cap = max(1, min(max_chunk, T, vmem_budget // max(per_t_bytes, 1)))
    best_div = max(c for c in range(1, cap + 1) if T % c == 0)
    if best_div >= min(cap, 16) or best_div == T:
        return best_div
    # No good divisor: use roughly-even chunks and pad the tail (masked in-kernel).
    n = -(-T // cap)
    return -(-T // n)


def _prep_direction(w_ih, w_hh, b_ih, b_hh, H, Hp, compute_dtype):
    """PyTorch-layout GRU weights -> lane-dense, gate-fused, H-padded tensors."""
    D = w_ih.shape[1]
    pad_h = Hp - H

    # Input projection weights, gate-concatenated along the lane axis: (D, 3*Hp).
    w_ih_g = jnp.pad(w_ih.reshape(3, H, D), ((0, 0), (0, pad_h), (0, 0)))
    w_ih_cat = jnp.transpose(w_ih_g, (2, 0, 1)).reshape(D, 3 * Hp)

    # b_ih fully folded; b_hh folded for r/z gates only (b_hn stays on the hot path).
    gate_fold = jnp.array([1.0, 1.0, 0.0], jnp.float32)[:, None]
    bias = b_ih.reshape(3, H) + b_hh.reshape(3, H) * gate_fold
    bias_cat = jnp.pad(bias, ((0, 0), (0, pad_h))).reshape(3 * Hp)

    # Hidden-to-hidden: per-gate W_g.T, padded, gate-concatenated -> (Hp, 3*Hp).
    w_hh_t = jnp.transpose(w_hh.reshape(3, H, H), (0, 2, 1))
    w_hh_p = jnp.pad(w_hh_t, ((0, 0), (0, pad_h), (0, pad_h)))
    w_hh_cat = jnp.transpose(w_hh_p, (1, 0, 2)).reshape(Hp, 3 * Hp).astype(compute_dtype)

    b_hn = jnp.pad(b_hh.reshape(3, H)[2], (0, pad_h))          # (Hp,)
    return w_ih_cat, bias_cat, w_hh_cat, b_hn


def encoder_forward(x, params, t_chunk=None, compute_dtype=jnp.float32):
    """Bidirectional GRU forward. x: (B, T, D) float32 -> (B, T, 2*H) float32."""
    B, T, D = x.shape
    H = params["w_hh_f"].shape[0] // 3
    Hp = _round_up(max(H, 128), 128)            # lane-dense hidden width
    x = x.astype(jnp.float32)

    itemsize = jnp.dtype(compute_dtype).itemsize
    # Bytes of pipelined (double-buffered) streams per unit of t_chunk: gi (both dirs)
    # + outputs (both dirs).
    per_t_bytes = 2 * 2 * B * 3 * Hp * itemsize + 2 * 2 * B * Hp * 4
    if t_chunk is None:
        t_chunk = _pick_time_chunk(T, per_t_bytes)
    num_chunks = -(-T // t_chunk)
    T_pad = num_chunks * t_chunk
    mask_tail = T_pad != T
    unroll = max(1, min(t_chunk, 8))            # bounded unroll

    wif, bif, whf, bhnf = _prep_direction(
        params["w_ih_f"], params["w_hh_f"], params["b_ih_f"], params["b_hh_f"],
        H, Hp, compute_dtype)
    wib, bib, whb, bhnb = _prep_direction(
        params["w_ih_b"], params["w_hh_b"], params["b_ih_b"], params["b_hh_b"],
        H, Hp, compute_dtype)

    # Hoisted input projection: one (T*B, D) x (D, 3*Hp) matmul per direction,
    # emitted time-major & lane-dense as (T, B, 3*Hp); zero-padded along time.
    def project(w_cat, b_cat):
        gi = jnp.einsum("btd,de->tbe", x, w_cat) + b_cat
        gi = gi.astype(compute_dtype)
        if T_pad != T:
            gi = jnp.pad(gi, ((0, T_pad - T), (0, 0), (0, 0)))
        return gi

    gi_f = project(wif, bif)
    gi_b = project(wib, bib)

    whh = jnp.stack([whf, whb])                                      # (2, Hp, 3*Hp)
    bhn = jnp.broadcast_to(jnp.stack([bhnf, bhnb])[:, None, :],      # (2, B, Hp)
                           (2, B, Hp)).astype(jnp.float32)

    kernel = functools.partial(
        _gru_recurrence_kernel,
        t_chunk=t_chunk, t_real=T, hp=Hp, unroll=unroll, mask_tail=mask_tail)

    whh_bytes = 2 * Hp * 3 * Hp * itemsize
    vmem_needed = (t_chunk * per_t_bytes            # double-buffered gi + outputs
                   + whh_bytes                      # single-buffered weight scratch
                   + 2 * 2 * B * Hp * 4             # bhn (double-buffered)
                   + 2 * B * Hp * 4)                # hidden-state carries
    vmem_limit = int(min(max(2 * vmem_needed, 32 << 20), 100 << 20))

    cost = pl.CostEstimate(
        flops=2 * T_pad * 2 * B * Hp * 3 * Hp,                 # 2 dirs * 1 fused dot / step
        transcendentals=2 * T_pad * 3 * B * Hp,                # 3 tanh-class ops / step / dir
        bytes_accessed=(2 * T_pad * B * 3 * Hp * itemsize      # gi both dirs
                        + whh_bytes                            # weights (once)
                        + 2 * T_pad * B * Hp * 4),             # outputs
    )

    grid_spec = pltpu.PrefetchScalarGridSpec(
        num_scalar_prefetch=0,
        grid=(num_chunks,),
        in_specs=[
            pl.BlockSpec((t_chunk, B, 3 * Hp), lambda c: (c, 0, 0)),                   # gi_f
            pl.BlockSpec((t_chunk, B, 3 * Hp), lambda c: (num_chunks - 1 - c, 0, 0)),  # gi_b
            pl.BlockSpec((2, B, Hp), lambda c: (0, 0, 0)),                             # bhn
            pl.BlockSpec(memory_space=pl.ANY),                                         # whh (HBM)
        ],
        out_specs=[
            pl.BlockSpec((t_chunk, B, Hp), lambda c: (c, 0, 0)),                   # fwd out
            pl.BlockSpec((t_chunk, B, Hp), lambda c: (num_chunks - 1 - c, 0, 0)),  # bwd out
        ],
        scratch_shapes=[
            pltpu.VMEM((2, Hp, 3 * Hp), compute_dtype),   # weights, single-buffered
            pltpu.SemaphoreType.DMA((1,)),                # weight-copy semaphore
            pltpu.VMEM((B, Hp), jnp.float32),             # forward hidden-state carry
            pltpu.VMEM((B, Hp), jnp.float32),             # backward hidden-state carry
        ],
    )

    out_f, out_b = pl.pallas_call(
        kernel,
        out_shape=(
            jax.ShapeDtypeStruct((T_pad, B, Hp), jnp.float32),
            jax.ShapeDtypeStruct((T_pad, B, Hp), jnp.float32),
        ),
        grid_spec=grid_spec,
        compiler_params=pltpu.CompilerParams(
            dimension_semantics=("arbitrary",),     # sequential recurrence over time chunks
            vmem_limit_bytes=vmem_limit,
        ),
        cost_estimate=cost,
    )(gi_f, gi_b, bhn, whh)

    out = jnp.concatenate([out_f[:T, :, :H], out_b[:T, :, :H]], axis=-1)   # (T, B, 2H)
    return jnp.transpose(out, (1, 0, 2))                                   # (B, T, 2H)


def init_encoder_params(key, input_dim, hidden_size):
    """PyTorch-style GRU params: uniform(-1/sqrt(H), 1/sqrt(H)), shapes (3H, D)/(3H, H)/(3H,)."""
    k = 1.0 / jnp.sqrt(jnp.float32(hidden_size))
    keys = jax.random.split(key, 8)
    u = lambda kk, shape: jax.random.uniform(kk, shape, jnp.float32, -k, k)
    H, D = hidden_size, input_dim
    return {
        "w_ih_f": u(keys[0], (3 * H, D)),
        "w_hh_f": u(keys[1], (3 * H, H)),
        "b_ih_f": u(keys[2], (3 * H,)),
        "b_hh_f": u(keys[3], (3 * H,)),
        "w_ih_b": u(keys[4], (3 * H, D)),
        "w_hh_b": u(keys[5], (3 * H, H)),
        "b_ih_b": u(keys[6], (3 * H,)),
        "b_hh_b": u(keys[7], (3 * H,)),
    }


def _gru_reference(x, params):
    """Pure-JAX reference implementing torch.nn.GRU bidirectional forward."""
    B, T, D = x.shape
    H = params["w_hh_f"].shape[0] // 3

    def cell(x_t, h, w_ih, w_hh, b_ih, b_hh):
        gi = x_t @ w_ih.T + b_ih
        gh = h @ w_hh.T + b_hh
        i_r, i_z, i_n = gi[:, :H], gi[:, H:2 * H], gi[:, 2 * H:]
        h_r, h_z, h_n = gh[:, :H], gh[:, H:2 * H], gh[:, 2 * H:]
        r = jax.nn.sigmoid(i_r + h_r)
        z = jax.nn.sigmoid(i_z + h_z)
        n = jnp.tanh(i_n + r * h_n)
        return (1.0 - z) * n + z * h

    def run(xs, w_ih, w_hh, b_ih, b_hh):
        def step(h, x_t):
            h_new = cell(x_t, h, w_ih, w_hh, b_ih, b_hh)
            return h_new, h_new
        _, hs = jax.lax.scan(step, jnp.zeros((B, H), jnp.float32), xs)
        return hs  # (T, B, H)

    x_tm = jnp.transpose(x, (1, 0, 2))
    hs_f = run(x_tm, params["w_ih_f"], params["w_hh_f"], params["b_ih_f"], params["b_hh_f"])
    hs_b = run(x_tm[::-1], params["w_ih_b"], params["w_hh_b"], params["b_ih_b"], params["b_hh_b"])[::-1]
    out = jnp.concatenate([hs_f, hs_b], axis=-1)
    return jnp.transpose(out, (1, 0, 2))


if __name__ == "__main__":
    B, T, D, H = 2, 8, 16, 32   # batch, seq, input_dim, hidden_size (output_dim)

    key = jax.random.PRNGKey(0)
    k_x, k_p, k_x2 = jax.random.split(key, 3)
    x = jax.random.normal(k_x, (B, T, D), jnp.float32)
    params = init_encoder_params(k_p, D, H)

    out = jax.block_until_ready(jax.jit(encoder_forward)(x, params))
    assert out.shape == (B, T, 2 * H), out.shape
    ref = _gru_reference(x, params)
    err = float(jnp.max(jnp.abs(out - ref)))
    assert jnp.allclose(out, ref, rtol=1e-4, atol=5e-4), err

    # Ragged-T path: T not a multiple of t_chunk -> time padding + masked bwd tail steps.
    T2 = 10
    x2 = jax.random.normal(k_x2, (B, T2, D), jnp.float32)
    out2 = jax.block_until_ready(
        jax.jit(functools.partial(encoder_forward, t_chunk=4))(x2, params))
    ref2 = _gru_reference(x2, params)
    err2 = float(jnp.max(jnp.abs(out2 - ref2)))
    assert out2.shape == (B, T2, 2 * H), out2.shape
    assert jnp.allclose(out2, ref2, rtol=1e-4, atol=5e-4), err2

    print("KERNEL_OK")
</pallas_src>

<mosaic_0001>
module attributes {stable_mosaic.version = 11 : i64} {
  func.func @_gru_recurrence_kernel(%arg0: i32, %arg1: memref<8x2x384xf32, #tpu.memory_space<vmem>>, %arg2: memref<8x2x384xf32, #tpu.memory_space<vmem>>, %arg3: memref<2x2x128xf32, #tpu.memory_space<vmem>>, %arg4: memref<2x128x384xf32, #tpu.memory_space<any>>, %arg5: memref<8x2x128xf32, #tpu.memory_space<vmem>>, %arg6: memref<8x2x128xf32, #tpu.memory_space<vmem>>, %arg7: memref<2x128x384xf32, #tpu.memory_space<vmem>>, %arg8: memref<1x!tpu.dma_semaphore, #tpu.memory_space<semaphore_mem>>, %arg9: memref<2x128xf32, #tpu.memory_space<vmem>>, %arg10: memref<2x128xf32, #tpu.memory_space<vmem>>) attributes {dimension_semantics = [#tpu.dimension_semantics<arbitrary>], iteration_bounds = array<i64: 1>, scalar_prefetch = 0 : i64, scratch_operands = 4 : i64, tpu.core_type = #tpu.core_type<tc>, window_params = [{transform_indices = @transform_0, window_bounds = array<i64: 8, 2, 384>}, {transform_indices = @transform_1, window_bounds = array<i64: 8, 2, 384>}, {pipeline_mode = #tpu.pipeline_mode<synchronous>, transform_indices = @transform_2, window_bounds = array<i64: 2, 2, 128>}, {}, {transform_indices = @transform_4, window_bounds = array<i64: 8, 2, 128>}, {transform_indices = @transform_5, window_bounds = array<i64: 8, 2, 128>}]} {
    %c0_i32 = arith.constant 0 : i32
    %0 = arith.cmpi eq, %arg0, %c0_i32 : i32
    %1 = arith.extui %0 : i1 to i32
    %c0_i32_0 = arith.constant 0 : i32
    %2 = arith.cmpi ne, %1, %c0_i32_0 : i32
    scf.if %2 {
      %c0_i32_219 = arith.constant 0 : i32
      %647 = tpu.memref_slice %arg8[%c0_i32_219] : memref<1x!tpu.dma_semaphore, #tpu.memory_space<semaphore_mem>> -> memref<1x!tpu.dma_semaphore, #tpu.memory_space<semaphore_mem>>
      %648 = tpu.memref_squeeze %647 : memref<1x!tpu.dma_semaphore, #tpu.memory_space<semaphore_mem>> -> memref<!tpu.dma_semaphore, #tpu.memory_space<semaphore_mem>>
      tpu.enqueue_dma source(%arg4 : memref<2x128x384xf32, #tpu.memory_space<any>>) target(%arg7 : memref<2x128x384xf32, #tpu.memory_space<vmem>>) target_semaphore(%648 : memref<!tpu.dma_semaphore, #tpu.memory_space<semaphore_mem>>)
      %c0_i32_220 = arith.constant 0 : i32
      %649 = tpu.memref_slice %arg8[%c0_i32_220] : memref<1x!tpu.dma_semaphore, #tpu.memory_space<semaphore_mem>> -> memref<1x!tpu.dma_semaphore, #tpu.memory_space<semaphore_mem>>
      %650 = tpu.memref_squeeze %649 : memref<1x!tpu.dma_semaphore, #tpu.memory_space<semaphore_mem>> -> memref<!tpu.dma_semaphore, #tpu.memory_space<semaphore_mem>>
      tpu.wait_dma2 semaphore(%650 : memref<!tpu.dma_semaphore, #tpu.memory_space<semaphore_mem>>) src(%arg4 : memref<2x128x384xf32, #tpu.memory_space<any>>) dst(%arg7 : memref<2x128x384xf32, #tpu.memory_space<vmem>>)
      %cst_221 = arith.constant 0.000000e+00 : f32
      %651 = vector.broadcast %cst_221 : f32 to vector<2x128xf32>
      %c0_222 = arith.constant 0 : index
      %c0_223 = arith.constant 0 : index
      %652 = vector.load %arg9[%c0_222, %c0_223] : memref<2x128xf32, #tpu.memory_space<vmem>>, vector<2x128xf32>
      tpu.vector_store %arg9[%c0_222, %c0_223], %651 {strides = array<i32>} : memref<2x128xf32, #tpu.memory_space<vmem>>, vector<2x128xf32>,
      %cst_224 = arith.constant 0.000000e+00 : f32
      %653 = vector.broadcast %cst_224 : f32 to vector<2x128xf32>
      %c0_225 = arith.constant 0 : index
      %c0_226 = arith.constant 0 : index
      %654 = vector.load %arg10[%c0_225, %c0_226] : memref<2x128xf32, #tpu.memory_space<vmem>>, vector<2x128xf32>
      tpu.vector_store %arg10[%c0_225, %c0_226], %653 {strides = array<i32>} : memref<2x128xf32, #tpu.memory_space<vmem>>, vector<2x128xf32>,
    } else {
    }
    %c0 = arith.constant 0 : index
    %c0_1 = arith.constant 0 : index
    %c0_2 = arith.constant 0 : index
    %3 = vector.load %arg7[%c0, %c0_1, %c0_2] : memref<2x128x384xf32, #tpu.memory_space<vmem>>, vector<1x128x384xf32>
    %4 = vector.shape_cast %3 : vector<1x128x384xf32> to vector<128x384xf32>
    %c1 = arith.constant 1 : index
    %c0_3 = arith.constant 0 : index
    %c0_4 = arith.constant 0 : index
    %5 = vector.load %arg7[%c1, %c0_3, %c0_4] : memref<2x128x384xf32, #tpu.memory_space<vmem>>, vector<1x128x384xf32>
    %6 = vector.shape_cast %5 : vector<1x128x384xf32> to vector<128x384xf32>
    %c0_5 = arith.constant 0 : index
    %c0_6 = arith.constant 0 : index
    %c0_7 = arith.constant 0 : index
    %7 = vector.load %arg3[%c0_5, %c0_6, %c0_7] : memref<2x2x128xf32, #tpu.memory_space<vmem>>, vector<1x2x128xf32>
    %8 = vector.shape_cast %7 : vector<1x2x128xf32> to vector<2x128xf32>
    %c1_8 = arith.constant 1 : index
    %c0_9 = arith.constant 0 : index
    %c0_10 = arith.constant 0 : index
    %9 = vector.load %arg3[%c1_8, %c0_9, %c0_10] : memref<2x2x128xf32, #tpu.memory_space<vmem>>, vector<1x2x128xf32>
    %10 = vector.shape_cast %9 : vector<1x2x128xf32> to vector<2x128xf32>
    %c0_11 = arith.constant 0 : index
    %c0_12 = arith.constant 0 : index
    %11 = vector.load %arg9[%c0_11, %c0_12] : memref<2x128xf32, #tpu.memory_space<vmem>>, vector<2x128xf32>
    %c0_13 = arith.constant 0 : index
    %c0_14 = arith.constant 0 : index
    %12 = vector.load %arg10[%c0_13, %c0_14] : memref<2x128xf32, #tpu.memory_space<vmem>>, vector<2x128xf32>
    %c0_i32_15 = arith.constant 0 : i32
    %13 = arith.index_cast %c0_i32_15 : i32 to index
    %c0_16 = arith.constant 0 : index
    %c0_17 = arith.constant 0 : index
    %14 = vector.load %arg1[%13, %c0_16, %c0_17] : memref<8x2x384xf32, #tpu.memory_space<vmem>>, vector<1x2x384xf32>
    %15 = vector.shape_cast %14 : vector<1x2x384xf32> to vector<2x384xf32>
    %cst = arith.constant dense<0.000000e+00> : vector<2x384xf32>
    %16 = tpu.matmul %11, %4, %cst {dimension_numbers = #tpu.dot_dimension_numbers<[1], [0], [0], [1], [0, 0, 1, 1], [], []>} : vector<2x128xf32>, vector<128x384xf32>, vector<2x384xf32> -> vector<2x384xf32>
    %17 = vector.extract_strided_slice %15 {offsets = [0, 0], sizes = [2, 128], strides = [1, 1]} : vector<2x384xf32> to vector<2x128xf32>
    %18 = vector.extract_strided_slice %16 {offsets = [0, 0], sizes = [2, 128], strides = [1, 1]} : vector<2x384xf32> to vector<2x128xf32>
    %19 = arith.addf %17, %18 : vector<2x128xf32>
    %cst_18 = arith.constant 5.000000e-01 : f32
    %20 = vector.broadcast %cst_18 : f32 to vector<2x128xf32>
    %21 = arith.mulf %20, %19 : vector<2x128xf32>
    %22 = math.tanh %21 : vector<2x128xf32>
    %cst_19 = arith.constant 1.000000e+00 : f32
    %23 = vector.broadcast %cst_19 : f32 to vector<2x128xf32>
    %24 = arith.addf %23, %22 : vector<2x128xf32>
    %cst_20 = arith.constant 5.000000e-01 : f32
    %25 = vector.broadcast %cst_20 : f32 to vector<2x128xf32>
    %26 = arith.mulf %25, %24 : vector<2x128xf32>
    %27 = vector.extract_strided_slice %15 {offsets = [0, 128], sizes = [2, 128], strides = [1, 1]} : vector<2x384xf32> to vector<2x128xf32>
    %28 = vector.extract_strided_slice %16 {offsets = [0, 128], sizes = [2, 128], strides = [1, 1]} : vector<2x384xf32> to vector<2x128xf32>
    %29 = arith.addf %27, %28 : vector<2x128xf32>
    %cst_21 = arith.constant 5.000000e-01 : f32
    %30 = vector.broadcast %cst_21 : f32 to vector<2x128xf32>
    %31 = arith.mulf %30, %29 : vector<2x128xf32>
    %32 = math.tanh %31 : vector<2x128xf32>
    %cst_22 = arith.constant 1.000000e+00 : f32
    %33 = vector.broadcast %cst_22 : f32 to vector<2x128xf32>
    %34 = arith.addf %33, %32 : vector<2x128xf32>
    %cst_23 = arith.constant 5.000000e-01 : f32
    %35 = vector.broadcast %cst_23 : f32 to vector<2x128xf32>
    %36 = arith.mulf %35, %34 : vector<2x128xf32>
    %37 = vector.extract_strided_slice %15 {offsets = [0, 256], sizes = [2, 128], strides = [1, 1]} : vector<2x384xf32> to vector<2x128xf32>
    %38 = vector.extract_strided_slice %16 {offsets = [0, 256], sizes = [2, 128], strides = [1, 1]} : vector<2x384xf32> to vector<2x128xf32>
    %39 = arith.addf %38, %8 : vector<2x128xf32>
    %40 = arith.mulf %26, %39 : vector<2x128xf32>
    %41 = arith.addf %37, %40 : vector<2x128xf32>
    %42 = math.tanh %41 : vector<2x128xf32>
    %cst_24 = arith.constant 1.000000e+00 : f32
    %43 = vector.broadcast %cst_24 : f32 to vector<2x128xf32>
    %44 = arith.subf %43, %36 : vector<2x128xf32>
    %45 = arith.mulf %44, %42 : vector<2x128xf32>
    %46 = arith.mulf %36, %11 : vector<2x128xf32>
    %47 = arith.addf %45, %46 : vector<2x128xf32>
    %48 = arith.index_cast %c0_i32_15 : i32 to index
    %c0_25 = arith.constant 0 : index
    %c0_26 = arith.constant 0 : index
    %49 = vector.load %arg5[%48, %c0_25, %c0_26] : memref<8x2x128xf32, #tpu.memory_space<vmem>>, vector<1x2x128xf32>
    %50 = vector.shape_cast %49 : vector<1x2x128xf32> to vector<2x128xf32>
    %51 = vector.shape_cast %47 : vector<2x128xf32> to vector<1x2x128xf32>
    tpu.vector_store %arg5[%48, %c0_25, %c0_26], %51 {strides = array<i32>} : memref<8x2x128xf32, #tpu.memory_space<vmem>>, vector<1x2x128xf32>,
    %c7_i32 = arith.constant 7 : i32
    %52 = arith.subi %c7_i32, %c0_i32_15 : i32
    %53 = arith.index_cast %52 : i32 to index
    %c0_27 = arith.constant 0 : index
    %c0_28 = arith.constant 0 : index
    %54 = vector.load %arg2[%53, %c0_27, %c0_28] : memref<8x2x384xf32, #tpu.memory_space<vmem>>, vector<1x2x384xf32>
    %55 = vector.shape_cast %54 : vector<1x2x384xf32> to vector<2x384xf32>
    %cst_29 = arith.constant dense<0.000000e+00> : vector<2x384xf32>
    %56 = tpu.matmul %12, %6, %cst_29 {dimension_numbers = #tpu.dot_dimension_numbers<[1], [0], [0], [1], [0, 0, 1, 1], [], []>} : vector<2x128xf32>, vector<128x384xf32>, vector<2x384xf32> -> vector<2x384xf32>
    %57 = vector.extract_strided_slice %55 {offsets = [0, 0], sizes = [2, 128], strides = [1, 1]} : vector<2x384xf32> to vector<2x128xf32>
    %58 = vector.extract_strided_slice %56 {offsets = [0, 0], sizes = [2, 128], strides = [1, 1]} : vector<2x384xf32> to vector<2x128xf32>
    %59 = arith.addf %57, %58 : vector<2x128xf32>
    %cst_30 = arith.constant 5.000000e-01 : f32
    %60 = vector.broadcast %cst_30 : f32 to vector<2x128xf32>
    %61 = arith.mulf %60, %59 : vector<2x128xf32>
    %62 = math.tanh %61 : vector<2x128xf32>
    %cst_31 = arith.constant 1.000000e+00 : f32
    %63 = vector.broadcast %cst_31 : f32 to vector<2x128xf32>
    %64 = arith.addf %63, %62 : vector<2x128xf32>
    %cst_32 = arith.constant 5.000000e-01 : f32
    %65 = vector.broadcast %cst_32 : f32 to vector<2x128xf32>
    %66 = arith.mulf %65, %64 : vector<2x128xf32>
    %67 = vector.extract_strided_slice %55 {offsets = [0, 128], sizes = [2, 128], strides = [1, 1]} : vector<2x384xf32> to vector<2x128xf32>
    %68 = vector.extract_strided_slice %56 {offsets = [0, 128], sizes = [2, 128], strides = [1, 1]} : vector<2x384xf32> to vector<2x128xf32>
    %69 = arith.addf %67, %68 : vector<2x128xf32>
    %cst_33 = arith.constant 5.000000e-01 : f32
    %70 = vector.broadcast %cst_33 : f32 to vector<2x128xf32>
    %71 = arith.mulf %70, %69 : vector<2x128xf32>
    %72 = math.tanh %71 : vector<2x128xf32>
    %cst_34 = arith.constant 1.000000e+00 : f32
    %73 = vector.broadcast %cst_34 : f32 to vector<2x128xf32>
    %74 = arith.addf %73, %72 : vector<2x128xf32>
    %cst_35 = arith.constant 5.000000e-01 : f32
    %75 = vector.broadcast %cst_35 : f32 to vector<2x128xf32>
    %76 = arith.mulf %75, %74 : vector<2x128xf32>
    %77 = vector.extract_strided_slice %55 {offsets = [0, 256], sizes = [2, 128], strides = [1, 1]} : vector<2x384xf32> to vector<2x128xf32>
    %78 = vector.extract_strided_slice %56 {offsets = [0, 256], sizes = [2, 128], strides = [1, 1]} : vector<2x384xf32> to vector<2x128xf32>
    %79 = arith.addf %78, %10 : vector<2x128xf32>
    %80 = arith.mulf %66, %79 : vector<2x128xf32>
    %81 = arith.addf %77, %80 : vector<2x128xf32>
    %82 = math.tanh %81 : vector<2x128xf32>
    %cst_36 = arith.constant 1.000000e+00 : f32
    %83 = vector.broadcast %cst_36 : f32 to vector<2x128xf32>
    %84 = arith.subf %83, %76 : vector<2x128xf32>
    %85 = arith.mulf %84, %82 : vector<2x128xf32>
    %86 = arith.mulf %76, %12 : vector<2x128xf32>
    %87 = arith.addf %85, %86 : vector<2x128xf32>
    %88 = arith.index_cast %52 : i32 to index
    %c0_37 = arith.constant 0 : index
    %c0_38 = arith.constant 0 : index
    %89 = vector.load %arg6[%88, %c0_37, %c0_38] : memref<8x2x128xf32, #tpu.memory_space<vmem>>, vector<1x2x128xf32>
    %90 = vector.shape_cast %89 : vector<1x2x128xf32> to vector<2x128xf32>
    %91 = vector.shape_cast %87 : vector<2x128xf32> to vector<1x2x128xf32>
    tpu.vector_store %arg6[%88, %c0_37, %c0_38], %91 {strides = array<i32>} : memref<8x2x128xf32, #tpu.memory_space<vmem>>, vector<1x2x128xf32>,
    %c1_i32 = arith.constant 1 : i32
    %92 = arith.index_cast %c1_i32 : i32 to index
    %c0_39 = arith.constant 0 : index
    %c0_40 = arith.constant 0 : index
    %93 = vector.load %arg1[%92, %c0_39, %c0_40] : memref<8x2x384xf32, #tpu.memory_space<vmem>>, vector<1x2x384xf32>
    %94 = vector.shape_cast %93 : vector<1x2x384xf32> to vector<2x384xf32>
    %cst_41 = arith.constant dense<0.000000e+00> : vector<2x384xf32>
    %95 = tpu.matmul %47, %4, %cst_41 {dimension_numbers = #tpu.dot_dimension_numbers<[1], [0], [0], [1], [0, 0, 1, 1], [], []>} : vector<2x128xf32>, vector<128x384xf32>, vector<2x384xf32> -> vector<2x384xf32>
    %96 = vector.extract_strided_slice %94 {offsets = [0, 0], sizes = [2, 128], strides = [1, 1]} : vector<2x384xf32> to vector<2x128xf32>
    %97 = vector.extract_strided_slice %95 {offsets = [0, 0], sizes = [2, 128], strides = [1, 1]} : vector<2x384xf32> to vector<2x128xf32>
    %98 = arith.addf %96, %97 : vector<2x128xf32>
    %cst_42 = arith.constant 5.000000e-01 : f32
    %99 = vector.broadcast %cst_42 : f32 to vector<2x128xf32>
    %100 = arith.mulf %99, %98 : vector<2x128xf32>
    %101 = math.tanh %100 : vector<2x128xf32>
    %cst_43 = arith.constant 1.000000e+00 : f32
    %102 = vector.broadcast %cst_43 : f32 to vector<2x128xf32>
    %103 = arith.addf %102, %101 : vector<2x128xf32>
    %cst_44 = arith.constant 5.000000e-01 : f32
    %104 = vector.broadcast %cst_44 : f32 to vector<2x128xf32>
    %105 = arith.mulf %104, %103 : vector<2x128xf32>
    %106 = vector.extract_strided_slice %94 {offsets = [0, 128], sizes = [2, 128], strides = [1, 1]} : vector<2x384xf32> to vector<2x128xf32>
    %107 = vector.extract_strided_slice %95 {offsets = [0, 128], sizes = [2, 128], strides = [1, 1]} : vector<2x384xf32> to vector<2x128xf32>
    %108 = arith.addf %106, %107 : vector<2x128xf32>
    %cst_45 = arith.constant 5.000000e-01 : f32
    %109 = vector.broadcast %cst_45 : f32 to vector<2x128xf32>
    %110 = arith.mulf %109, %108 : vector<2x128xf32>
    %111 = math.tanh %110 : vector<2x128xf32>
    %cst_46 = arith.constant 1.000000e+00 : f32
    %112 = vector.broadcast %cst_46 : f32 to vector<2x128xf32>
    %113 = arith.addf %112, %111 : vector<2x128xf32>
    %cst_47 = arith.constant 5.000000e-01 : f32
    %114 = vector.broadcast %cst_47 : f32 to vector<2x128xf32>
    %115 = arith.mulf %114, %113 : vector<2x128xf32>
    %116 = vector.extract_strided_slice %94 {offsets = [0, 256], sizes = [2, 128], strides = [1, 1]} : vector<2x384xf32> to vector<2x128xf32>
    %117 = vector.extract_strided_slice %95 {offsets = [0, 256], sizes = [2, 128], strides = [1, 1]} : vector<2x384xf32> to vector<2x128xf32>
    %118 = arith.addf %117, %8 : vector<2x128xf32>
    %119 = arith.mulf %105, %118 : vector<2x128xf32>
    %120 = arith.addf %116, %119 : vector<2x128xf32>
    %121 = math.tanh %120 : vector<2x128xf32>
    %cst_48 = arith.constant 1.000000e+00 : f32
    %122 = vector.broadcast %cst_48 : f32 to vector<2x128xf32>
    %123 = arith.subf %122, %115 : vector<2x128xf32>
    %124 = arith.mulf %123, %121 : vector<2x128xf32>
    %125 = arith.mulf %115, %47 : vector<2x128xf32>
    %126 = arith.addf %124, %125 : vector<2x128xf32>
    %127 = arith.index_cast %c1_i32 : i32 to index
    %c0_49 = arith.constant 0 : index
    %c0_50 = arith.constant 0 : index
    %128 = vector.load %arg5[%127, %c0_49, %c0_50] : memref<8x2x128xf32, #tpu.memory_space<vmem>>, vector<1x2x128xf32>
    %129 = vector.shape_cast %128 : vector<1x2x128xf32> to vector<2x128xf32>
    %130 = vector.shape_cast %126 : vector<2x128xf32> to vector<1x2x128xf32>
    tpu.vector_store %arg5[%127, %c0_49, %c0_50], %130 {strides = array<i32>} : memref<8x2x128xf32, #tpu.memory_space<vmem>>, vector<1x2x128xf32>,
    %c7_i32_51 = arith.constant 7 : i32
    %131 = arith.subi %c7_i32_51, %c1_i32 : i32
    %132 = arith.index_cast %131 : i32 to index
    %c0_52 = arith.constant 0 : index
    %c0_53 = arith.constant 0 : index
    %133 = vector.load %arg2[%132, %c0_52, %c0_53] : memref<8x2x384xf32, #tpu.memory_space<vmem>>, vector<1x2x384xf32>
    %134 = vector.shape_cast %133 : vector<1x2x384xf32> to vector<2x384xf32>
    %cst_54 = arith.constant dense<0.000000e+00> : vector<2x384xf32>
    %135 = tpu.matmul %87, %6, %cst_54 {dimension_numbers = #tpu.dot_dimension_numbers<[1], [0], [0], [1], [0, 0, 1, 1], [], []>} : vector<2x128xf32>, vector<128x384xf32>, vector<2x384xf32> -> vector<2x384xf32>
    %136 = vector.extract_strided_slice %134 {offsets = [0, 0], sizes = [2, 128], strides = [1, 1]} : vector<2x384xf32> to vector<2x128xf32>
    %137 = vector.extract_strided_slice %135 {offsets = [0, 0], sizes = [2, 128], strides = [1, 1]} : vector<2x384xf32> to vector<2x128xf32>
    %138 = arith.addf %136, %137 : vector<2x128xf32>
    %cst_55 = arith.constant 5.000000e-01 : f32
    %139 = vector.broadcast %cst_55 : f32 to vector<2x128xf32>
    %140 = arith.mulf %139, %138 : vector<2x128xf32>
    %141 = math.tanh %140 : vector<2x128xf32>
    %cst_56 = arith.constant 1.000000e+00 : f32
    %142 = vector.broadcast %cst_56 : f32 to vector<2x128xf32>
    %143 = arith.addf %142, %141 : vector<2x128xf32>
    %cst_57 = arith.constant 5.000000e-01 : f32
    %144 = vector.broadcast %cst_57 : f32 to vector<2x128xf32>
    %145 = arith.mulf %144, %143 : vector<2x128xf32>
    %146 = vector.extract_strided_slice %134 {offsets = [0, 128], sizes = [2, 128], strides = [1, 1]} : vector<2x384xf32> to vector<2x128xf32>
    %147 = vector.extract_strided_slice %135 {offsets = [0, 128], sizes = [2, 128], strides = [1, 1]} : vector<2x384xf32> to vector<2x128xf32>
    %148 = arith.addf %146, %147 : vector<2x128xf32>
    %cst_58 = arith.constant 5.000000e-01 : f32
    %149 = vector.broadcast %cst_58 : f32 to vector<2x128xf32>
    %150 = arith.mulf %149, %148 : vector<2x128xf32>
    %151 = math.tanh %150 : vector<2x128xf32>
    %cst_59 = arith.constant 1.000000e+00 : f32
    %152 = vector.broadcast %cst_59 : f32 to vector<2x128xf32>
    %153 = arith.addf %152, %151 : vector<2x128xf32>
    %cst_60 = arith.constant 5.000000e-01 : f32
    %154 = vector.broadcast %cst_60 : f32 to vector<2x128xf32>
    %155 = arith.mulf %154, %153 : vector<2x128xf32>
    %156 = vector.extract_strided_slice %134 {offsets = [0, 256], sizes = [2, 128], strides = [1, 1]} : vector<2x384xf32> to vector<2x128xf32>
    %157 = vector.extract_strided_slice %135 {offsets = [0, 256], sizes = [2, 128], strides = [1, 1]} : vector<2x384xf32> to vector<2x128xf32>
    %158 = arith.addf %157, %10 : vector<2x128xf32>
    %159 = arith.mulf %145, %158 : vector<2x128xf32>
    %160 = arith.addf %156, %159 : vector<2x128xf32>
    %161 = math.tanh %160 : vector<2x128xf32>
    %cst_61 = arith.constant 1.000000e+00 : f32
    %162 = vector.broadcast %cst_61 : f32 to vector<2x128xf32>
    %163 = arith.subf %162, %155 : vector<2x128xf32>
    %164 = arith.mulf %163, %161 : vector<2x128xf32>
    %165 = arith.mulf %155, %87 : vector<2x128xf32>
    %166 = arith.addf %164, %165 : vector<2x128xf32>
    %167 = arith.index_cast %131 : i32 to index
    %c0_62 = arith.constant 0 : index
    %c0_63 = arith.constant 0 : index
    %168 = vector.load %arg6[%167, %c0_62, %c0_63] : memref<8x2x128xf32, #tpu.memory_space<vmem>>, vector<1x2x128xf32>
    %169 = vector.shape_cast %168 : vector<1x2x128xf32> to vector<2x128xf32>
    %170 = vector.shape_cast %166 : vector<2x128xf32> to vector<1x2x128xf32>
    tpu.vector_store %arg6[%167, %c0_62, %c0_63], %170 {strides = array<i32>} : memref<8x2x128xf32, #tpu.memory_space<vmem>>, vector<1x2x128xf32>,
    %c2_i32 = arith.constant 2 : i32
    %171 = arith.index_cast %c2_i32 : i32 to index
    %c0_64 = arith.constant 0 : index
    %c0_65 = arith.constant 0 : index
    %172 = vector.load %arg1[%171, %c0_64, %c0_65] : memref<8x2x384xf32, #tpu.memory_space<vmem>>, vector<1x2x384xf32>
    %173 = vector.shape_cast %172 : vector<1x2x384xf32> to vector<2x384xf32>
    %cst_66 = arith.constant dense<0.000000e+00> : vector<2x384xf32>
    %174 = tpu.matmul %126, %4, %cst_66 {dimension_numbers = #tpu.dot_dimension_numbers<[1], [0], [0], [1], [0, 0, 1, 1], [], []>} : vector<2x128xf32>, vector<128x384xf32>, vector<2x384xf32> -> vector<2x384xf32>
    %175 = vector.extract_strided_slice %173 {offsets = [0, 0], sizes = [2, 128], strides = [1, 1]} : vector<2x384xf32> to vector<2x128xf32>
    %176 = vector.extract_strided_slice %174 {offsets = [0, 0], sizes = [2, 128], strides = [1, 1]} : vector<2x384xf32> to vector<2x128xf32>
    %177 = arith.addf %175, %176 : vector<2x128xf32>
    %cst_67 = arith.constant 5.000000e-01 : f32
    %178 = vector.broadcast %cst_67 : f32 to vector<2x128xf32>
    %179 = arith.mulf %178, %177 : vector<2x128xf32>
    %180 = math.tanh %179 : vector<2x128xf32>
    %cst_68 = arith.constant 1.000000e+00 : f32
    %181 = vector.broadcast %cst_68 : f32 to vector<2x128xf32>
    %182 = arith.addf %181, %180 : vector<2x128xf32>
    %cst_69 = arith.constant 5.000000e-01 : f32
    %183 = vector.broadcast %cst_69 : f32 to vector<2x128xf32>
    %184 = arith.mulf %183, %182 : vector<2x128xf32>
    %185 = vector.extract_strided_slice %173 {offsets = [0, 128], sizes = [2, 128], strides = [1, 1]} : vector<2x384xf32> to vector<2x128xf32>
    %186 = vector.extract_strided_slice %174 {offsets = [0, 128], sizes = [2, 128], strides = [1, 1]} : vector<2x384xf32> to vector<2x128xf32>
    %187 = arith.addf %185, %186 : vector<2x128xf32>
    %cst_70 = arith.constant 5.000000e-01 : f32
    %188 = vector.broadcast %cst_70 : f32 to vector<2x128xf32>
    %189 = arith.mulf %188, %187 : vector<2x128xf32>
    %190 = math.tanh %189 : vector<2x128xf32>
    %cst_71 = arith.constant 1.000000e+00 : f32
    %191 = vector.broadcast %cst_71 : f32 to vector<2x128xf32>
    %192 = arith.addf %191, %190 : vector<2x128xf32>
    %cst_72 = arith.constant 5.000000e-01 : f32
    %193 = vector.broadcast %cst_72 : f32 to vector<2x128xf32>
    %194 = arith.mulf %193, %192 : vector<2x128xf32>
    %195 = vector.extract_strided_slice %173 {offsets = [0, 256], sizes = [2, 128], strides = [1, 1]} : vector<2x384xf32> to vector<2x128xf32>
    %196 = vector.extract_strided_slice %174 {offsets = [0, 256], sizes = [2, 128], strides = [1, 1]} : vector<2x384xf32> to vector<2x128xf32>
    %197 = arith.addf %196, %8 : vector<2x128xf32>
    %198 = arith.mulf %184, %197 : vector<2x128xf32>
    %199 = arith.addf %195, %198 : vector<2x128xf32>
    %200 = math.tanh %199 : vector<2x128xf32>
    %cst_73 = arith.constant 1.000000e+00 : f32
    %201 = vector.broadcast %cst_73 : f32 to vector<2x128xf32>
    %202 = arith.subf %201, %194 : vector<2x128xf32>
    %203 = arith.mulf %202, %200 : vector<2x128xf32>
    %204 = arith.mulf %194, %126 : vector<2x128xf32>
    %205 = arith.addf %203, %204 : vector<2x128xf32>
    %206 = arith.index_cast %c2_i32 : i32 to index
    %c0_74 = arith.constant 0 : index
    %c0_75 = arith.constant 0 : index
    %207 = vector.load %arg5[%206, %c0_74, %c0_75] : memref<8x2x128xf32, #tpu.memory_space<vmem>>, vector<1x2x128xf32>
    %208 = vector.shape_cast %207 : vector<1x2x128xf32> to vector<2x128xf32>
    %209 = vector.shape_cast %205 : vector<2x128xf32> to vector<1x2x128xf32>
    tpu.vector_store %arg5[%206, %c0_74, %c0_75], %209 {strides = array<i32>} : memref<8x2x128xf32, #tpu.memory_space<vmem>>, vector<1x2x128xf32>,
    %c7_i32_76 = arith.constant 7 : i32
    %210 = arith.subi %c7_i32_76, %c2_i32 : i32
    %211 = arith.index_cast %210 : i32 to index
    %c0_77 = arith.constant 0 : index
    %c0_78 = arith.constant 0 : index
    %212 = vector.load %arg2[%211, %c0_77, %c0_78] : memref<8x2x384xf32, #tpu.memory_space<vmem>>, vector<1x2x384xf32>
    %213 = vector.shape_cast %212 : vector<1x2x384xf32> to vector<2x384xf32>
    %cst_79 = arith.constant dense<0.000000e+00> : vector<2x384xf32>
    %214 = tpu.matmul %166, %6, %cst_79 {dimension_numbers = #tpu.dot_dimension_numbers<[1], [0], [0], [1], [0, 0, 1, 1], [], []>} : vector<2x128xf32>, vector<128x384xf32>, vector<2x384xf32> -> vector<2x384xf32>
    %215 = vector.extract_strided_slice %213 {offsets = [0, 0], sizes = [2, 128], strides = [1, 1]} : vector<2x384xf32> to vector<2x128xf32>
    %216 = vector.extract_strided_slice %214 {offsets = [0, 0], sizes = [2, 128], strides = [1, 1]} : vector<2x384xf32> to vector<2x128xf32>
    %217 = arith.addf %215, %216 : vector<2x128xf32>
    %cst_80 = arith.constant 5.000000e-01 : f32
    %218 = vector.broadcast %cst_80 : f32 to vector<2x128xf32>
    %219 = arith.mulf %218, %217 : vector<2x128xf32>
    %220 = math.tanh %219 : vector<2x128xf32>
    %cst_81 = arith.constant 1.000000e+00 : f32
    %221 = vector.broadcast %cst_81 : f32 to vector<2x128xf32>
    %222 = arith.addf %221, %220 : vector<2x128xf32>
    %cst_82 = arith.constant 5.000000e-01 : f32
    %223 = vector.broadcast %cst_82 : f32 to vector<2x128xf32>
    %224 = arith.mulf %223, %222 : vector<2x128xf32>
    %225 = vector.extract_strided_slice %213 {offsets = [0, 128], sizes = [2, 128], strides = [1, 1]} : vector<2x384xf32> to vector<2x128xf32>
    %226 = vector.extract_strided_slice %214 {offsets = [0, 128], sizes = [2, 128], strides = [1, 1]} : vector<2x384xf32> to vector<2x128xf32>
    %227 = arith.addf %225, %226 : vector<2x128xf32>
    %cst_83 = arith.constant 5.000000e-01 : f32
    %228 = vector.broadcast %cst_83 : f32 to vector<2x128xf32>
    %229 = arith.mulf %228, %227 : vector<2x128xf32>
    %230 = math.tanh %229 : vector<2x128xf32>
    %cst_84 = arith.constant 1.000000e+00 : f32
    %231 = vector.broadcast %cst_84 : f32 to vector<2x128xf32>
    %232 = arith.addf %231, %230 : vector<2x128xf32>
    %cst_85 = arith.constant 5.000000e-01 : f32
    %233 = vector.broadcast %cst_85 : f32 to vector<2x128xf32>
    %234 = arith.mulf %233, %232 : vector<2x128xf32>
    %235 = vector.extract_strided_slice %213 {offsets = [0, 256], sizes = [2, 128], strides = [1, 1]} : vector<2x384xf32> to vector<2x128xf32>
    %236 = vector.extract_strided_slice %214 {offsets = [0, 256], sizes = [2, 128], strides = [1, 1]} : vector<2x384xf32> to vector<2x128xf32>
    %237 = arith.addf %236, %10 : vector<2x128xf32>
    %238 = arith.mulf %224, %237 : vector<2x128xf32>
    %239 = arith.addf %235, %238 : vector<2x128xf32>
    %240 = math.tanh %239 : vector<2x128xf32>
    %cst_86 = arith.constant 1.000000e+00 : f32
    %241 = vector.broadcast %cst_86 : f32 to vector<2x128xf32>
    %242 = arith.subf %241, %234 : vector<2x128xf32>
    %243 = arith.mulf %242, %240 : vector<2x128xf32>
    %244 = arith.mulf %234, %166 : vector<2x128xf32>
    %245 = arith.addf %243, %244 : vector<2x128xf32>
    %246 = arith.index_cast %210 : i32 to index
    %c0_87 = arith.constant 0 : index
    %c0_88 = arith.constant 0 : index
    %247 = vector.load %arg6[%246, %c0_87, %c0_88] : memref<8x2x128xf32, #tpu.memory_space<vmem>>, vector<1x2x128xf32>
    %248 = vector.shape_cast %247 : vector<1x2x128xf32> to vector<2x128xf32>
    %249 = vector.shape_cast %245 : vector<2x128xf32> to vector<1x2x128xf32>
    tpu.vector_store %arg6[%246, %c0_87, %c0_88], %249 {strides = array<i32>} : memref<8x2x128xf32, #tpu.memory_space<vmem>>, vector<1x2x128xf32>,
    %c3_i32 = arith.constant 3 : i32
    %250 = arith.index_cast %c3_i32 : i32 to index
    %c0_89 = arith.constant 0 : index
    %c0_90 = arith.constant 0 : index
    %251 = vector.load %arg1[%250, %c0_89, %c0_90] : memref<8x2x384xf32, #tpu.memory_space<vmem>>, vector<1x2x384xf32>
    %252 = vector.shape_cast %251 : vector<1x2x384xf32> to vector<2x384xf32>
    %cst_91 = arith.constant dense<0.000000e+00> : vector<2x384xf32>
    %253 = tpu.matmul %205, %4, %cst_91 {dimension_numbers = #tpu.dot_dimension_numbers<[1], [0], [0], [1], [0, 0, 1, 1], [], []>} : vector<2x128xf32>, vector<128x384xf32>, vector<2x384xf32> -> vector<2x384xf32>
    %254 = vector.extract_strided_slice %252 {offsets = [0, 0], sizes = [2, 128], strides = [1, 1]} : vector<2x384xf32> to vector<2x128xf32>
    %255 = vector.extract_strided_slice %253 {offsets = [0, 0], sizes = [2, 128], strides = [1, 1]} : vector<2x384xf32> to vector<2x128xf32>
    %256 = arith.addf %254, %255 : vector<2x128xf32>
    %cst_92 = arith.constant 5.000000e-01 : f32
    %257 = vector.broadcast %cst_92 : f32 to vector<2x128xf32>
    %258 = arith.mulf %257, %256 : vector<2x128xf32>
    %259 = math.tanh %258 : vector<2x128xf32>
    %cst_93 = arith.constant 1.000000e+00 : f32
    %260 = vector.broadcast %cst_93 : f32 to vector<2x128xf32>
    %261 = arith.addf %260, %259 : vector<2x128xf32>
    %cst_94 = arith.constant 5.000000e-01 : f32
    %262 = vector.broadcast %cst_94 : f32 to vector<2x128xf32>
    %263 = arith.mulf %262, %261 : vector<2x128xf32>
    %264 = vector.extract_strided_slice %252 {offsets = [0, 128], sizes = [2, 128], strides = [1, 1]} : vector<2x384xf32> to vector<2x128xf32>
    %265 = vector.extract_strided_slice %253 {offsets = [0, 128], sizes = [2, 128], strides = [1, 1]} : vector<2x384xf32> to vector<2x128xf32>
    %266 = arith.addf %264, %265 : vector<2x128xf32>
    %cst_95 = arith.constant 5.000000e-01 : f32
    %267 = vector.broadcast %cst_95 : f32 to vector<2x128xf32>
    %268 = arith.mulf %267, %266 : vector<2x128xf32>
    %269 = math.tanh %268 : vector<2x128xf32>
    %cst_96 = arith.constant 1.000000e+00 : f32
    %270 = vector.broadcast %cst_96 : f32 to vector<2x128xf32>
    %271 = arith.addf %270, %269 : vector<2x128xf32>
    %cst_97 = arith.constant 5.000000e-01 : f32
    %272 = vector.broadcast %cst_97 : f32 to vector<2x128xf32>
    %273 = arith.mulf %272, %271 : vector<2x128xf32>
    %274 = vector.extract_strided_slice %252 {offsets = [0, 256], sizes = [2, 128], strides = [1, 1]} : vector<2x384xf32> to vector<2x128xf32>
    %275 = vector.extract_strided_slice %253 {offsets = [0, 256], sizes = [2, 128], strides = [1, 1]} : vector<2x384xf32> to vector<2x128xf32>
    %276 = arith.addf %275, %8 : vector<2x128xf32>
    %277 = arith.mulf %263, %276 : vector<2x128xf32>
    %278 = arith.addf %274, %277 : vector<2x128xf32>
    %279 = math.tanh %278 : vector<2x128xf32>
    %cst_98 = arith.constant 1.000000e+00 : f32
    %280 = vector.broadcast %cst_98 : f32 to vector<2x128xf32>
    %281 = arith.subf %280, %273 : vector<2x128xf32>
    %282 = arith.mulf %281, %279 : vector<2x128xf32>
    %283 = arith.mulf %273, %205 : vector<2x128xf32>
    %284 = arith.addf %282, %283 : vector<2x128xf32>
    %285 = arith.index_cast %c3_i32 : i32 to index
    %c0_99 = arith.constant 0 : index
    %c0_100 = arith.constant 0 : index
    %286 = vector.load %arg5[%285, %c0_99, %c0_100] : memref<8x2x128xf32, #tpu.memory_space<vmem>>, vector<1x2x128xf32>
    %287 = vector.shape_cast %286 : vector<1x2x128xf32> to vector<2x128xf32>
    %288 = vector.shape_cast %284 : vector<2x128xf32> to vector<1x2x128xf32>
    tpu.vector_store %arg5[%285, %c0_99, %c0_100], %288 {strides = array<i32>} : memref<8x2x128xf32, #tpu.memory_space<vmem>>, vector<1x2x128xf32>,
    %c7_i32_101 = arith.constant 7 : i32
    %289 = arith.subi %c7_i32_101, %c3_i32 : i32
    %290 = arith.index_cast %289 : i32 to index
    %c0_102 = arith.constant 0 : index
    %c0_103 = arith.constant 0 : index
    %291 = vector.load %arg2[%290, %c0_102, %c0_103] : memref<8x2x384xf32, #tpu.memory_space<vmem>>, vector<1x2x384xf32>
    %292 = vector.shape_cast %291 : vector<1x2x384xf32> to vector<2x384xf32>
    %cst_104 = arith.constant dense<0.000000e+00> : vector<2x384xf32>
    %293 = tpu.matmul %245, %6, %cst_104 {dimension_numbers = #tpu.dot_dimension_numbers<[1], [0], [0], [1], [0, 0, 1, 1], [], []>} : vector<2x128xf32>, vector<128x384xf32>, vector<2x384xf32> -> vector<2x384xf32>
    %294 = vector.extract_strided_slice %292 {offsets = [0, 0], sizes = [2, 128], strides = [1, 1]} : vector<2x384xf32> to vector<2x128xf32>
    %295 = vector.extract_strided_slice %293 {offsets = [0, 0], sizes = [2, 128], strides = [1, 1]} : vector<2x384xf32> to vector<2x128xf32>
    %296 = arith.addf %294, %295 : vector<2x128xf32>
    %cst_105 = arith.constant 5.000000e-01 : f32
    %297 = vector.broadcast %cst_105 : f32 to vector<2x128xf32>
    %298 = arith.mulf %297, %296 : vector<2x128xf32>
    %299 = math.tanh %298 : vector<2x128xf32>
    %cst_106 = arith.constant 1.000000e+00 : f32
    %300 = vector.broadcast %cst_106 : f32 to vector<2x128xf32>
    %301 = arith.addf %300, %299 : vector<2x128xf32>
    %cst_107 = arith.constant 5.000000e-01 : f32
    %302 = vector.broadcast %cst_107 : f32 to vector<2x128xf32>
    %303 = arith.mulf %302, %301 : vector<2x128xf32>
    %304 = vector.extract_strided_slice %292 {offsets = [0, 128], sizes = [2, 128], strides = [1, 1]} : vector<2x384xf32> to vector<2x128xf32>
    %305 = vector.extract_strided_slice %293 {offsets = [0, 128], sizes = [2, 128], strides = [1, 1]} : vector<2x384xf32> to vector<2x128xf32>
    %306 = arith.addf %304, %305 : vector<2x128xf32>
    %cst_108 = arith.constant 5.000000e-01 : f32
    %307 = vector.broadcast %cst_108 : f32 to vector<2x128xf32>
    %308 = arith.mulf %307, %306 : vector<2x128xf32>
    %309 = math.tanh %308 : vector<2x128xf32>
    %cst_109 = arith.constant 1.000000e+00 : f32
    %310 = vector.broadcast %cst_109 : f32 to vector<2x128xf32>
    %311 = arith.addf %310, %309 : vector<2x128xf32>
    %cst_110 = arith.constant 5.000000e-01 : f32
    %312 = vector.broadcast %cst_110 : f32 to vector<2x128xf32>
    %313 = arith.mulf %312, %311 : vector<2x128xf32>
    %314 = vector.extract_strided_slice %292 {offsets = [0, 256], sizes = [2, 128], strides = [1, 1]} : vector<2x384xf32> to vector<2x128xf32>
    %315 = vector.extract_strided_slice %293 {offsets = [0, 256], sizes = [2, 128], strides = [1, 1]} : vector<2x384xf32> to vector<2x128xf32>
    %316 = arith.addf %315, %10 : vector<2x128xf32>
    %317 = arith.mulf %303, %316 : vector<2x128xf32>
    %318 = arith.addf %314, %317 : vector<2x128xf32>
    %319 = math.tanh %318 : vector<2x128xf32>
    %cst_111 = arith.constant 1.000000e+00 : f32
    %320 = vector.broadcast %cst_111 : f32 to vector<2x128xf32>
    %321 = arith.subf %320, %313 : vector<2x128xf32>
    %322 = arith.mulf %321, %319 : vector<2x128xf32>
    %323 = arith.mulf %313, %245 : vector<2x128xf32>
    %324 = arith.addf %322, %323 : vector<2x128xf32>
    %325 = arith.index_cast %289 : i32 to index
    %c0_112 = arith.constant 0 : index
    %c0_113 = arith.constant 0 : index
    %326 = vector.load %arg6[%325, %c0_112, %c0_113] : memref<8x2x128xf32, #tpu.memory_space<vmem>>, vector<1x2x128xf32>
    %327 = vector.shape_cast %326 : vector<1x2x128xf32> to vector<2x128xf32>
    %328 = vector.shape_cast %324 : vector<2x128xf32> to vector<1x2x128xf32>
    tpu.vector_store %arg6[%325, %c0_112, %c0_113], %328 {strides = array<i32>} : memref<8x2x128xf32, #tpu.memory_space<vmem>>, vector<1x2x128xf32>,
    %c4_i32 = arith.constant 4 : i32
    %329 = arith.index_cast %c4_i32 : i32 to index
    %c0_114 = arith.constant 0 : index
    %c0_115 = arith.constant 0 : index
    %330 = vector.load %arg1[%329, %c0_114, %c0_115] : memref<8x2x384xf32, #tpu.memory_space<vmem>>, vector<1x2x384xf32>
    %331 = vector.shape_cast %330 : vector<1x2x384xf32> to vector<2x384xf32>
    %cst_116 = arith.constant dense<0.000000e+00> : vector<2x384xf32>
    %332 = tpu.matmul %284, %4, %cst_116 {dimension_numbers = #tpu.dot_dimension_numbers<[1], [0], [0], [1], [0, 0, 1, 1], [], []>} : vector<2x128xf32>, vector<128x384xf32>, vector<2x384xf32> -> vector<2x384xf32>
    %333 = vector.extract_strided_slice %331 {offsets = [0, 0], sizes = [2, 128], strides = [1, 1]} : vector<2x384xf32> to vector<2x128xf32>
    %334 = vector.extract_strided_slice %332 {offsets = [0, 0], sizes = [2, 128], strides = [1, 1]} : vector<2x384xf32> to vector<2x128xf32>
    %335 = arith.addf %333, %334 : vector<2x128xf32>
    %cst_117 = arith.constant 5.000000e-01 : f32
    %336 = vector.broadcast %cst_117 : f32 to vector<2x128xf32>
    %337 = arith.mulf %336, %335 : vector<2x128xf32>
    %338 = math.tanh %337 : vector<2x128xf32>
    %cst_118 = arith.constant 1.000000e+00 : f32
    %339 = vector.broadcast %cst_118 : f32 to vector<2x128xf32>
    %340 = arith.addf %339, %338 : vector<2x128xf32>
    %cst_119 = arith.constant 5.000000e-01 : f32
    %341 = vector.broadcast %cst_119 : f32 to vector<2x128xf32>
    %342 = arith.mulf %341, %340 : vector<2x128xf32>
    %343 = vector.extract_strided_slice %331 {offsets = [0, 128], sizes = [2, 128], strides = [1, 1]} : vector<2x384xf32> to vector<2x128xf32>
    %344 = vector.extract_strided_slice %332 {offsets = [0, 128], sizes = [2, 128], strides = [1, 1]} : vector<2x384xf32> to vector<2x128xf32>
    %345 = arith.addf %343, %344 : vector<2x128xf32>
    %cst_120 = arith.constant 5.000000e-01 : f32
    %346 = vector.broadcast %cst_120 : f32 to vector<2x128xf32>
    %347 = arith.mulf %346, %345 : vector<2x128xf32>
    %348 = math.tanh %347 : vector<2x128xf32>
    %cst_121 = arith.constant 1.000000e+00 : f32
    %349 = vector.broadcast %cst_121 : f32 to vector<2x128xf32>
    %350 = arith.addf %349, %348 : vector<2x128xf32>
    %cst_122 = arith.constant 5.000000e-01 : f32
    %351 = vector.broadcast %cst_122 : f32 to vector<2x128xf32>
    %352 = arith.mulf %351, %350 : vector<2x128xf32>
    %353 = vector.extract_strided_slice %331 {offsets = [0, 256], sizes = [2, 128], strides = [1, 1]} : vector<2x384xf32> to vector<2x128xf32>
    %354 = vector.extract_strided_slice %332 {offsets = [0, 256], sizes = [2, 128], strides = [1, 1]} : vector<2x384xf32> to vector<2x128xf32>
    %355 = arith.addf %354, %8 : vector<2x128xf32>
    %356 = arith.mulf %342, %355 : vector<2x128xf32>
    %357 = arith.addf %353, %356 : vector<2x128xf32>
    %358 = math.tanh %357 : vector<2x128xf32>
    %cst_123 = arith.constant 1.000000e+00 : f32
    %359 = vector.broadcast %cst_123 : f32 to vector<2x128xf32>
    %360 = arith.subf %359, %352 : vector<2x128xf32>
    %361 = arith.mulf %360, %358 : vector<2x128xf32>
    %362 = arith.mulf %352, %284 : vector<2x128xf32>
    %363 = arith.addf %361, %362 : vector<2x128xf32>
    %364 = arith.index_cast %c4_i32 : i32 to index
    %c0_124 = arith.constant 0 : index
    %c0_125 = arith.constant 0 : index
    %365 = vector.load %arg5[%364, %c0_124, %c0_125] : memref<8x2x128xf32, #tpu.memory_space<vmem>>, vector<1x2x128xf32>
    %366 = vector.shape_cast %365 : vector<1x2x128xf32> to vector<2x128xf32>
    %367 = vector.shape_cast %363 : vector<2x128xf32> to vector<1x2x128xf32>
    tpu.vector_store %arg5[%364, %c0_124, %c0_125], %367 {strides = array<i32>} : memref<8x2x128xf32, #tpu.memory_space<vmem>>, vector<1x2x128xf32>,
    %c7_i32_126 = arith.constant 7 : i32
    %368 = arith.subi %c7_i32_126, %c4_i32 : i32
    %369 = arith.index_cast %368 : i32 to index
    %c0_127 = arith.constant 0 : index
    %c0_128 = arith.constant 0 : index
    %370 = vector.load %arg2[%369, %c0_127, %c0_128] : memref<8x2x384xf32, #tpu.memory_space<vmem>>, vector<1x2x384xf32>
    %371 = vector.shape_cast %370 : vector<1x2x384xf32> to vector<2x384xf32>
    %cst_129 = arith.constant dense<0.000000e+00> : vector<2x384xf32>
    %372 = tpu.matmul %324, %6, %cst_129 {dimension_numbers = #tpu.dot_dimension_numbers<[1], [0], [0], [1], [0, 0, 1, 1], [], []>} : vector<2x128xf32>, vector<128x384xf32>, vector<2x384xf32> -> vector<2x384xf32>
    %373 = vector.extract_strided_slice %371 {offsets = [0, 0], sizes = [2, 128], strides = [1, 1]} : vector<2x384xf32> to vector<2x128xf32>
    %374 = vector.extract_strided_slice %372 {offsets = [0, 0], sizes = [2, 128], strides = [1, 1]} : vector<2x384xf32> to vector<2x128xf32>
    %375 = arith.addf %373, %374 : vector<2x128xf32>
    %cst_130 = arith.constant 5.000000e-01 : f32
    %376 = vector.broadcast %cst_130 : f32 to vector<2x128xf32>
    %377 = arith.mulf %376, %375 : vector<2x128xf32>
    %378 = math.tanh %377 : vector<2x128xf32>
    %cst_131 = arith.constant 1.000000e+00 : f32
    %379 = vector.broadcast %cst_131 : f32 to vector<2x128xf32>
    %380 = arith.addf %379, %378 : vector<2x128xf32>
    %cst_132 = arith.constant 5.000000e-01 : f32
    %381 = vector.broadcast %cst_132 : f32 to vector<2x128xf32>
    %382 = arith.mulf %381, %380 : vector<2x128xf32>
    %383 = vector.extract_strided_slice %371 {offsets = [0, 128], sizes = [2, 128], strides = [1, 1]} : vector<2x384xf32> to vector<2x128xf32>
    %384 = vector.extract_strided_slice %372 {offsets = [0, 128], sizes = [2, 128], strides = [1, 1]} : vector<2x384xf32> to vector<2x128xf32>
    %385 = arith.addf %383, %384 : vector<2x128xf32>
    %cst_133 = arith.constant 5.000000e-01 : f32
    %386 = vector.broadcast %cst_133 : f32 to vector<2x128xf32>
    %387 = arith.mulf %386, %385 : vector<2x128xf32>
    %388 = math.tanh %387 : vector<2x128xf32>
    %cst_134 = arith.constant 1.000000e+00 : f32
    %389 = vector.broadcast %cst_134 : f32 to vector<2x128xf32>
    %390 = arith.addf %389, %388 : vector<2x128xf32>
    %cst_135 = arith.constant 5.000000e-01 : f32
    %391 = vector.broadcast %cst_135 : f32 to vector<2x128xf32>
    %392 = arith.mulf %391, %390 : vector<2x128xf32>
    %393 = vector.extract_strided_slice %371 {offsets = [0, 256], sizes = [2, 128], strides = [1, 1]} : vector<2x384xf32> to vector<2x128xf32>
    %394 = vector.extract_strided_slice %372 {offsets = [0, 256], sizes = [2, 128], strides = [1, 1]} : vector<2x384xf32> to vector<2x128xf32>
    %395 = arith.addf %394, %10 : vector<2x128xf32>
    %396 = arith.mulf %382, %395 : vector<2x128xf32>
    %397 = arith.addf %393, %396 : vector<2x128xf32>
    %398 = math.tanh %397 : vector<2x128xf32>
    %cst_136 = arith.constant 1.000000e+00 : f32
    %399 = vector.broadcast %cst_136 : f32 to vector<2x128xf32>
    %400 = arith.subf %399, %392 : vector<2x128xf32>
    %401 = arith.mulf %400, %398 : vector<2x128xf32>
    %402 = arith.mulf %392, %324 : vector<2x128xf32>
    %403 = arith.addf %401, %402 : vector<2x128xf32>
    %404 = arith.index_cast %368 : i32 to index
    %c0_137 = arith.constant 0 : index
    %c0_138 = arith.constant 0 : index
    %405 = vector.load %arg6[%404, %c0_137, %c0_138] : memref<8x2x128xf32, #tpu.memory_space<vmem>>, vector<1x2x128xf32>
    %406 = vector.shape_cast %405 : vector<1x2x128xf32> to vector<2x128xf32>
    %407 = vector.shape_cast %403 : vector<2x128xf32> to vector<1x2x128xf32>
    tpu.vector_store %arg6[%404, %c0_137, %c0_138], %407 {strides = array<i32>} : memref<8x2x128xf32, #tpu.memory_space<vmem>>, vector<1x2x128xf32>,
    %c5_i32 = arith.constant 5 : i32
    %408 = arith.index_cast %c5_i32 : i32 to index
    %c0_139 = arith.constant 0 : index
    %c0_140 = arith.constant 0 : index
    %409 = vector.load %arg1[%408, %c0_139, %c0_140] : memref<8x2x384xf32, #tpu.memory_space<vmem>>, vector<1x2x384xf32>
    %410 = vector.shape_cast %409 : vector<1x2x384xf32> to vector<2x384xf32>
    %cst_141 = arith.constant dense<0.000000e+00> : vector<2x384xf32>
    %411 = tpu.matmul %363, %4, %cst_141 {dimension_numbers = #tpu.dot_dimension_numbers<[1], [0], [0], [1], [0, 0, 1, 1], [], []>} : vector<2x128xf32>, vector<128x384xf32>, vector<2x384xf32> -> vector<2x384xf32>
    %412 = vector.extract_strided_slice %410 {offsets = [0, 0], sizes = [2, 128], strides = [1, 1]} : vector<2x384xf32> to vector<2x128xf32>
    %413 = vector.extract_strided_slice %411 {offsets = [0, 0], sizes = [2, 128], strides = [1, 1]} : vector<2x384xf32> to vector<2x128xf32>
    %414 = arith.addf %412, %413 : vector<2x128xf32>
    %cst_142 = arith.constant 5.000000e-01 : f32
    %415 = vector.broadcast %cst_142 : f32 to vector<2x128xf32>
    %416 = arith.mulf %415, %414 : vector<2x128xf32>
    %417 = math.tanh %416 : vector<2x128xf32>
    %cst_143 = arith.constant 1.000000e+00 : f32
    %418 = vector.broadcast %cst_143 : f32 to vector<2x128xf32>
    %419 = arith.addf %418, %417 : vector<2x128xf32>
    %cst_144 = arith.constant 5.000000e-01 : f32
    %420 = vector.broadcast %cst_144 : f32 to vector<2x128xf32>
    %421 = arith.mulf %420, %419 : vector<2x128xf32>
    %422 = vector.extract_strided_slice %410 {offsets = [0, 128], sizes = [2, 128], strides = [1, 1]} : vector<2x384xf32> to vector<2x128xf32>
    %423 = vector.extract_strided_slice %411 {offsets = [0, 128], sizes = [2, 128], strides = [1, 1]} : vector<2x384xf32> to vector<2x128xf32>
    %424 = arith.addf %422, %423 : vector<2x128xf32>
    %cst_145 = arith.constant 5.000000e-01 : f32
    %425 = vector.broadcast %cst_145 : f32 to vector<2x128xf32>
    %426 = arith.mulf %425, %424 : vector<2x128xf32>
    %427 = math.tanh %426 : vector<2x128xf32>
    %cst_146 = arith.constant 1.000000e+00 : f32
    %428 = vector.broadcast %cst_146 : f32 to vector<2x128xf32>
    %429 = arith.addf %428, %427 : vector<2x128xf32>
    %cst_147 = arith.constant 5.000000e-01 : f32
    %430 = vector.broadcast %cst_147 : f32 to vector<2x128xf32>
    %431 = arith.mulf %430, %429 : vector<2x128xf32>
    %432 = vector.extract_strided_slice %410 {offsets = [0, 256], sizes = [2, 128], strides = [1, 1]} : vector<2x384xf32> to vector<2x128xf32>
    %433 = vector.extract_strided_slice %411 {offsets = [0, 256], sizes = [2, 128], strides = [1, 1]} : vector<2x384xf32> to vector<2x128xf32>
    %434 = arith.addf %433, %8 : vector<2x128xf32>
    %435 = arith.mulf %421, %434 : vector<2x128xf32>
    %436 = arith.addf %432, %435 : vector<2x128xf32>
    %437 = math.tanh %436 : vector<2x128xf32>
    %cst_148 = arith.constant 1.000000e+00 : f32
    %438 = vector.broadcast %cst_148 : f32 to vector<2x128xf32>
    %439 = arith.subf %438, %431 : vector<2x128xf32>
    %440 = arith.mulf %439, %437 : vector<2x128xf32>
    %441 = arith.mulf %431, %363 : vector<2x128xf32>
    %442 = arith.addf %440, %441 : vector<2x128xf32>
    %443 = arith.index_cast %c5_i32 : i32 to index
    %c0_149 = arith.constant 0 : index
    %c0_150 = arith.constant 0 : index
    %444 = vector.load %arg5[%443, %c0_149, %c0_150] : memref<8x2x128xf32, #tpu.memory_space<vmem>>, vector<1x2x128xf32>
    %445 = vector.shape_cast %444 : vector<1x2x128xf32> to vector<2x128xf32>
    %446 = vector.shape_cast %442 : vector<2x128xf32> to vector<1x2x128xf32>
    tpu.vector_store %arg5[%443, %c0_149, %c0_150], %446 {strides = array<i32>} : memref<8x2x128xf32, #tpu.memory_space<vmem>>, vector<1x2x128xf32>,
    %c7_i32_151 = arith.constant 7 : i32
    %447 = arith.subi %c7_i32_151, %c5_i32 : i32
    %448 = arith.index_cast %447 : i32 to index
    %c0_152 = arith.constant 0 : index
    %c0_153 = arith.constant 0 : index
    %449 = vector.load %arg2[%448, %c0_152, %c0_153] : memref<8x2x384xf32, #tpu.memory_space<vmem>>, vector<1x2x384xf32>
    %450 = vector.shape_cast %449 : vector<1x2x384xf32> to vector<2x384xf32>
    %cst_154 = arith.constant dense<0.000000e+00> : vector<2x384xf32>
    %451 = tpu.matmul %403, %6, %cst_154 {dimension_numbers = #tpu.dot_dimension_numbers<[1], [0], [0], [1], [0, 0, 1, 1], [], []>} : vector<2x128xf32>, vector<128x384xf32>, vector<2x384xf32> -> vector<2x384xf32>
    %452 = vector.extract_strided_slice %450 {offsets = [0, 0], sizes = [2, 128], strides = [1, 1]} : vector<2x384xf32> to vector<2x128xf32>
    %453 = vector.extract_strided_slice %451 {offsets = [0, 0], sizes = [2, 128], strides = [1, 1]} : vector<2x384xf32> to vector<2x128xf32>
    %454 = arith.addf %452, %453 : vector<2x128xf32>
    %cst_155 = arith.constant 5.000000e-01 : f32
    %455 = vector.broadcast %cst_155 : f32 to vector<2x128xf32>
    %456 = arith.mulf %455, %454 : vector<2x128xf32>
    %457 = math.tanh %456 : vector<2x128xf32>
    %cst_156 = arith.constant 1.000000e+00 : f32
    %458 = vector.broadcast %cst_156 : f32 to vector<2x128xf32>
    %459 = arith.addf %458, %457 : vector<2x128xf32>
    %cst_157 = arith.constant 5.000000e-01 : f32
    %460 = vector.broadcast %cst_157 : f32 to vector<2x128xf32>
    %461 = arith.mulf %460, %459 : vector<2x128xf32>
    %462 = vector.extract_strided_slice %450 {offsets = [0, 128], sizes = [2, 128], strides = [1, 1]} : vector<2x384xf32> to vector<2x128xf32>
    %463 = vector.extract_strided_slice %451 {offsets = [0, 128], sizes = [2, 128], strides = [1, 1]} : vector<2x384xf32> to vector<2x128xf32>
    %464 = arith.addf %462, %463 : vector<2x128xf32>
    %cst_158 = arith.constant 5.000000e-01 : f32
    %465 = vector.broadcast %cst_158 : f32 to vector<2x128xf32>
    %466 = arith.mulf %465, %464 : vector<2x128xf32>
    %467 = math.tanh %466 : vector<2x128xf32>
    %cst_159 = arith.constant 1.000000e+00 : f32
    %468 = vector.broadcast %cst_159 : f32 to vector<2x128xf32>
    %469 = arith.addf %468, %467 : vector<2x128xf32>
    %cst_160 = arith.constant 5.000000e-01 : f32
    %470 = vector.broadcast %cst_160 : f32 to vector<2x128xf32>
    %471 = arith.mulf %470, %469 : vector<2x128xf32>
    %472 = vector.extract_strided_slice %450 {offsets = [0, 256], sizes = [2, 128], strides = [1, 1]} : vector<2x384xf32> to vector<2x128xf32>
    %473 = vector.extract_strided_slice %451 {offsets = [0, 256], sizes = [2, 128], strides = [1, 1]} : vector<2x384xf32> to vector<2x128xf32>
    %474 = arith.addf %473, %10 : vector<2x128xf32>
    %475 = arith.mulf %461, %474 : vector<2x128xf32>
    %476 = arith.addf %472, %475 : vector<2x128xf32>
    %477 = math.tanh %476 : vector<2x128xf32>
    %cst_161 = arith.constant 1.000000e+00 : f32
    %478 = vector.broadcast %cst_161 : f32 to vector<2x128xf32>
    %479 = arith.subf %478, %471 : vector<2x128xf32>
    %480 = arith.mulf %479, %477 : vector<2x128xf32>
    %481 = arith.mulf %471, %403 : vector<2x128xf32>
    %482 = arith.addf %480, %481 : vector<2x128xf32>
    %483 = arith.index_cast %447 : i32 to index
    %c0_162 = arith.constant 0 : index
    %c0_163 = arith.constant 0 : index
    %484 = vector.load %arg6[%483, %c0_162, %c0_163] : memref<8x2x128xf32, #tpu.memory_space<vmem>>, vector<1x2x128xf32>
    %485 = vector.shape_cast %484 : vector<1x2x128xf32> to vector<2x128xf32>
    %486 = vector.shape_cast %482 : vector<2x128xf32> to vector<1x2x128xf32>
    tpu.vector_store %arg6[%483, %c0_162, %c0_163], %486 {strides = array<i32>} : memref<8x2x128xf32, #tpu.memory_space<vmem>>, vector<1x2x128xf32>,
    %c6_i32 = arith.constant 6 : i32
    %487 = arith.index_cast %c6_i32 : i32 to index
    %c0_164 = arith.constant 0 : index
    %c0_165 = arith.constant 0 : index
    %488 = vector.load %arg1[%487, %c0_164, %c0_165] : memref<8x2x384xf32, #tpu.memory_space<vmem>>, vector<1x2x384xf32>
    %489 = vector.shape_cast %488 : vector<1x2x384xf32> to vector<2x384xf32>
    %cst_166 = arith.constant dense<0.000000e+00> : vector<2x384xf32>
    %490 = tpu.matmul %442, %4, %cst_166 {dimension_numbers = #tpu.dot_dimension_numbers<[1], [0], [0], [1], [0, 0, 1, 1], [], []>} : vector<2x128xf32>, vector<128x384xf32>, vector<2x384xf32> -> vector<2x384xf32>
    %491 = vector.extract_strided_slice %489 {offsets = [0, 0], sizes = [2, 128], strides = [1, 1]} : vector<2x384xf32> to vector<2x128xf32>
    %492 = vector.extract_strided_slice %490 {offsets = [0, 0], sizes = [2, 128], strides = [1, 1]} : vector<2x384xf32> to vector<2x128xf32>
    %493 = arith.addf %491, %492 : vector<2x128xf32>
    %cst_167 = arith.constant 5.000000e-01 : f32
    %494 = vector.broadcast %cst_167 : f32 to vector<2x128xf32>
    %495 = arith.mulf %494, %493 : vector<2x128xf32>
    %496 = math.tanh %495 : vector<2x128xf32>
    %cst_168 = arith.constant 1.000000e+00 : f32
    %497 = vector.broadcast %cst_168 : f32 to vector<2x128xf32>
    %498 = arith.addf %497, %496 : vector<2x128xf32>
    %cst_169 = arith.constant 5.000000e-01 : f32
    %499 = vector.broadcast %cst_169 : f32 to vector<2x128xf32>
    %500 = arith.mulf %499, %498 : vector<2x128xf32>
    %501 = vector.extract_strided_slice %489 {offsets = [0, 128], sizes = [2, 128], strides = [1, 1]} : vector<2x384xf32> to vector<2x128xf32>
    %502 = vector.extract_strided_slice %490 {offsets = [0, 128], sizes = [2, 128], strides = [1, 1]} : vector<2x384xf32> to vector<2x128xf32>
    %503 = arith.addf %501, %502 : vector<2x128xf32>
    %cst_170 = arith.constant 5.000000e-01 : f32
    %504 = vector.broadcast %cst_170 : f32 to vector<2x128xf32>
    %505 = arith.mulf %504, %503 : vector<2x128xf32>
    %506 = math.tanh %505 : vector<2x128xf32>
    %cst_171 = arith.constant 1.000000e+00 : f32
    %507 = vector.broadcast %cst_171 : f32 to vector<2x128xf32>
    %508 = arith.addf %507, %506 : vector<2x128xf32>
    %cst_172 = arith.constant 5.000000e-01 : f32
    %509 = vector.broadcast %cst_172 : f32 to vector<2x128xf32>
    %510 = arith.mulf %509, %508 : vector<2x128xf32>
    %511 = vector.extract_strided_slice %489 {offsets = [0, 256], sizes = [2, 128], strides = [1, 1]} : vector<2x384xf32> to vector<2x128xf32>
    %512 = vector.extract_strided_slice %490 {offsets = [0, 256], sizes = [2, 128], strides = [1, 1]} : vector<2x384xf32> to vector<2x128xf32>
    %513 = arith.addf %512, %8 : vector<2x128xf32>
    %514 = arith.mulf %500, %513 : vector<2x128xf32>
    %515 = arith.addf %511, %514 : vector<2x128xf32>
    %516 = math.tanh %515 : vector<2x128xf32>
    %cst_173 = arith.constant 1.000000e+00 : f32
    %517 = vector.broadcast %cst_173 : f32 to vector<2x128xf32>
    %518 = arith.subf %517, %510 : vector<2x128xf32>
    %519 = arith.mulf %518, %516 : vector<2x128xf32>
    %520 = arith.mulf %510, %442 : vector<2x128xf32>
    %521 = arith.addf %519, %520 : vector<2x128xf32>
    %522 = arith.index_cast %c6_i32 : i32 to index
    %c0_174 = arith.constant 0 : index
    %c0_175 = arith.constant 0 : index
    %523 = vector.load %arg5[%522, %c0_174, %c0_175] : memref<8x2x128xf32, #tpu.memory_space<vmem>>, vector<1x2x128xf32>
    %524 = vector.shape_cast %523 : vector<1x2x128xf32> to vector<2x128xf32>
    %525 = vector.shape_cast %521 : vector<2x128xf32> to vector<1x2x128xf32>
    tpu.vector_store %arg5[%522, %c0_174, %c0_175], %525 {strides = array<i32>} : memref<8x2x128xf32, #tpu.memory_space<vmem>>, vector<1x2x128xf32>,
    %c7_i32_176 = arith.constant 7 : i32
    %526 = arith.subi %c7_i32_176, %c6_i32 : i32
    %527 = arith.index_cast %526 : i32 to index
    %c0_177 = arith.constant 0 : index
    %c0_178 = arith.constant 0 : index
    %528 = vector.load %arg2[%527, %c0_177, %c0_178] : memref<8x2x384xf32, #tpu.memory_space<vmem>>, vector<1x2x384xf32>
    %529 = vector.shape_cast %528 : vector<1x2x384xf32> to vector<2x384xf32>
    %cst_179 = arith.constant dense<0.000000e+00> : vector<2x384xf32>
    %530 = tpu.matmul %482, %6, %cst_179 {dimension_numbers = #tpu.dot_dimension_numbers<[1], [0], [0], [1], [0, 0, 1, 1], [], []>} : vector<2x128xf32>, vector<128x384xf32>, vector<2x384xf32> -> vector<2x384xf32>
    %531 = vector.extract_strided_slice %529 {offsets = [0, 0], sizes = [2, 128], strides = [1, 1]} : vector<2x384xf32> to vector<2x128xf32>
    %532 = vector.extract_strided_slice %530 {offsets = [0, 0], sizes = [2, 128], strides = [1, 1]} : vector<2x384xf32> to vector<2x128xf32>
    %533 = arith.addf %531, %532 : vector<2x128xf32>
    %cst_180 = arith.constant 5.000000e-01 : f32
    %534 = vector.broadcast %cst_180 : f32 to vector<2x128xf32>
    %535 = arith.mulf %534, %533 : vector<2x128xf32>
    %536 = math.tanh %535 : vector<2x128xf32>
    %cst_181 = arith.constant 1.000000e+00 : f32
    %537 = vector.broadcast %cst_181 : f32 to vector<2x128xf32>
    %538 = arith.addf %537, %536 : vector<2x128xf32>
    %cst_182 = arith.constant 5.000000e-01 : f32
    %539 = vector.broadcast %cst_182 : f32 to vector<2x128xf32>
    %540 = arith.mulf %539, %538 : vector<2x128xf32>
    %541 = vector.extract_strided_slice %529 {offsets = [0, 128], sizes = [2, 128], strides = [1, 1]} : vector<2x384xf32> to vector<2x128xf32>
    %542 = vector.extract_strided_slice %530 {offsets = [0, 128], sizes = [2, 128], strides = [1, 1]} : vector<2x384xf32> to vector<2x128xf32>
    %543 = arith.addf %541, %542 : vector<2x128xf32>
    %cst_183 = arith.constant 5.000000e-01 : f32
    %544 = vector.broadcast %cst_183 : f32 to vector<2x128xf32>
    %545 = arith.mulf %544, %543 : vector<2x128xf32>
    %546 = math.tanh %545 : vector<2x128xf32>
    %cst_184 = arith.constant 1.000000e+00 : f32
    %547 = vector.broadcast %cst_184 : f32 to vector<2x128xf32>
    %548 = arith.addf %547, %546 : vector<2x128xf32>
    %cst_185 = arith.constant 5.000000e-01 : f32
    %549 = vector.broadcast %cst_185 : f32 to vector<2x128xf32>
    %550 = arith.mulf %549, %548 : vector<2x128xf32>
    %551 = vector.extract_strided_slice %529 {offsets = [0, 256], sizes = [2, 128], strides = [1, 1]} : vector<2x384xf32> to vector<2x128xf32>
    %552 = vector.extract_strided_slice %530 {offsets = [0, 256], sizes = [2, 128], strides = [1, 1]} : vector<2x384xf32> to vector<2x128xf32>
    %553 = arith.addf %552, %10 : vector<2x128xf32>
    %554 = arith.mulf %540, %553 : vector<2x128xf32>
    %555 = arith.addf %551, %554 : vector<2x128xf32>
    %556 = math.tanh %555 : vector<2x128xf32>
    %cst_186 = arith.constant 1.000000e+00 : f32
    %557 = vector.broadcast %cst_186 : f32 to vector<2x128xf32>
    %558 = arith.subf %557, %550 : vector<2x128xf32>
    %559 = arith.mulf %558, %556 : vector<2x128xf32>
    %560 = arith.mulf %550, %482 : vector<2x128xf32>
    %561 = arith.addf %559, %560 : vector<2x128xf32>
    %562 = arith.index_cast %526 : i32 to index
    %c0_187 = arith.constant 0 : index
    %c0_188 = arith.constant 0 : index
    %563 = vector.load %arg6[%562, %c0_187, %c0_188] : memref<8x2x128xf32, #tpu.memory_space<vmem>>, vector<1x2x128xf32>
    %564 = vector.shape_cast %563 : vector<1x2x128xf32> to vector<2x128xf32>
    %565 = vector.shape_cast %561 : vector<2x128xf32> to vector<1x2x128xf32>
    tpu.vector_store %arg6[%562, %c0_187, %c0_188], %565 {strides = array<i32>} : memref<8x2x128xf32, #tpu.memory_space<vmem>>, vector<1x2x128xf32>,
    %c7_i32_189 = arith.constant 7 : i32
    %566 = arith.index_cast %c7_i32_189 : i32 to index
    %c0_190 = arith.constant 0 : index
    %c0_191 = arith.constant 0 : index
    %567 = vector.load %arg1[%566, %c0_190, %c0_191] : memref<8x2x384xf32, #tpu.memory_space<vmem>>, vector<1x2x384xf32>
    %568 = vector.shape_cast %567 : vector<1x2x384xf32> to vector<2x384xf32>
    %cst_192 = arith.constant dense<0.000000e+00> : vector<2x384xf32>
    %569 = tpu.matmul %521, %4, %cst_192 {dimension_numbers = #tpu.dot_dimension_numbers<[1], [0], [0], [1], [0, 0, 1, 1], [], []>} : vector<2x128xf32>, vector<128x384xf32>, vector<2x384xf32> -> vector<2x384xf32>
    %570 = vector.extract_strided_slice %568 {offsets = [0, 0], sizes = [2, 128], strides = [1, 1]} : vector<2x384xf32> to vector<2x128xf32>
    %571 = vector.extract_strided_slice %569 {offsets = [0, 0], sizes = [2, 128], strides = [1, 1]} : vector<2x384xf32> to vector<2x128xf32>
    %572 = arith.addf %570, %571 : vector<2x128xf32>
    %cst_193 = arith.constant 5.000000e-01 : f32
    %573 = vector.broadcast %cst_193 : f32 to vector<2x128xf32>
    %574 = arith.mulf %573, %572 : vector<2x128xf32>
    %575 = math.tanh %574 : vector<2x128xf32>
    %cst_194 = arith.constant 1.000000e+00 : f32
    %576 = vector.broadcast %cst_194 : f32 to vector<2x128xf32>
    %577 = arith.addf %576, %575 : vector<2x128xf32>
    %cst_195 = arith.constant 5.000000e-01 : f32
    %578 = vector.broadcast %cst_195 : f32 to vector<2x128xf32>
    %579 = arith.mulf %578, %577 : vector<2x128xf32>
    %580 = vector.extract_strided_slice %568 {offsets = [0, 128], sizes = [2, 128], strides = [1, 1]} : vector<2x384xf32> to vector<2x128xf32>
    %581 = vector.extract_strided_slice %569 {offsets = [0, 128], sizes = [2, 128], strides = [1, 1]} : vector<2x384xf32> to vector<2x128xf32>
    %582 = arith.addf %580, %581 : vector<2x128xf32>
    %cst_196 = arith.constant 5.000000e-01 : f32
    %583 = vector.broadcast %cst_196 : f32 to vector<2x128xf32>
    %584 = arith.mulf %583, %582 : vector<2x128xf32>
    %585 = math.tanh %584 : vector<2x128xf32>
    %cst_197 = arith.constant 1.000000e+00 : f32
    %586 = vector.broadcast %cst_197 : f32 to vector<2x128xf32>
    %587 = arith.addf %586, %585 : vector<2x128xf32>
    %cst_198 = arith.constant 5.000000e-01 : f32
    %588 = vector.broadcast %cst_198 : f32 to vector<2x128xf32>
    %589 = arith.mulf %588, %587 : vector<2x128xf32>
    %590 = vector.extract_strided_slice %568 {offsets = [0, 256], sizes = [2, 128], strides = [1, 1]} : vector<2x384xf32> to vector<2x128xf32>
    %591 = vector.extract_strided_slice %569 {offsets = [0, 256], sizes = [2, 128], strides = [1, 1]} : vector<2x384xf32> to vector<2x128xf32>
    %592 = arith.addf %591, %8 : vector<2x128xf32>
    %593 = arith.mulf %579, %592 : vector<2x128xf32>
    %594 = arith.addf %590, %593 : vector<2x128xf32>
    %595 = math.tanh %594 : vector<2x128xf32>
    %cst_199 = arith.constant 1.000000e+00 : f32
    %596 = vector.broadcast %cst_199 : f32 to vector<2x128xf32>
    %597 = arith.subf %596, %589 : vector<2x128xf32>
    %598 = arith.mulf %597, %595 : vector<2x128xf32>
    %599 = arith.mulf %589, %521 : vector<2x128xf32>
    %600 = arith.addf %598, %599 : vector<2x128xf32>
    %601 = arith.index_cast %c7_i32_189 : i32 to index
    %c0_200 = arith.constant 0 : index
    %c0_201 = arith.constant 0 : index
    %602 = vector.load %arg5[%601, %c0_200, %c0_201] : memref<8x2x128xf32, #tpu.memory_space<vmem>>, vector<1x2x128xf32>
    %603 = vector.shape_cast %602 : vector<1x2x128xf32> to vector<2x128xf32>
    %604 = vector.shape_cast %600 : vector<2x128xf32> to vector<1x2x128xf32>
    tpu.vector_store %arg5[%601, %c0_200, %c0_201], %604 {strides = array<i32>} : memref<8x2x128xf32, #tpu.memory_space<vmem>>, vector<1x2x128xf32>,
    %c7_i32_202 = arith.constant 7 : i32
    %605 = arith.subi %c7_i32_202, %c7_i32_189 : i32
    %606 = arith.index_cast %605 : i32 to index
    %c0_203 = arith.constant 0 : index
    %c0_204 = arith.constant 0 : index
    %607 = vector.load %arg2[%606, %c0_203, %c0_204] : memref<8x2x384xf32, #tpu.memory_space<vmem>>, vector<1x2x384xf32>
    %608 = vector.shape_cast %607 : vector<1x2x384xf32> to vector<2x384xf32>
    %cst_205 = arith.constant dense<0.000000e+00> : vector<2x384xf32>
    %609 = tpu.matmul %561, %6, %cst_205 {dimension_numbers = #tpu.dot_dimension_numbers<[1], [0], [0], [1], [0, 0, 1, 1], [], []>} : vector<2x128xf32>, vector<128x384xf32>, vector<2x384xf32> -> vector<2x384xf32>
    %610 = vector.extract_strided_slice %608 {offsets = [0, 0], sizes = [2, 128], strides = [1, 1]} : vector<2x384xf32> to vector<2x128xf32>
    %611 = vector.extract_strided_slice %609 {offsets = [0, 0], sizes = [2, 128], strides = [1, 1]} : vector<2x384xf32> to vector<2x128xf32>
    %612 = arith.addf %610, %611 : vector<2x128xf32>
    %cst_206 = arith.constant 5.000000e-01 : f32
    %613 = vector.broadcast %cst_206 : f32 to vector<2x128xf32>
    %614 = arith.mulf %613, %612 : vector<2x128xf32>
    %615 = math.tanh %614 : vector<2x128xf32>
    %cst_207 = arith.constant 1.000000e+00 : f32
    %616 = vector.broadcast %cst_207 : f32 to vector<2x128xf32>
    %617 = arith.addf %616, %615 : vector<2x128xf32>
    %cst_208 = arith.constant 5.000000e-01 : f32
    %618 = vector.broadcast %cst_208 : f32 to vector<2x128xf32>
    %619 = arith.mulf %618, %617 : vector<2x128xf32>
    %620 = vector.extract_strided_slice %608 {offsets = [0, 128], sizes = [2, 128], strides = [1, 1]} : vector<2x384xf32> to vector<2x128xf32>
    %621 = vector.extract_strided_slice %609 {offsets = [0, 128], sizes = [2, 128], strides = [1, 1]} : vector<2x384xf32> to vector<2x128xf32>
    %622 = arith.addf %620, %621 : vector<2x128xf32>
    %cst_209 = arith.constant 5.000000e-01 : f32
    %623 = vector.broadcast %cst_209 : f32 to vector<2x128xf32>
    %624 = arith.mulf %623, %622 : vector<2x128xf32>
    %625 = math.tanh %624 : vector<2x128xf32>
    %cst_210 = arith.constant 1.000000e+00 : f32
    %626 = vector.broadcast %cst_210 : f32 to vector<2x128xf32>
    %627 = arith.addf %626, %625 : vector<2x128xf32>
    %cst_211 = arith.constant 5.000000e-01 : f32
    %628 = vector.broadcast %cst_211 : f32 to vector<2x128xf32>
    %629 = arith.mulf %628, %627 : vector<2x128xf32>
    %630 = vector.extract_strided_slice %608 {offsets = [0, 256], sizes = [2, 128], strides = [1, 1]} : vector<2x384xf32> to vector<2x128xf32>
    %631 = vector.extract_strided_slice %609 {offsets = [0, 256], sizes = [2, 128], strides = [1, 1]} : vector<2x384xf32> to vector<2x128xf32>
    %632 = arith.addf %631, %10 : vector<2x128xf32>
    %633 = arith.mulf %619, %632 : vector<2x128xf32>
    %634 = arith.addf %630, %633 : vector<2x128xf32>
    %635 = math.tanh %634 : vector<2x128xf32>
    %cst_212 = arith.constant 1.000000e+00 : f32
    %636 = vector.broadcast %cst_212 : f32 to vector<2x128xf32>
    %637 = arith.subf %636, %629 : vector<2x128xf32>
    %638 = arith.mulf %637, %635 : vector<2x128xf32>
    %639 = arith.mulf %629, %561 : vector<2x128xf32>
    %640 = arith.addf %638, %639 : vector<2x128xf32>
    %641 = arith.index_cast %605 : i32 to index
    %c0_213 = arith.constant 0 : index
    %c0_214 = arith.constant 0 : index
    %642 = vector.load %arg6[%641, %c0_213, %c0_214] : memref<8x2x128xf32, #tpu.memory_space<vmem>>, vector<1x2x128xf32>
    %643 = vector.shape_cast %642 : vector<1x2x128xf32> to vector<2x128xf32>
    %644 = vector.shape_cast %640 : vector<2x128xf32> to vector<1x2x128xf32>
    tpu.vector_store %arg6[%641, %c0_213, %c0_214], %644 {strides = array<i32>} : memref<8x2x128xf32, #tpu.memory_space<vmem>>, vector<1x2x128xf32>,
    %c8_i32 = arith.constant 8 : i32
    %c0_215 = arith.constant 0 : index
    %c0_216 = arith.constant 0 : index
    %645 = vector.load %arg9[%c0_215, %c0_216] : memref<2x128xf32, #tpu.memory_space<vmem>>, vector<2x128xf32>
    tpu.vector_store %arg9[%c0_215, %c0_216], %600 {strides = array<i32>} : memref<2x128xf32, #tpu.memory_space<vmem>>, vector<2x128xf32>,
    %c0_217 = arith.constant 0 : index
    %c0_218 = arith.constant 0 : index
    %646 = vector.load %arg10[%c0_217, %c0_218] : memref<2x128xf32, #tpu.memory_space<vmem>>, vector<2x128xf32>
    tpu.vector_store %arg10[%c0_217, %c0_218], %640 {strides = array<i32>} : memref<2x128xf32, #tpu.memory_space<vmem>>, vector<2x128xf32>,
    return
  }
  func.func @transform_0(%arg0: i32) -> (i32, i32, i32) {
    %c0_i32 = arith.constant 0 : i32
    %c0_i32_0 = arith.constant 0 : i32
    %c0_i32_1 = arith.constant 0 : i32
    return %arg0, %c0_i32, %c0_i32_0 : i32, i32, i32
  }
  func.func @transform_1(%arg0: i32) -> (i32, i32, i32) {
    %c0_i32 = arith.constant 0 : i32
    %0 = arith.subi %c0_i32, %arg0 : i32
    %c0_i32_0 = arith.constant 0 : i32
    %c0_i32_1 = arith.constant 0 : i32
    %c0_i32_2 = arith.constant 0 : i32
    return %0, %c0_i32_0, %c0_i32_1 : i32, i32, i32
  }
  func.func @transform_2(%arg0: i32) -> (i32, i32, i32) {
    %c0_i32 = arith.constant 0 : i32
    %c0_i32_0 = arith.constant 0 : i32
    %c0_i32_1 = arith.constant 0 : i32
    %c0_i32_2 = arith.constant 0 : i32
    return %c0_i32, %c0_i32_0, %c0_i32_1 : i32, i32, i32
  }
  func.func @transform_4(%arg0: i32) -> (i32, i32, i32) {
    %c0_i32 = arith.constant 0 : i32
    %c0_i32_0 = arith.constant 0 : i32
    %c0_i32_1 = arith.constant 0 : i32
    return %arg0, %c0_i32, %c0_i32_0 : i32, i32, i32
  }
  func.func @transform_5(%arg0: i32) -> (i32, i32, i32) {
    %c0_i32 = arith.constant 0 : i32
    %0 = arith.subi %c0_i32, %arg0 : i32
    %c0_i32_0 = arith.constant 0 : i32
    %c0_i32_1 = arith.constant 0 : i32
    %c0_i32_2 = arith.constant 0 : i32
    return %0, %c0_i32_0, %c0_i32_1 : i32, i32, i32
  }
}

</mosaic_0001>

<llo_original>
// kernel: encoder_forward.1
$region0: #{encoder_forward.1}
  #allocation0 [shape = 'u32[]', space=smem, size = 0x4, offset = 0x4, fixed_abs, tag = 'smem constant byte address 0x4 - core index']
  #allocation1 [shape = 'u32[72,128]{1,0:T(1,128)}', space=vmem, size = 0x9000, scoped, tag = 'internal scratch']
  #allocation2 [shape = 'f32[2,128,384]{2,1,0:T(8,128)}', space=vmem, size = 0x60000, scoped, tag = 'scratch operand']
  #allocation3 [shape = 's32[1]{0}', space=sflag, size = 0x4, scoped, tag = 'scratch operand']
  #allocation4 [shape = 'f32[2,128]{1,0:T(2,128)}', space=vmem, size = 0x400, scoped, tag = 'scratch operand']
  #allocation5 [shape = 'f32[2,128]{1,0:T(2,128)}', space=vmem, size = 0x400, scoped, tag = 'scratch operand']
  #allocation6 [shape = 's32[]', space=sflag, size = 0x4, offset = 0, fixed_abs, tag = 'sflag constant byte address 0x0 - dummy sync flag']
  %s0 = inlined_call_operand.vmem [shape: f32[8,2,384], index: 0, kind: input, shape index: {}]
  %s1 = inlined_call_operand.vmem [shape: f32[8,2,384], index: 1, kind: input, shape index: {}]
  %s2 = inlined_call_operand.vmem [shape: f32[2,2,128], index: 2, kind: input, shape index: {}]
  %s3 = inlined_call_operand.vmem [shape: f32[2,128,384], index: 3, kind: input, shape index: {}]
  %s4 = inlined_call_operand.vmem [shape: f32[8,2,128], index: 4, kind: output, shape index: {0}]
  %s5 = inlined_call_operand.vmem [shape: f32[8,2,128], index: 5, kind: output, shape index: {1}]
  %6 = xla_tuple %s4, %s5
  %s7 = sld [smem:[#allocation0]]
  $region53: #{encoder_forward.1} parent=0
    _
  %s9 = ssub.s32 1, %s7
  %s10 = scalar_select 0, %s9, %s7
  // Predicated region
  $region2: #{encoder_forward.1} parent=0 // pred_check
    _
  $region3: #{encoder_forward.1} parent=0 // pred_check_branch
    %12 = sbr.rel (0) target = $region5
  $region4: #{encoder_forward.1} parent=0 // pred_region
    _
  $region5: #{encoder_forward.1} parent=0 // pred_fallthru
    _
  // Predicated region
  $region6: #{encoder_forward.1} parent=0 // pred_check
    _
  $region7: #{encoder_forward.1} parent=0 // pred_check_branch
    %14 = sbr.rel (0) target = $region9
  $region8: #{encoder_forward.1} parent=0 // pred_region
    %s15 = ssub.s32 0, 0
    %s16 = smul.u32 8, %s15
    %p17 = scmp.lt.s32.totalorder %s16, 7
    %s18 = scalar_select %p17, %s16, 7
    %s19 = smul.addr %s18, 3
    %s20 = smul.addr %s19, 2
    %s21 = scalar_lea.vmem %s1, %s20
    %s22 = ssub.s32 0, 0
    %s23 = smul.u32 8, %s22
  $region9: #{encoder_forward.1} parent=0 // pred_fallthru
    _
  // Predicated region
  $region10: #{encoder_forward.1} parent=0 // pred_check
    _
  $region11: #{encoder_forward.1} parent=0 // pred_check_branch
    %25 = sbr.rel (0) target = $region13
  $region12: #{encoder_forward.1} parent=0 // pred_region
    _
  $region13: #{encoder_forward.1} parent=0 // pred_fallthru
    _
  %s26 = ssub.s32 0, 0
  %s27 = smul.u32 8, %s26
  %p28 = scmp.lt.s32.totalorder %s27, 7
  %s29 = scalar_select %p28, %s27, 7
  %s30 = smul.addr %s29, 3
  %s31 = smul.addr %s30, 2
  %s32 = scalar_lea.vmem %s1, %s31
  %s33 = ssub.s32 0, 0
  %s34 = smul.u32 8, %s33
  %p35 = scmp.lt.s32.totalorder %s34, 7
  %s36 = scalar_select %p35, %s34, 7
  %s37 = smul.addr %s36, 2
  %s38 = scalar_lea.vmem %s5, %s37
  %s39 = ssub.s32 0, 0
  %s40 = smul.u32 8, %s39
  %p41 = scmp.lt.s32.totalorder %s40, 7
  %s42 = scalar_select %p41, %s40, 7
  %s43 = smul.addr %s42, 3
  %s44 = smul.addr %s43, 2
  %s45 = scalar_lea.vmem %s1, %s44
  %s46 = ssub.s32 0, 0
  %s47 = smul.u32 8, %s46
  %s48 = ssub.s32 0, 0
  %s49 = smul.u32 8, %s48
  %p50 = scmp.lt.s32.totalorder %s49, 7
  %s51 = scalar_select %p50, %s49, 7
  %s52 = smul.addr %s51, 2
  %s53 = scalar_lea.vmem %s5, %s52
  %s54 = ssub.s32 0, 0
  %s55 = smul.u32 8, %s54
  %p56 = scmp.eq.s32.totalorder 0, 0
  // Predicated region
  $region14: #{encoder_forward.1} parent=0 // pred_check
    %p57 = pneg %p56
  $region15: #{encoder_forward.1} parent=0 // pred_check_branch
    %59 = sbr.rel (%p57) target = $region17
  $region16: #{encoder_forward.1} parent=0 // pred_region
    // Predicated region
    $region18: #{encoder_forward.1} parent=16 // pred_check
      _
    $region19: #{encoder_forward.1} parent=16 // pred_check_branch
      %61 = sbr.rel (0) target = $region21
    $region20: #{encoder_forward.1} parent=16 // pred_region
      loop: start=0, step=1, limit=1
      $region22: #{encoder_forward.1} parent=20 // loop_pre_header
        _
      $region23: #{encoder_forward.1} parent=20 // loop_header
        %s63 = sphi 0, %s67
        %p64 = scmp.ge.s32.totalorder %s63, 1
        %s68 = sphi %s3, %s3
        %s69 = sphi [#allocation2], [#allocation2]
      $region24: #{encoder_forward.1} parent=20 // loop_header_branch
        %66 = sbr.rel (%p64) target = $region28
      $region25: #{encoder_forward.1} parent=20 // loop_body
        %v70 = vld [vmem:[%s68] sm:$0xff]
        %71 = vst [vmem:[%s69] sm:$0xff] %v70
        %v72 = vld [vmem:[%s68 + $0x8] sm:$0xff]
        %73 = vst [vmem:[%s69 + $0x8] sm:$0xff] %v72
        %v74 = vld [vmem:[%s68 + $0x10] sm:$0xff]
        %75 = vst [vmem:[%s69 + $0x10] sm:$0xff] %v74
        %v76 = vld [vmem:[%s68 + $0x18] sm:$0xff]
        %77 = vst [vmem:[%s69 + $0x18] sm:$0xff] %v76
        %v78 = vld [vmem:[%s68 + $0x20] sm:$0xff]
        %79 = vst [vmem:[%s69 + $0x20] sm:$0xff] %v78
        %v80 = vld [vmem:[%s68 + $0x28] sm:$0xff]
        %81 = vst [vmem:[%s69 + $0x28] sm:$0xff] %v80
        %v82 = vld [vmem:[%s68 + $0x30] sm:$0xff]
        %83 = vst [vmem:[%s69 + $0x30] sm:$0xff] %v82
        %v84 = vld [vmem:[%s68 + $0x38] sm:$0xff]
        %85 = vst [vmem:[%s69 + $0x38] sm:$0xff] %v84
        %v86 = vld [vmem:[%s68 + $0x40] sm:$0xff]
        %87 = vst [vmem:[%s69 + $0x40] sm:$0xff] %v86
        %v88 = vld [vmem:[%s68 + $0x48] sm:$0xff]
        %89 = vst [vmem:[%s69 + $0x48] sm:$0xff] %v88
        %v90 = vld [vmem:[%s68 + $0x50] sm:$0xff]
        %91 = vst [vmem:[%s69 + $0x50] sm:$0xff] %v90
        %v92 = vld [vmem:[%s68 + $0x58] sm:$0xff]
        %93 = vst [vmem:[%s69 + $0x58] sm:$0xff] %v92
        %v94 = vld [vmem:[%s68 + $0x60] sm:$0xff]
        %95 = vst [vmem:[%s69 + $0x60] sm:$0xff] %v94
        %v96 = vld [vmem:[%s68 + $0x68] sm:$0xff]
        %97 = vst [vmem:[%s69 + $0x68] sm:$0xff] %v96
        %v98 = vld [vmem:[%s68 + $0x70] sm:$0xff]
        %99 = vst [vmem:[%s69 + $0x70] sm:$0xff] %v98
        %v100 = vld [vmem:[%s68 + $0x78] sm:$0xff]
        %101 = vst [vmem:[%s69 + $0x78] sm:$0xff] %v100
        %v102 = vld [vmem:[%s68 + $0x80] sm:$0xff]
        %103 = vst [vmem:[%s69 + $0x80] sm:$0xff] %v102
        %v104 = vld [vmem:[%s68 + $0x88] sm:$0xff]
        %105 = vst [vmem:[%s69 + $0x88] sm:$0xff] %v104
        %v106 = vld [vmem:[%s68 + $0x90] sm:$0xff]
        %107 = vst [vmem:[%s69 + $0x90] sm:$0xff] %v106
        %v108 = vld [vmem:[%s68 + $0x98] sm:$0xff]
        %109 = vst [vmem:[%s69 + $0x98] sm:$0xff] %v108
        %v110 = vld [vmem:[%s68 + $0xa0] sm:$0xff]
        %111 = vst [vmem:[%s69 + $0xa0] sm:$0xff] %v110
        %v112 = vld [vmem:[%s68 + $0xa8] sm:$0xff]
        %113 = vst [vmem:[%s69 + $0xa8] sm:$0xff] %v112
        %v114 = vld [vmem:[%s68 + $0xb0] sm:$0xff]
        %115 = vst [vmem:[%s69 + $0xb0] sm:$0xff] %v114
        %v116 = vld [vmem:[%s68 + $0xb8] sm:$0xff]
        %117 = vst [vmem:[%s69 + $0xb8] sm:$0xff] %v116
        %v118 = vld [vmem:[%s68 + $0xc0] sm:$0xff]
        %119 = vst [vmem:[%s69 + $0xc0] sm:$0xff] %v118
        %v120 = vld [vmem:[%s68 + $0xc8] sm:$0xff]
        %121 = vst [vmem:[%s69 + $0xc8] sm:$0xff] %v120
        %v122 = vld [vmem:[%s68 + $0xd0] sm:$0xff]
        %123 = vst [vmem:[%s69 + $0xd0] sm:$0xff] %v122
        %v124 = vld [vmem:[%s68 + $0xd8] sm:$0xff]
        %125 = vst [vmem:[%s69 + $0xd8] sm:$0xff] %v124
        %v126 = vld [vmem:[%s68 + $0xe0] sm:$0xff]
        %127 = vst [vmem:[%s69 + $0xe0] sm:$0xff] %v126
        %v128 = vld [vmem:[%s68 + $0xe8] sm:$0xff]
        %129 = vst [vmem:[%s69 + $0xe8] sm:$0xff] %v128
        %v130 = vld [vmem:[%s68 + $0xf0] sm:$0xff]
        %131 = vst [vmem:[%s69 + $0xf0] sm:$0xff] %v130
        %v132 = vld [vmem:[%s68 + $0xf8] sm:$0xff]
        %133 = vst [vmem:[%s69 + $0xf8] sm:$0xff] %v132
        %v134 = vld [vmem:[%s68 + $0x100] sm:$0xff]
        %135 = vst [vmem:[%s69 + $0x100] sm:$0xff] %v134
        %v136 = vld [vmem:[%s68 + $0x108] sm:$0xff]
        %137 = vst [vmem:[%s69 + $0x108] sm:$0xff] %v136
        %v138 = vld [vmem:[%s68 + $0x110] sm:$0xff]
        %139 = vst [vmem:[%s69 + $0x110] sm:$0xff] %v138
        %v140 = vld [vmem:[%s68 + $0x118] sm:$0xff]
        %141 = vst [vmem:[%s69 + $0x118] sm:$0xff] %v140
        %v142 = vld [vmem:[%s68 + $0x120] sm:$0xff]
        %143 = vst [vmem:[%s69 + $0x120] sm:$0xff] %v142
        %v144 = vld [vmem:[%s68 + $0x128] sm:$0xff]
        %145 = vst [vmem:[%s69 + $0x128] sm:$0xff] %v144
        %v146 = vld [vmem:[%s68 + $0x130] sm:$0xff]
        %147 = vst [vmem:[%s69 + $0x130] sm:$0xff] %v146
        %v148 = vld [vmem:[%s68 + $0x138] sm:$0xff]
        %149 = vst [vmem:[%s69 + $0x138] sm:$0xff] %v148
        %v150 = vld [vmem:[%s68 + $0x140] sm:$0xff]
        %151 = vst [vmem:[%s69 + $0x140] sm:$0xff] %v150
        %v152 = vld [vmem:[%s68 + $0x148] sm:$0xff]
        %153 = vst [vmem:[%s69 + $0x148] sm:$0xff] %v152
        %v154 = vld [vmem:[%s68 + $0x150] sm:$0xff]
        %155 = vst [vmem:[%s69 + $0x150] sm:$0xff] %v154
        %v156 = vld [vmem:[%s68 + $0x158] sm:$0xff]
        %157 = vst [vmem:[%s69 + $0x158] sm:$0xff] %v156
        %v158 = vld [vmem:[%s68 + $0x160] sm:$0xff]
        %159 = vst [vmem:[%s69 + $0x160] sm:$0xff] %v158
        %v160 = vld [vmem:[%s68 + $0x168] sm:$0xff]
        %161 = vst [vmem:[%s69 + $0x168] sm:$0xff] %v160
        %v162 = vld [vmem:[%s68 + $0x170] sm:$0xff]
        %163 = vst [vmem:[%s69 + $0x170] sm:$0xff] %v162
        %v164 = vld [vmem:[%s68 + $0x178] sm:$0xff]
        %165 = vst [vmem:[%s69 + $0x178] sm:$0xff] %v164
        %v166 = vld [vmem:[%s68 + $0x180] sm:$0xff]
        %167 = vst [vmem:[%s69 + $0x180] sm:$0xff] %v166
        %v168 = vld [vmem:[%s68 + $0x188] sm:$0xff]
        %169 = vst [vmem:[%s69 + $0x188] sm:$0xff] %v168
        %v170 = vld [vmem:[%s68 + $0x190] sm:$0xff]
        %171 = vst [vmem:[%s69 + $0x190] sm:$0xff] %v170
        %v172 = vld [vmem:[%s68 + $0x198] sm:$0xff]
        %173 = vst [vmem:[%s69 + $0x198] sm:$0xff] %v172
        %v174 = vld [vmem:[%s68 + $0x1a0] sm:$0xff]
        %175 = vst [vmem:[%s69 + $0x1a0] sm:$0xff] %v174
        %v176 = vld [vmem:[%s68 + $0x1a8] sm:$0xff]
        %177 = vst [vmem:[%s69 + $0x1a8] sm:$0xff] %v176
        %v178 = vld [vmem:[%s68 + $0x1b0] sm:$0xff]
        %179 = vst [vmem:[%s69 + $0x1b0] sm:$0xff] %v178
        %v180 = vld [vmem:[%s68 + $0x1b8] sm:$0xff]
        %181 = vst [vmem:[%s69 + $0x1b8] sm:$0xff] %v180
        %v182 = vld [vmem:[%s68 + $0x1c0] sm:$0xff]
        %183 = vst [vmem:[%s69 + $0x1c0] sm:$0xff] %v182
        %v184 = vld [vmem:[%s68 + $0x1c8] sm:$0xff]
        %185 = vst [vmem:[%s69 + $0x1c8] sm:$0xff] %v184
        %v186 = vld [vmem:[%s68 + $0x1d0] sm:$0xff]
        %187 = vst [vmem:[%s69 + $0x1d0] sm:$0xff] %v186
        %v188 = vld [vmem:[%s68 + $0x1d8] sm:$0xff]
        %189 = vst [vmem:[%s69 + $0x1d8] sm:$0xff] %v188
        %v190 = vld [vmem:[%s68 + $0x1e0] sm:$0xff]
        %191 = vst [vmem:[%s69 + $0x1e0] sm:$0xff] %v190
        %v192 = vld [vmem:[%s68 + $0x1e8] sm:$0xff]
        %193 = vst [vmem:[%s69 + $0x1e8] sm:$0xff] %v192
        %v194 = vld [vmem:[%s68 + $0x1f0] sm:$0xff]
        %195 = vst [vmem:[%s69 + $0x1f0] sm:$0xff] %v194
        %v196 = vld [vmem:[%s68 + $0x1f8] sm:$0xff]
        %197 = vst [vmem:[%s69 + $0x1f8] sm:$0xff] %v196
        %v198 = vld [vmem:[%s68 + $0x200] sm:$0xff]
        %199 = vst [vmem:[%s69 + $0x200] sm:$0xff] %v198
        %v200 = vld [vmem:[%s68 + $0x208] sm:$0xff]
        %201 = vst [vmem:[%s69 + $0x208] sm:$0xff] %v200
        %v202 = vld [vmem:[%s68 + $0x210] sm:$0xff]
        %203 = vst [vmem:[%s69 + $0x210] sm:$0xff] %v202
        %v204 = vld [vmem:[%s68 + $0x218] sm:$0xff]
        %205 = vst [vmem:[%s69 + $0x218] sm:$0xff] %v204
        %v206 = vld [vmem:[%s68 + $0x220] sm:$0xff]
        %207 = vst [vmem:[%s69 + $0x220] sm:$0xff] %v206
        %v208 = vld [vmem:[%s68 + $0x228] sm:$0xff]
        %209 = vst [vmem:[%s69 + $0x228] sm:$0xff] %v208
        %v210 = vld [vmem:[%s68 + $0x230] sm:$0xff]
        %211 = vst [vmem:[%s69 + $0x230] sm:$0xff] %v210
        %v212 = vld [vmem:[%s68 + $0x238] sm:$0xff]
        %213 = vst [vmem:[%s69 + $0x238] sm:$0xff] %v212
        %v214 = vld [vmem:[%s68 + $0x240] sm:$0xff]
        %215 = vst [vmem:[%s69 + $0x240] sm:$0xff] %v214
        %v216 = vld [vmem:[%s68 + $0x248] sm:$0xff]
        %217 = vst [vmem:[%s69 + $0x248] sm:$0xff] %v216
        %v218 = vld [vmem:[%s68 + $0x250] sm:$0xff]
        %219 = vst [vmem:[%s69 + $0x250] sm:$0xff] %v218
        %v220 = vld [vmem:[%s68 + $0x258] sm:$0xff]
        %221 = vst [vmem:[%s69 + $0x258] sm:$0xff] %v220
        %v222 = vld [vmem:[%s68 + $0x260] sm:$0xff]
        %223 = vst [vmem:[%s69 + $0x260] sm:$0xff] %v222
        %v224 = vld [vmem:[%s68 + $0x268] sm:$0xff]
        %225 = vst [vmem:[%s69 + $0x268] sm:$0xff] %v224
        %v226 = vld [vmem:[%s68 + $0x270] sm:$0xff]
        %227 = vst [vmem:[%s69 + $0x270] sm:$0xff] %v226
        %v228 = vld [vmem:[%s68 + $0x278] sm:$0xff]
        %229 = vst [vmem:[%s69 + $0x278] sm:$0xff] %v228
        %v230 = vld [vmem:[%s68 + $0x280] sm:$0xff]
        %231 = vst [vmem:[%s69 + $0x280] sm:$0xff] %v230
        %v232 = vld [vmem:[%s68 + $0x288] sm:$0xff]
        %233 = vst [vmem:[%s69 + $0x288] sm:$0xff] %v232
        %v234 = vld [vmem:[%s68 + $0x290] sm:$0xff]
        %235 = vst [vmem:[%s69 + $0x290] sm:$0xff] %v234
        %v236 = vld [vmem:[%s68 + $0x298] sm:$0xff]
        %237 = vst [vmem:[%s69 + $0x298] sm:$0xff] %v236
        %v238 = vld [vmem:[%s68 + $0x2a0] sm:$0xff]
        %239 = vst [vmem:[%s69 + $0x2a0] sm:$0xff] %v238
        %v240 = vld [vmem:[%s68 + $0x2a8] sm:$0xff]
        %241 = vst [vmem:[%s69 + $0x2a8] sm:$0xff] %v240
        %v242 = vld [vmem:[%s68 + $0x2b0] sm:$0xff]
        %243 = vst [vmem:[%s69 + $0x2b0] sm:$0xff] %v242
        %v244 = vld [vmem:[%s68 + $0x2b8] sm:$0xff]
        %245 = vst [vmem:[%s69 + $0x2b8] sm:$0xff] %v244
        %v246 = vld [vmem:[%s68 + $0x2c0] sm:$0xff]
        %247 = vst [vmem:[%s69 + $0x2c0] sm:$0xff] %v246
        %v248 = vld [vmem:[%s68 + $0x2c8] sm:$0xff]
        %249 = vst [vmem:[%s69 + $0x2c8] sm:$0xff] %v248
        %v250 = vld [vmem:[%s68 + $0x2d0] sm:$0xff]
        %251 = vst [vmem:[%s69 + $0x2d0] sm:$0xff] %v250
        %v252 = vld [vmem:[%s68 + $0x2d8] sm:$0xff]
        %253 = vst [vmem:[%s69 + $0x2d8] sm:$0xff] %v252
        %v254 = vld [vmem:[%s68 + $0x2e0] sm:$0xff]
        %255 = vst [vmem:[%s69 + $0x2e0] sm:$0xff] %v254
        %v256 = vld [vmem:[%s68 + $0x2e8] sm:$0xff]
        %257 = vst [vmem:[%s69 + $0x2e8] sm:$0xff] %v256
        %v258 = vld [vmem:[%s68 + $0x2f0] sm:$0xff]
        %259 = vst [vmem:[%s69 + $0x2f0] sm:$0xff] %v258
        %v260 = vld [vmem:[%s68 + $0x2f8] sm:$0xff]
        %261 = vst [vmem:[%s69 + $0x2f8] sm:$0xff] %v260
      $region26: #{encoder_forward.1} parent=20 // loop_footer
        %s67 = sadd.s32 1, %s63
      $region27: #{encoder_forward.1} parent=20 // loop_footer_branch
        %62 = sbr.rel target = $region23
      $region28: #{encoder_forward.1} parent=20 // loop_exit
        _
    $region21: #{encoder_forward.1} parent=16 // pred_fallthru
      _
    // Predicated region
    $region29: #{encoder_forward.1} parent=16 // pred_check
      _
    $region30: #{encoder_forward.1} parent=16 // pred_check_branch
      %263 = sbr.rel target = $region32
    $region31: #{encoder_forward.1} parent=16 // pred_region
      _
    $region32: #{encoder_forward.1} parent=16 // pred_fallthru
      _
    // Predicated region
    $region33: #{encoder_forward.1} parent=16 // pred_check
      _
    $region34: #{encoder_forward.1} parent=16 // pred_check_branch
      %266 = sbr.rel (0) target = $region36
    $region35: #{encoder_forward.1} parent=16 // pred_region
      %267 = vsyncadd [#allocation3], 12288
    $region36: #{encoder_forward.1} parent=16 // pred_fallthru
      _
    %s268 = smul.u32 8, 2
    %s269 = smul.u32 %s268, 16
    %s270 = smul.u32 %s269, 3
    %s271 = sshll.u32 %s270, 4
    %272 = dma.done [#allocation3], %s271
    %273 = vst [vmem:[#allocation4] sm:$0x3] 0.0
    %274 = vst [vmem:[#allocation5] sm:$0x3] 0.0
  $region17: #{encoder_forward.1} parent=0 // pred_fallthru
    _
  %v275 = vld [vmem:[#allocation2] sm:$0xff]
  %v276 = vld [vmem:[#allocation2 + $0x8] sm:$0xff]
  %v277 = vld [vmem:[#allocation2 + $0x10] sm:$0xff]
  %v278 = vld [vmem:[#allocation2 + $0x18] sm:$0xff]
  %v279 = vld [vmem:[#allocation2 + $0x20] sm:$0xff]
  %v280 = vld [vmem:[#allocation2 + $0x28] sm:$0xff]
  %v281 = vld [vmem:[#allocation2 + $0x30] sm:$0xff]
  %v282 = vld [vmem:[#allocation2 + $0x38] sm:$0xff]
  %v283 = vld [vmem:[#allocation2 + $0x40] sm:$0xff]
  %v284 = vld [vmem:[#allocation2 + $0x48] sm:$0xff]
  %v285 = vld [vmem:[#allocation2 + $0x50] sm:$0xff]
  %v286 = vld [vmem:[#allocation2 + $0x58] sm:$0xff]
  %v287 = vld [vmem:[#allocation2 + $0x60] sm:$0xff]
  %v288 = vld [vmem:[#allocation2 + $0x68] sm:$0xff]
  %v289 = vld [vmem:[#allocation2 + $0x70] sm:$0xff]
  %v290 = vld [vmem:[#allocation2 + $0x78] sm:$0xff]
  %v291 = vld [vmem:[#allocation2 + $0x80] sm:$0xff]
  %v292 = vld [vmem:[#allocation2 + $0x88] sm:$0xff]
  %v293 = vld [vmem:[#allocation2 + $0x90] sm:$0xff]
  %v294 = vld [vmem:[#allocation2 + $0x98] sm:$0xff]
  %v295 = vld [vmem:[#allocation2 + $0xa0] sm:$0xff]
  %v296 = vld [vmem:[#allocation2 + $0xa8] sm:$0xff]
  %v297 = vld [vmem:[#allocation2 + $0xb0] sm:$0xff]
  %v298 = vld [vmem:[#allocation2 + $0xb8] sm:$0xff]
  %v299 = vld [vmem:[#allocation2 + $0xc0] sm:$0xff]
  %v300 = vld [vmem:[#allocation2 + $0xc8] sm:$0xff]
  %v301 = vld [vmem:[#allocation2 + $0xd0] sm:$0xff]
  %v302 = vld [vmem:[#allocation2 + $0xd8] sm:$0xff]
  %v303 = vld [vmem:[#allocation2 + $0xe0] sm:$0xff]
  %v304 = vld [vmem:[#allocation2 + $0xe8] sm:$0xff]
  %v305 = vld [vmem:[#allocation2 + $0xf0] sm:$0xff]
  %v306 = vld [vmem:[#allocation2 + $0xf8] sm:$0xff]
  %v307 = vld [vmem:[#allocation2 + $0x100] sm:$0xff]
  %v308 = vld [vmem:[#allocation2 + $0x108] sm:$0xff]
  %v309 = vld [vmem:[#allocation2 + $0x110] sm:$0xff]
  %v310 = vld [vmem:[#allocation2 + $0x118] sm:$0xff]
  %v311 = vld [vmem:[#allocation2 + $0x120] sm:$0xff]
  %v312 = vld [vmem:[#allocation2 + $0x128] sm:$0xff]
  %v313 = vld [vmem:[#allocation2 + $0x130] sm:$0xff]
  %v314 = vld [vmem:[#allocation2 + $0x138] sm:$0xff]
  %v315 = vld [vmem:[#allocation2 + $0x140] sm:$0xff]
  %v316 = vld [vmem:[#allocation2 + $0x148] sm:$0xff]
  %v317 = vld [vmem:[#allocation2 + $0x150] sm:$0xff]
  %v318 = vld [vmem:[#allocation2 + $0x158] sm:$0xff]
  %v319 = vld [vmem:[#allocation2 + $0x160] sm:$0xff]
  %v320 = vld [vmem:[#allocation2 + $0x168] sm:$0xff]
  %v321 = vld [vmem:[#allocation2 + $0x170] sm:$0xff]
  %v322 = vld [vmem:[#allocation2 + $0x178] sm:$0xff]
  %s323 = scalar_lea.vmem [#allocation2], 384
  %v324 = vld [vmem:[%s323] sm:$0xff]
  %v325 = vld [vmem:[%s323 + $0x8] sm:$0xff]
  %v326 = vld [vmem:[%s323 + $0x10] sm:$0xff]
  %v327 = vld [vmem:[%s323 + $0x18] sm:$0xff]
  %v328 = vld [vmem:[%s323 + $0x20] sm:$0xff]
  %v329 = vld [vmem:[%s323 + $0x28] sm:$0xff]
  %v330 = vld [vmem:[%s323 + $0x30] sm:$0xff]
  %v331 = vld [vmem:[%s323 + $0x38] sm:$0xff]
  %v332 = vld [vmem:[%s323 + $0x40] sm:$0xff]
  %v333 = vld [vmem:[%s323 + $0x48] sm:$0xff]
  %v334 = vld [vmem:[%s323 + $0x50] sm:$0xff]
  %v335 = vld [vmem:[%s323 + $0x58] sm:$0xff]
  %v336 = vld [vmem:[%s323 + $0x60] sm:$0xff]
  %v337 = vld [vmem:[%s323 + $0x68] sm:$0xff]
  %v338 = vld [vmem:[%s323 + $0x70] sm:$0xff]
  %v339 = vld [vmem:[%s323 + $0x78] sm:$0xff]
  %v340 = vld [vmem:[%s323 + $0x80] sm:$0xff]
  %v341 = vld [vmem:[%s323 + $0x88] sm:$0xff]
  %v342 = vld [vmem:[%s323 + $0x90] sm:$0xff]
  %v343 = vld [vmem:[%s323 + $0x98] sm:$0xff]
  %v344 = vld [vmem:[%s323 + $0xa0] sm:$0xff]
  %v345 = vld [vmem:[%s323 + $0xa8] sm:$0xff]
  %v346 = vld [vmem:[%s323 + $0xb0] sm:$0xff]
  %v347 = vld [vmem:[%s323 + $0xb8] sm:$0xff]
  %v348 = vld [vmem:[%s323 + $0xc0] sm:$0xff]
  %v349 = vld [vmem:[%s323 + $0xc8] sm:$0xff]
  %v350 = vld [vmem:[%s323 + $0xd0] sm:$0xff]
  %v351 = vld [vmem:[%s323 + $0xd8] sm:$0xff]
  %v352 = vld [vmem:[%s323 + $0xe0] sm:$0xff]
  %v353 = vld [vmem:[%s323 + $0xe8] sm:$0xff]
  %v354 = vld [vmem:[%s323 + $0xf0] sm:$0xff]
  %v355 = vld [vmem:[%s323 + $0xf8] sm:$0xff]
  %v356 = vld [vmem:[%s323 + $0x100] sm:$0xff]
  %v357 = vld [vmem:[%s323 + $0x108] sm:$0xff]
  %v358 = vld [vmem:[%s323 + $0x110] sm:$0xff]
  %v359 = vld [vmem:[%s323 + $0x118] sm:$0xff]
  %v360 = vld [vmem:[%s323 + $0x120] sm:$0xff]
  %v361 = vld [vmem:[%s323 + $0x128] sm:$0xff]
  %v362 = vld [vmem:[%s323 + $0x130] sm:$0xff]
  %v363 = vld [vmem:[%s323 + $0x138] sm:$0xff]
  %v364 = vld [vmem:[%s323 + $0x140] sm:$0xff]
  %v365 = vld [vmem:[%s323 + $0x148] sm:$0xff]
  %v366 = vld [vmem:[%s323 + $0x150] sm:$0xff]
  %v367 = vld [vmem:[%s323 + $0x158] sm:$0xff]
  %v368 = vld [vmem:[%s323 + $0x160] sm:$0xff]
  %v369 = vld [vmem:[%s323 + $0x168] sm:$0xff]
  %v370 = vld [vmem:[%s323 + $0x170] sm:$0xff]
  %v371 = vld [vmem:[%s323 + $0x178] sm:$0xff]
  %v372 = vld [vmem:[%s2] sm:$0x3]
  %s373 = scalar_lea.vmem %s2, 2
  %v374 = vld [vmem:[%s373] sm:$0x3]
  %v375 = vld [vmem:[#allocation4] sm:$0x3]
  %v376 = vld [vmem:[#allocation5] sm:$0x3]
  %v377 = vld [vmem:[%s0] sm:$0x3f]
  %378 = vmatpush.msra.mxu0 %v320
  %379 = vmatpush.msra.mxu0 %v317
  %380 = vmatpush.msra.mxu0 %v314
  %381 = vmatpush.msra.mxu0 %v311
  %382 = vmatpush.msra.mxu0 %v308
  %383 = vmatpush.msra.mxu0 %v305
  %384 = vmatpush.msra.mxu0 %v302
  %385 = vmatpush.msra.mxu0 %v299
  %386 = vmatpush.msra.mxu0 %v296
  %387 = vmatpush.msra.mxu0 %v293
  %388 = vmatpush.msra.mxu0 %v290
  %389 = vmatpush.msra.mxu0 %v287
  %390 = vmatpush.msra.mxu0 %v284
  %391 = vmatpush.msra.mxu0 %v281
  %392 = vmatpush.msra.mxu0 %v278
  %393 = vmatpush.msra.mxu0 %v275
  %394 = vmatmul.f32.gmra.mxu0 %v375
  %v395 = vpop.f32.mrf.mxu0
  %v396 = vadd.f32 0.0, %v395
  %397 = vdwg.mxu0
  %398 = vmatpush.msra.mxu0 %v321
  %399 = vmatpush.msra.mxu0 %v318
  %400 = vmatpush.msra.mxu0 %v315
  %401 = vmatpush.msra.mxu0 %v312
  %402 = vmatpush.msra.mxu0 %v309
  %403 = vmatpush.msra.mxu0 %v306
  %404 = vmatpush.msra.mxu0 %v303
  %405 = vmatpush.msra.mxu0 %v300
  %406 = vmatpush.msra.mxu0 %v297
  %407 = vmatpush.msra.mxu0 %v294
  %408 = vmatpush.msra.mxu0 %v291
  %409 = vmatpush.msra.mxu0 %v288
  %410 = vmatpush.msra.mxu0 %v285
  %411 = vmatpush.msra.mxu0 %v282
  %412 = vmatpush.msra.mxu0 %v279
  %413 = vmatpush.msra.mxu0 %v276
  %414 = vmatmul.f32.gmra.mxu0 %v375
  %v415 = vpop.f32.mrf.mxu0
  %v416 = vadd.f32 0.0, %v415
  %417 = vdwg.mxu0
  %418 = vmatpush.msra.mxu0 %v322
  %419 = vmatpush.msra.mxu0 %v319
  %420 = vmatpush.msra.mxu0 %v316
  %421 = vmatpush.msra.mxu0 %v313
  %422 = vmatpush.msra.mxu0 %v310
  %423 = vmatpush.msra.mxu0 %v307
  %424 = vmatpush.msra.mxu0 %v304
  %425 = vmatpush.msra.mxu0 %v301
  %426 = vmatpush.msra.mxu0 %v298
  %427 = vmatpush.msra.mxu0 %v295
  %428 = vmatpush.msra.mxu0 %v292
  %429 = vmatpush.msra.mxu0 %v289
  %430 = vmatpush.msra.mxu0 %v286
  %431 = vmatpush.msra.mxu0 %v283
  %432 = vmatpush.msra.mxu0 %v280
  %433 = vmatpush.msra.mxu0 %v277
  %434 = vmatmul.f32.gmra.mxu0 %v375
  %v435 = vpop.f32.mrf.mxu0
  %v436 = vadd.f32 0.0, %v435
  %437 = vdwg.mxu0
  %v438 = vadd.f32 %v377, %v396
  %v439 = vmul.f32 %v438, 0.5
  %v440 = vtanh.pop %v439
  %v441 = vadd.f32 %v440, 1.0
  %v442 = vmul.f32 %v441, 0.5
  %v444 = vrot.slane %v377, 2
  %v446 = vadd.f32 %v444, %v416
  %v447 = vmul.f32 %v446, 0.5
  %v448 = vtanh.pop %v447
  %v449 = vadd.f32 %v448, 1.0
  %v450 = vmul.f32 %v449, 0.5
  %v451 = vadd.f32 %v436, %v372
  %v452 = vmul.f32 %v442, %v451
  %v453 = vrot.slane %v377, 4
  %v455 = vadd.f32 %v453, %v452
  %v456 = vtanh.pop %v455
  %v457 = vsub.f32 1.0, %v450
  %v458 = vmul.f32 %v457, %v456
  %v459 = vmul.f32 %v450, %v375
  %v460 = vadd.f32 %v458, %v459
  %461 = vst [vmem:[%s4] sm:$0x3] %v460
  %s462 = scalar_lea.vmem %s45, 42
  %v463 = vld [vmem:[%s462] sm:$0x3f]
  %464 = vmatpush.msra.mxu0 %v369
  %465 = vmatpush.msra.mxu0 %v366
  %466 = vmatpush.msra.mxu0 %v363
  %467 = vmatpush.msra.mxu0 %v360
  %468 = vmatpush.msra.mxu0 %v357
  %469 = vmatpush.msra.mxu0 %v354
  %470 = vmatpush.msra.mxu0 %v351
  %471 = vmatpush.msra.mxu0 %v348
  %472 = vmatpush.msra.mxu0 %v345
  %473 = vmatpush.msra.mxu0 %v342
  %474 = vmatpush.msra.mxu0 %v339
  %475 = vmatpush.msra.mxu0 %v336
  %476 = vmatpush.msra.mxu0 %v333
  %477 = vmatpush.msra.mxu0 %v330
  %478 = vmatpush.msra.mxu0 %v327
  %479 = vmatpush.msra.mxu0 %v324
  %480 = vmatmul.f32.gmra.mxu0 %v376
  %v481 = vpop.f32.mrf.mxu0
  %v482 = vadd.f32 0.0, %v481
  %483 = vdwg.mxu0
  %484 = vmatpush.msra.mxu0 %v370
  %485 = vmatpush.msra.mxu0 %v367
  %486 = vmatpush.msra.mxu0 %v364
  %487 = vmatpush.msra.mxu0 %v361
  %488 = vmatpush.msra.mxu0 %v358
  %489 = vmatpush.msra.mxu0 %v355
  %490 = vmatpush.msra.mxu0 %v352
  %491 = vmatpush.msra.mxu0 %v349
  %492 = vmatpush.msra.mxu0 %v346
  %493 = vmatpush.msra.mxu0 %v343
  %494 = vmatpush.msra.mxu0 %v340
  %495 = vmatpush.msra.mxu0 %v337
  %496 = vmatpush.msra.mxu0 %v334
  %497 = vmatpush.msra.mxu0 %v331
  %498 = vmatpush.msra.mxu0 %v328
  %499 = vmatpush.msra.mxu0 %v325
  %500 = vmatmul.f32.gmra.mxu0 %v376
  %v501 = vpop.f32.mrf.mxu0
  %v502 = vadd.f32 0.0, %v501
  %503 = vdwg.mxu0
  %504 = vmatpush.msra.mxu0 %v371
  %505 = vmatpush.msra.mxu0 %v368
  %506 = vmatpush.msra.mxu0 %v365
  %507 = vmatpush.msra.mxu0 %v362
  %508 = vmatpush.msra.mxu0 %v359
  %509 = vmatpush.msra.mxu0 %v356
  %510 = vmatpush.msra.mxu0 %v353
  %511 = vmatpush.msra.mxu0 %v350
  %512 = vmatpush.msra.mxu0 %v347
  %513 = vmatpush.msra.mxu0 %v344
  %514 = vmatpush.msra.mxu0 %v341
  %515 = vmatpush.msra.mxu0 %v338
  %516 = vmatpush.msra.mxu0 %v335
  %517 = vmatpush.msra.mxu0 %v332
  %518 = vmatpush.msra.mxu0 %v329
  %519 = vmatpush.msra.mxu0 %v326
  %520 = vmatmul.f32.gmra.mxu0 %v376
  %v521 = vpop.f32.mrf.mxu0
  %v522 = vadd.f32 0.0, %v521
  %523 = vdwg.mxu0
  %v524 = vadd.f32 %v463, %v482
  %v525 = vmul.f32 %v524, 0.5
  %v526 = vtanh.pop %v525
  %v527 = vadd.f32 %v526, 1.0
  %v528 = vmul.f32 %v527, 0.5
  %v530 = vrot.slane %v463, 2
  %v532 = vadd.f32 %v530, %v502
  %v533 = vmul.f32 %v532, 0.5
  %v534 = vtanh.pop %v533
  %v535 = vadd.f32 %v534, 1.0
  %v536 = vmul.f32 %v535, 0.5
  %v537 = vadd.f32 %v522, %v374
  %v538 = vmul.f32 %v528, %v537
  %v539 = vrot.slane %v463, 4
  %v541 = vadd.f32 %v539, %v538
  %v542 = vtanh.pop %v541
  %v543 = vsub.f32 1.0, %v536
  %v544 = vmul.f32 %v543, %v542
  %v545 = vmul.f32 %v536, %v376
  %v546 = vadd.f32 %v544, %v545
  %s547 = scalar_lea.vmem %s53, 14
  %548 = vst [vmem:[%s547] sm:$0x3] %v546
  %s549 = scalar_lea.vmem %s0, 6
  %v550 = vld [vmem:[%s549] sm:$0x3f]
  %551 = vmatpush.msra.mxu0 %v320
  %552 = vmatpush.msra.mxu0 %v317
  %553 = vmatpush.msra.mxu0 %v314
  %554 = vmatpush.msra.mxu0 %v311
  %555 = vmatpush.msra.mxu0 %v308
  %556 = vmatpush.msra.mxu0 %v305
  %557 = vmatpush.msra.mxu0 %v302
  %558 = vmatpush.msra.mxu0 %v299
  %559 = vmatpush.msra.mxu0 %v296
  %560 = vmatpush.msra.mxu0 %v293
  %561 = vmatpush.msra.mxu0 %v290
  %562 = vmatpush.msra.mxu0 %v287
  %563 = vmatpush.msra.mxu0 %v284
  %564 = vmatpush.msra.mxu0 %v281
  %565 = vmatpush.msra.mxu0 %v278
  %566 = vmatpush.msra.mxu0 %v275
  %567 = vmatmul.f32.gmra.mxu0 %v460
  %v568 = vpop.f32.mrf.mxu0
  %v569 = vadd.f32 0.0, %v568
  %570 = vdwg.mxu0
  %571 = vmatpush.msra.mxu0 %v321
  %572 = vmatpush.msra.mxu0 %v318
  %573 = vmatpush.msra.mxu0 %v315
  %574 = vmatpush.msra.mxu0 %v312
  %575 = vmatpush.msra.mxu0 %v309
  %576 = vmatpush.msra.mxu0 %v306
  %577 = vmatpush.msra.mxu0 %v303
  %578 = vmatpush.msra.mxu0 %v300
  %579 = vmatpush.msra.mxu0 %v297
  %580 = vmatpush.msra.mxu0 %v294
  %581 = vmatpush.msra.mxu0 %v291
  %582 = vmatpush.msra.mxu0 %v288
  %583 = vmatpush.msra.mxu0 %v285
  %584 = vmatpush.msra.mxu0 %v282
  %585 = vmatpush.msra.mxu0 %v279
  %586 = vmatpush.msra.mxu0 %v276
  %587 = vmatmul.f32.gmra.mxu0 %v460
  %v588 = vpop.f32.mrf.mxu0
  %v589 = vadd.f32 0.0, %v588
  %590 = vdwg.mxu0
  %591 = vmatpush.msra.mxu0 %v322
  %592 = vmatpush.msra.mxu0 %v319
  %593 = vmatpush.msra.mxu0 %v316
  %594 = vmatpush.msra.mxu0 %v313
  %595 = vmatpush.msra.mxu0 %v310
  %596 = vmatpush.msra.mxu0 %v307
  %597 = vmatpush.msra.mxu0 %v304
  %598 = vmatpush.msra.mxu0 %v301
  %599 = vmatpush.msra.mxu0 %v298
  %600 = vmatpush.msra.mxu0 %v295
  %601 = vmatpush.msra.mxu0 %v292
  %602 = vmatpush.msra.mxu0 %v289
  %603 = vmatpush.msra.mxu0 %v286
  %604 = vmatpush.msra.mxu0 %v283
  %605 = vmatpush.msra.mxu0 %v280
  %606 = vmatpush.msra.mxu0 %v277
  %607 = vmatmul.f32.gmra.mxu0 %v460
  %v608 = vpop.f32.mrf.mxu0
  %v609 = vadd.f32 0.0, %v608
  %610 = vdwg.mxu0
  %v611 = vadd.f32 %v550, %v569
  %v612 = vmul.f32 %v611, 0.5
  %v613 = vtanh.pop %v612
  %v614 = vadd.f32 %v613, 1.0
  %v615 = vmul.f32 %v614, 0.5
  %v617 = vrot.slane %v550, 2
  %v619 = vadd.f32 %v617, %v589
  %v620 = vmul.f32 %v619, 0.5
  %v621 = vtanh.pop %v620
  %v622 = vadd.f32 %v621, 1.0
  %v623 = vmul.f32 %v622, 0.5
  %v624 = vadd.f32 %v609, %v372
  %v625 = vmul.f32 %v615, %v624
  %v626 = vrot.slane %v550, 4
  %v628 = vadd.f32 %v626, %v625
  %v629 = vtanh.pop %v628
  %v630 = vsub.f32 1.0, %v623
  %v631 = vmul.f32 %v630, %v629
  %v632 = vmul.f32 %v623, %v460
  %v633 = vadd.f32 %v631, %v632
  %s634 = scalar_lea.vmem %s4, 2
  %635 = vst [vmem:[%s634] sm:$0x3] %v633
  %s636 = scalar_lea.vmem %s45, 36
  %v637 = vld [vmem:[%s636] sm:$0x3f]
  %638 = vmatpush.msra.mxu0 %v369
  %639 = vmatpush.msra.mxu0 %v366
  %640 = vmatpush.msra.mxu0 %v363
  %641 = vmatpush.msra.mxu0 %v360
  %642 = vmatpush.msra.mxu0 %v357
  %643 = vmatpush.msra.mxu0 %v354
  %644 = vmatpush.msra.mxu0 %v351
  %645 = vmatpush.msra.mxu0 %v348
  %646 = vmatpush.msra.mxu0 %v345
  %647 = vmatpush.msra.mxu0 %v342
  %648 = vmatpush.msra.mxu0 %v339
  %649 = vmatpush.msra.mxu0 %v336
  %650 = vmatpush.msra.mxu0 %v333
  %651 = vmatpush.msra.mxu0 %v330
  %652 = vmatpush.msra.mxu0 %v327
  %653 = vmatpush.msra.mxu0 %v324
  %654 = vmatmul.f32.gmra.mxu0 %v546
  %v655 = vpop.f32.mrf.mxu0
  %v656 = vadd.f32 0.0, %v655
  %657 = vdwg.mxu0
  %658 = vmatpush.msra.mxu0 %v370
  %659 = vmatpush.msra.mxu0 %v367
  %660 = vmatpush.msra.mxu0 %v364
  %661 = vmatpush.msra.mxu0 %v361
  %662 = vmatpush.msra.mxu0 %v358
  %663 = vmatpush.msra.mxu0 %v355
  %664 = vmatpush.msra.mxu0 %v352
  %665 = vmatpush.msra.mxu0 %v349
  %666 = vmatpush.msra.mxu0 %v346
  %667 = vmatpush.msra.mxu0 %v343
  %668 = vmatpush.msra.mxu0 %v340
  %669 = vmatpush.msra.mxu0 %v337
  %670 = vmatpush.msra.mxu0 %v334
  %671 = vmatpush.msra.mxu0 %v331
  %672 = vmatpush.msra.mxu0 %v328
  %673 = vmatpush.msra.mxu0 %v325
  %674 = vmatmul.f32.gmra.mxu0 %v546
  %v675 = vpop.f32.mrf.mxu0
  %v676 = vadd.f32 0.0, %v675
  %677 = vdwg.mxu0
  %678 = vmatpush.msra.mxu0 %v371
  %679 = vmatpush.msra.mxu0 %v368
  %680 = vmatpush.msra.mxu0 %v365
  %681 = vmatpush.msra.mxu0 %v362
  %682 = vmatpush.msra.mxu0 %v359
  %683 = vmatpush.msra.mxu0 %v356
  %684 = vmatpush.msra.mxu0 %v353
  %685 = vmatpush.msra.mxu0 %v350
  %686 = vmatpush.msra.mxu0 %v347
  %687 = vmatpush.msra.mxu0 %v344
  %688 = vmatpush.msra.mxu0 %v341
  %689 = vmatpush.msra.mxu0 %v338
  %690 = vmatpush.msra.mxu0 %v335
  %691 = vmatpush.msra.mxu0 %v332
  %692 = vmatpush.msra.mxu0 %v329
  %693 = vmatpush.msra.mxu0 %v326
  %694 = vmatmul.f32.gmra.mxu0 %v546
  %v695 = vpop.f32.mrf.mxu0
  %v696 = vadd.f32 0.0, %v695
  %697 = vdwg.mxu0
  %v698 = vadd.f32 %v637, %v656
  %v699 = vmul.f32 %v698, 0.5
  %v700 = vtanh.pop %v699
  %v701 = vadd.f32 %v700, 1.0
  %v702 = vmul.f32 %v701, 0.5
  %v704 = vrot.slane %v637, 2
  %v706 = vadd.f32 %v704, %v676
  %v707 = vmul.f32 %v706, 0.5
  %v708 = vtanh.pop %v707
  %v709 = vadd.f32 %v708, 1.0
  %v710 = vmul.f32 %v709, 0.5
  %v711 = vadd.f32 %v696, %v374
  %v712 = vmul.f32 %v702, %v711
  %v713 = vrot.slane %v637, 4
  %v715 = vadd.f32 %v713, %v712
  %v716 = vtanh.pop %v715
  %v717 = vsub.f32 1.0, %v710
  %v718 = vmul.f32 %v717, %v716
  %v719 = vmul.f32 %v710, %v546
  %v720 = vadd.f32 %v718, %v719
  %s721 = scalar_lea.vmem %s53, 12
  %722 = vst [vmem:[%s721] sm:$0x3] %v720
  %s723 = scalar_lea.vmem %s0, 12
  %v724 = vld [vmem:[%s723] sm:$0x3f]
  %725 = vmatpush.msra.mxu0 %v320
  %726 = vmatpush.msra.mxu0 %v317
  %727 = vmatpush.msra.mxu0 %v314
  %728 = vmatpush.msra.mxu0 %v311
  %729 = vmatpush.msra.mxu0 %v308
  %730 = vmatpush.msra.mxu0 %v305
  %731 = vmatpush.msra.mxu0 %v302
  %732 = vmatpush.msra.mxu0 %v299
  %733 = vmatpush.msra.mxu0 %v296
  %734 = vmatpush.msra.mxu0 %v293
  %735 = vmatpush.msra.mxu0 %v290
  %736 = vmatpush.msra.mxu0 %v287
  %737 = vmatpush.msra.mxu0 %v284
  %738 = vmatpush.msra.mxu0 %v281
  %739 = vmatpush.msra.mxu0 %v278
  %740 = vmatpush.msra.mxu0 %v275
  %741 = vmatmul.f32.gmra.mxu0 %v633
  %v742 = vpop.f32.mrf.mxu0
  %v743 = vadd.f32 0.0, %v742
  %744 = vdwg.mxu0
  %745 = vmatpush.msra.mxu0 %v321
  %746 = vmatpush.msra.mxu0 %v318
  %747 = vmatpush.msra.mxu0 %v315
  %748 = vmatpush.msra.mxu0 %v312
  %749 = vmatpush.msra.mxu0 %v309
  %750 = vmatpush.msra.mxu0 %v306
  %751 = vmatpush.msra.mxu0 %v303
  %752 = vmatpush.msra.mxu0 %v300
  %753 = vmatpush.msra.mxu0 %v297
  %754 = vmatpush.msra.mxu0 %v294
  %755 = vmatpush.msra.mxu0 %v291
  %756 = vmatpush.msra.mxu0 %v288
  %757 = vmatpush.msra.mxu0 %v285
  %758 = vmatpush.msra.mxu0 %v282
  %759 = vmatpush.msra.mxu0 %v279
  %760 = vmatpush.msra.mxu0 %v276
  %761 = vmatmul.f32.gmra.mxu0 %v633
  %v762 = vpop.f32.mrf.mxu0
  %v763 = vadd.f32 0.0, %v762
  %764 = vdwg.mxu0
  %765 = vmatpush.msra.mxu0 %v322
  %766 = vmatpush.msra.mxu0 %v319
  %767 = vmatpush.msra.mxu0 %v316
  %768 = vmatpush.msra.mxu0 %v313
  %769 = vmatpush.msra.mxu0 %v310
  %770 = vmatpush.msra.mxu0 %v307
  %771 = vmatpush.msra.mxu0 %v304
  %772 = vmatpush.msra.mxu0 %v301
  %773 = vmatpush.msra.mxu0 %v298
  %774 = vmatpush.msra.mxu0 %v295
  %775 = vmatpush.msra.mxu0 %v292
  %776 = vmatpush.msra.mxu0 %v289
  %777 = vmatpush.msra.mxu0 %v286
  %778 = vmatpush.msra.mxu0 %v283
  %779 = vmatpush.msra.mxu0 %v280
  %780 = vmatpush.msra.mxu0 %v277
  %781 = vmatmul.f32.gmra.mxu0 %v633
  %v782 = vpop.f32.mrf.mxu0
  %v783 = vadd.f32 0.0, %v782
  %784 = vdwg.mxu0
  %v785 = vadd.f32 %v724, %v743
  %v786 = vmul.f32 %v785, 0.5
  %v787 = vtanh.pop %v786
  %v788 = vadd.f32 %v787, 1.0
  %v789 = vmul.f32 %v788, 0.5
  %v791 = vrot.slane %v724, 2
  %v793 = vadd.f32 %v791, %v763
  %v794 = vmul.f32 %v793, 0.5
  %v795 = vtanh.pop %v794
  %v796 = vadd.f32 %v795, 1.0
  %v797 = vmul.f32 %v796, 0.5
  %v798 = vadd.f32 %v783, %v372
  %v799 = vmul.f32 %v789, %v798
  %v800 = vrot.slane %v724, 4
  %v802 = vadd.f32 %v800, %v799
  %v803 = vtanh.pop %v802
  %v804 = vsub.f32 1.0, %v797
  %v805 = vmul.f32 %v804, %v803
  %v806 = vmul.f32 %v797, %v633
  %v807 = vadd.f32 %v805, %v806
  %s808 = scalar_lea.vmem %s4, 4
  %809 = vst [vmem:[%s808] sm:$0x3] %v807
  %s810 = scalar_lea.vmem %s45, 30
  %v811 = vld [vmem:[%s810] sm:$0x3f]
  %812 = vmatpush.msra.mxu0 %v369
  %813 = vmatpush.msra.mxu0 %v366
  %814 = vmatpush.msra.mxu0 %v363
  %815 = vmatpush.msra.mxu0 %v360
  %816 = vmatpush.msra.mxu0 %v357
  %817 = vmatpush.msra.mxu0 %v354
  %818 = vmatpush.msra.mxu0 %v351
  %819 = vmatpush.msra.mxu0 %v348
  %820 = vmatpush.msra.mxu0 %v345
  %821 = vmatpush.msra.mxu0 %v342
  %822 = vmatpush.msra.mxu0 %v339
  %823 = vmatpush.msra.mxu0 %v336
  %824 = vmatpush.msra.mxu0 %v333
  %825 = vmatpush.msra.mxu0 %v330
  %826 = vmatpush.msra.mxu0 %v327
  %827 = vmatpush.msra.mxu0 %v324
  %828 = vmatmul.f32.gmra.mxu0 %v720
  %v829 = vpop.f32.mrf.mxu0
  %v830 = vadd.f32 0.0, %v829
  %831 = vdwg.mxu0
  %832 = vmatpush.msra.mxu0 %v370
  %833 = vmatpush.msra.mxu0 %v367
  %834 = vmatpush.msra.mxu0 %v364
  %835 = vmatpush.msra.mxu0 %v361
  %836 = vmatpush.msra.mxu0 %v358
  %837 = vmatpush.msra.mxu0 %v355
  %838 = vmatpush.msra.mxu0 %v352
  %839 = vmatpush.msra.mxu0 %v349
  %840 = vmatpush.msra.mxu0 %v346
  %841 = vmatpush.msra.mxu0 %v343
  %842 = vmatpush.msra.mxu0 %v340
  %843 = vmatpush.msra.mxu0 %v337
  %844 = vmatpush.msra.mxu0 %v334
  %845 = vmatpush.msra.mxu0 %v331
  %846 = vmatpush.msra.mxu0 %v328
  %847 = vmatpush.msra.mxu0 %v325
  %848 = vmatmul.f32.gmra.mxu0 %v720
  %v849 = vpop.f32.mrf.mxu0
  %v850 = vadd.f32 0.0, %v849
  %851 = vdwg.mxu0
  %852 = vmatpush.msra.mxu0 %v371
  %853 = vmatpush.msra.mxu0 %v368
  %854 = vmatpush.msra.mxu0 %v365
  %855 = vmatpush.msra.mxu0 %v362
  %856 = vmatpush.msra.mxu0 %v359
  %857 = vmatpush.msra.mxu0 %v356
  %858 = vmatpush.msra.mxu0 %v353
  %859 = vmatpush.msra.mxu0 %v350
  %860 = vmatpush.msra.mxu0 %v347
  %861 = vmatpush.msra.mxu0 %v344
  %862 = vmatpush.msra.mxu0 %v341
  %863 = vmatpush.msra.mxu0 %v338
  %864 = vmatpush.msra.mxu0 %v335
  %865 = vmatpush.msra.mxu0 %v332
  %866 = vmatpush.msra.mxu0 %v329
  %867 = vmatpush.msra.mxu0 %v326
  %868 = vmatmul.f32.gmra.mxu0 %v720
  %v869 = vpop.f32.mrf.mxu0
  %v870 = vadd.f32 0.0, %v869
  %871 = vdwg.mxu0
  %v872 = vadd.f32 %v811, %v830
  %v873 = vmul.f32 %v872, 0.5
  %v874 = vtanh.pop %v873
  %v875 = vadd.f32 %v874, 1.0
  %v876 = vmul.f32 %v875, 0.5
  %v878 = vrot.slane %v811, 2
  %v880 = vadd.f32 %v878, %v850
  %v881 = vmul.f32 %v880, 0.5
  %v882 = vtanh.pop %v881
  %v883 = vadd.f32 %v882, 1.0
  %v884 = vmul.f32 %v883, 0.5
  %v885 = vadd.f32 %v870, %v374
  %v886 = vmul.f32 %v876, %v885
  %v887 = vrot.slane %v811, 4
  %v889 = vadd.f32 %v887, %v886
  %v890 = vtanh.pop %v889
  %v891 = vsub.f32 1.0, %v884
  %v892 = vmul.f32 %v891, %v890
  %v893 = vmul.f32 %v884, %v720
  %v894 = vadd.f32 %v892, %v893
  %s895 = scalar_lea.vmem %s53, 10
  %896 = vst [vmem:[%s895] sm:$0x3] %v894
  %s897 = scalar_lea.vmem %s0, 18
  %v898 = vld [vmem:[%s897] sm:$0x3f]
  %899 = vmatpush.msra.mxu0 %v320
  %900 = vmatpush.msra.mxu0 %v317
  %901 = vmatpush.msra.mxu0 %v314
  %902 = vmatpush.msra.mxu0 %v311
  %903 = vmatpush.msra.mxu0 %v308
  %904 = vmatpush.msra.mxu0 %v305
  %905 = vmatpush.msra.mxu0 %v302
  %906 = vmatpush.msra.mxu0 %v299
  %907 = vmatpush.msra.mxu0 %v296
  %908 = vmatpush.msra.mxu0 %v293
  %909 = vmatpush.msra.mxu0 %v290
  %910 = vmatpush.msra.mxu0 %v287
  %911 = vmatpush.msra.mxu0 %v284
  %912 = vmatpush.msra.mxu0 %v281
  %913 = vmatpush.msra.mxu0 %v278
  %914 = vmatpush.msra.mxu0 %v275
  %915 = vmatmul.f32.gmra.mxu0 %v807
  %v916 = vpop.f32.mrf.mxu0
  %v917 = vadd.f32 0.0, %v916
  %918 = vdwg.mxu0
  %919 = vmatpush.msra.mxu0 %v321
  %920 = vmatpush.msra.mxu0 %v318
  %921 = vmatpush.msra.mxu0 %v315
  %922 = vmatpush.msra.mxu0 %v312
  %923 = vmatpush.msra.mxu0 %v309
  %924 = vmatpush.msra.mxu0 %v306
  %925 = vmatpush.msra.mxu0 %v303
  %926 = vmatpush.msra.mxu0 %v300
  %927 = vmatpush.msra.mxu0 %v297
  %928 = vmatpush.msra.mxu0 %v294
  %929 = vmatpush.msra.mxu0 %v291
  %930 = vmatpush.msra.mxu0 %v288
  %931 = vmatpush.msra.mxu0 %v285
  %932 = vmatpush.msra.mxu0 %v282
  %933 = vmatpush.msra.mxu0 %v279
  %934 = vmatpush.msra.mxu0 %v276
  %935 = vmatmul.f32.gmra.mxu0 %v807
  %v936 = vpop.f32.mrf.mxu0
  %v937 = vadd.f32 0.0, %v936
  %938 = vdwg.mxu0
  %939 = vmatpush.msra.mxu0 %v322
  %940 = vmatpush.msra.mxu0 %v319
  %941 = vmatpush.msra.mxu0 %v316
  %942 = vmatpush.msra.mxu0 %v313
  %943 = vmatpush.msra.mxu0 %v310
  %944 = vmatpush.msra.mxu0 %v307
  %945 = vmatpush.msra.mxu0 %v304
  %946 = vmatpush.msra.mxu0 %v301
  %947 = vmatpush.msra.mxu0 %v298
  %948 = vmatpush.msra.mxu0 %v295
  %949 = vmatpush.msra.mxu0 %v292
  %950 = vmatpush.msra.mxu0 %v289
  %951 = vmatpush.msra.mxu0 %v286
  %952 = vmatpush.msra.mxu0 %v283
  %953 = vmatpush.msra.mxu0 %v280
  %954 = vmatpush.msra.mxu0 %v277
  %955 = vmatmul.f32.gmra.mxu0 %v807
  %v956 = vpop.f32.mrf.mxu0
  %v957 = vadd.f32 0.0, %v956
  %958 = vdwg.mxu0
  %v959 = vadd.f32 %v898, %v917
  %v960 = vmul.f32 %v959, 0.5
  %v961 = vtanh.pop %v960
  %v962 = vadd.f32 %v961, 1.0
  %v963 = vmul.f32 %v962, 0.5
  %v965 = vrot.slane %v898, 2
  %v967 = vadd.f32 %v965, %v937
  %v968 = vmul.f32 %v967, 0.5
  %v969 = vtanh.pop %v968
  %v970 = vadd.f32 %v969, 1.0
  %v971 = vmul.f32 %v970, 0.5
  %v972 = vadd.f32 %v957, %v372
  %v973 = vmul.f32 %v963, %v972
  %v974 = vrot.slane %v898, 4
  %v976 = vadd.f32 %v974, %v973
  %v977 = vtanh.pop %v976
  %v978 = vsub.f32 1.0, %v971
  %v979 = vmul.f32 %v978, %v977
  %v980 = vmul.f32 %v971, %v807
  %v981 = vadd.f32 %v979, %v980
  %s982 = scalar_lea.vmem %s4, 6
  %983 = vst [vmem:[%s982] sm:$0x3] %v981
  %s984 = scalar_lea.vmem %s45, 24
  %v985 = vld [vmem:[%s984] sm:$0x3f]
  %986 = vmatpush.msra.mxu0 %v369
  %987 = vmatpush.msra.mxu0 %v366
  %988 = vmatpush.msra.mxu0 %v363
  %989 = vmatpush.msra.mxu0 %v360
  %990 = vmatpush.msra.mxu0 %v357
  %991 = vmatpush.msra.mxu0 %v354
  %992 = vmatpush.msra.mxu0 %v351
  %993 = vmatpush.msra.mxu0 %v348
  %994 = vmatpush.msra.mxu0 %v345
  %995 = vmatpush.msra.mxu0 %v342
  %996 = vmatpush.msra.mxu0 %v339
  %997 = vmatpush.msra.mxu0 %v336
  %998 = vmatpush.msra.mxu0 %v333
  %999 = vmatpush.msra.mxu0 %v330
  %1000 = vmatpush.msra.mxu0 %v327
  %1001 = vmatpush.msra.mxu0 %v324
  %1002 = vmatmul.f32.gmra.mxu0 %v894
  %v1003 = vpop.f32.mrf.mxu0
  %v1004 = vadd.f32 0.0, %v1003
  %1005 = vdwg.mxu0
  %1006 = vmatpush.msra.mxu0 %v370
  %1007 = vmatpush.msra.mxu0 %v367
  %1008 = vmatpush.msra.mxu0 %v364
  %1009 = vmatpush.msra.mxu0 %v361
  %1010 = vmatpush.msra.mxu0 %v358
  %1011 = vmatpush.msra.mxu0 %v355
  %1012 = vmatpush.msra.mxu0 %v352
  %1013 = vmatpush.msra.mxu0 %v349
  %1014 = vmatpush.msra.mxu0 %v346
  %1015 = vmatpush.msra.mxu0 %v343
  %1016 = vmatpush.msra.mxu0 %v340
  %1017 = vmatpush.msra.mxu0 %v337
  %1018 = vmatpush.msra.mxu0 %v334
  %1019 = vmatpush.msra.mxu0 %v331
  %1020 = vmatpush.msra.mxu0 %v328
  %1021 = vmatpush.msra.mxu0 %v325
  %1022 = vmatmul.f32.gmra.mxu0 %v894
  %v1023 = vpop.f32.mrf.mxu0
  %v1024 = vadd.f32 0.0, %v1023
  %1025 = vdwg.mxu0
  %1026 = vmatpush.msra.mxu0 %v371
  %1027 = vmatpush.msra.mxu0 %v368
  %1028 = vmatpush.msra.mxu0 %v365
  %1029 = vmatpush.msra.mxu0 %v362
  %1030 = vmatpush.msra.mxu0 %v359
  %1031 = vmatpush.msra.mxu0 %v356
  %1032 = vmatpush.msra.mxu0 %v353
  %1033 = vmatpush.msra.mxu0 %v350
  %1034 = vmatpush.msra.mxu0 %v347
  %1035 = vmatpush.msra.mxu0 %v344
  %1036 = vmatpush.msra.mxu0 %v341
  %1037 = vmatpush.msra.mxu0 %v338
  %1038 = vmatpush.msra.mxu0 %v335
  %1039 = vmatpush.msra.mxu0 %v332
  %1040 = vmatpush.msra.mxu0 %v329
  %1041 = vmatpush.msra.mxu0 %v326
  %1042 = vmatmul.f32.gmra.mxu0 %v894
  %v1043 = vpop.f32.mrf.mxu0
  %v1044 = vadd.f32 0.0, %v1043
  %1045 = vdwg.mxu0
  %v1046 = vadd.f32 %v985, %v1004
  %v1047 = vmul.f32 %v1046, 0.5
  %v1048 = vtanh.pop %v1047
  %v1049 = vadd.f32 %v1048, 1.0
  %v1050 = vmul.f32 %v1049, 0.5
  %v1052 = vrot.slane %v985, 2
  %v1054 = vadd.f32 %v1052, %v1024
  %v1055 = vmul.f32 %v1054, 0.5
  %v1056 = vtanh.pop %v1055
  %v1057 = vadd.f32 %v1056, 1.0
  %v1058 = vmul.f32 %v1057, 0.5
  %v1059 = vadd.f32 %v1044, %v374
  %v1060 = vmul.f32 %v1050, %v1059
  %v1061 = vrot.slane %v985, 4
  %v1063 = vadd.f32 %v1061, %v1060
  %v1064 = vtanh.pop %v1063
  %v1065 = vsub.f32 1.0, %v1058
  %v1066 = vmul.f32 %v1065, %v1064
  %v1067 = vmul.f32 %v1058, %v894
  %v1068 = vadd.f32 %v1066, %v1067
  %s1069 = scalar_lea.vmem %s53, 8
  %1070 = vst [vmem:[%s1069] sm:$0x3] %v1068
  %s1071 = scalar_lea.vmem %s0, 24
  %v1072 = vld [vmem:[%s1071] sm:$0x3f]
  %1073 = vmatpush.msra.mxu0 %v320
  %1074 = vmatpush.msra.mxu0 %v317
  %1075 = vmatpush.msra.mxu0 %v314
  %1076 = vmatpush.msra.mxu0 %v311
  %1077 = vmatpush.msra.mxu0 %v308
  %1078 = vmatpush.msra.mxu0 %v305
  %1079 = vmatpush.msra.mxu0 %v302
  %1080 = vmatpush.msra.mxu0 %v299
  %1081 = vmatpush.msra.mxu0 %v296
  %1082 = vmatpush.msra.mxu0 %v293
  %1083 = vmatpush.msra.mxu0 %v290
  %1084 = vmatpush.msra.mxu0 %v287
  %1085 = vmatpush.msra.mxu0 %v284
  %1086 = vmatpush.msra.mxu0 %v281
  %1087 = vmatpush.msra.mxu0 %v278
  %1088 = vmatpush.msra.mxu0 %v275
  %1089 = vmatmul.f32.gmra.mxu0 %v981
  %v1090 = vpop.f32.mrf.mxu0
  %v1091 = vadd.f32 0.0, %v1090
  %1092 = vdwg.mxu0
  %1093 = vmatpush.msra.mxu0 %v321
  %1094 = vmatpush.msra.mxu0 %v318
  %1095 = vmatpush.msra.mxu0 %v315
  %1096 = vmatpush.msra.mxu0 %v312
  %1097 = vmatpush.msra.mxu0 %v309
  %1098 = vmatpush.msra.mxu0 %v306
  %1099 = vmatpush.msra.mxu0 %v303
  %1100 = vmatpush.msra.mxu0 %v300
  %1101 = vmatpush.msra.mxu0 %v297
  %1102 = vmatpush.msra.mxu0 %v294
  %1103 = vmatpush.msra.mxu0 %v291
  %1104 = vmatpush.msra.mxu0 %v288
  %1105 = vmatpush.msra.mxu0 %v285
  %1106 = vmatpush.msra.mxu0 %v282
  %1107 = vmatpush.msra.mxu0 %v279
  %1108 = vmatpush.msra.mxu0 %v276
  %1109 = vmatmul.f32.gmra.mxu0 %v981
  %v1110 = vpop.f32.mrf.mxu0
  %v1111 = vadd.f32 0.0, %v1110
  %1112 = vdwg.mxu0
  %1113 = vmatpush.msra.mxu0 %v322
  %1114 = vmatpush.msra.mxu0 %v319
  %1115 = vmatpush.msra.mxu0 %v316
  %1116 = vmatpush.msra.mxu0 %v313
  %1117 = vmatpush.msra.mxu0 %v310
  %1118 = vmatpush.msra.mxu0 %v307
  %1119 = vmatpush.msra.mxu0 %v304
  %1120 = vmatpush.msra.mxu0 %v301
  %1121 = vmatpush.msra.mxu0 %v298
  %1122 = vmatpush.msra.mxu0 %v295
  %1123 = vmatpush.msra.mxu0 %v292
  %1124 = vmatpush.msra.mxu0 %v289
  %1125 = vmatpush.msra.mxu0 %v286
  %1126 = vmatpush.msra.mxu0 %v283
  %1127 = vmatpush.msra.mxu0 %v280
  %1128 = vmatpush.msra.mxu0 %v277
  %1129 = vmatmul.f32.gmra.mxu0 %v981
  %v1130 = vpop.f32.mrf.mxu0
  %v1131 = vadd.f32 0.0, %v1130
  %1132 = vdwg.mxu0
  %v1133 = vadd.f32 %v1072, %v1091
  %v1134 = vmul.f32 %v1133, 0.5
  %v1135 = vtanh.pop %v1134
  %v1136 = vadd.f32 %v1135, 1.0
  %v1137 = vmul.f32 %v1136, 0.5
  %v1139 = vrot.slane %v1072, 2
  %v1141 = vadd.f32 %v1139, %v1111
  %v1142 = vmul.f32 %v1141, 0.5
  %v1143 = vtanh.pop %v1142
  %v1144 = vadd.f32 %v1143, 1.0
  %v1145 = vmul.f32 %v1144, 0.5
  %v1146 = vadd.f32 %v1131, %v372
  %v1147 = vmul.f32 %v1137, %v1146
  %v1148 = vrot.slane %v1072, 4
  %v1150 = vadd.f32 %v1148, %v1147
  %v1151 = vtanh.pop %v1150
  %v1152 = vsub.f32 1.0, %v1145
  %v1153 = vmul.f32 %v1152, %v1151
  %v1154 = vmul.f32 %v1145, %v981
  %v1155 = vadd.f32 %v1153, %v1154
  %s1156 = scalar_lea.vmem %s4, 8
  %1157 = vst [vmem:[%s1156] sm:$0x3] %v1155
  %s1158 = scalar_lea.vmem %s45, 18
  %v1159 = vld [vmem:[%s1158] sm:$0x3f]
  %1160 = vmatpush.msra.mxu0 %v369
  %1161 = vmatpush.msra.mxu0 %v366
  %1162 = vmatpush.msra.mxu0 %v363
  %1163 = vmatpush.msra.mxu0 %v360
  %1164 = vmatpush.msra.mxu0 %v357
  %1165 = vmatpush.msra.mxu0 %v354
  %1166 = vmatpush.msra.mxu0 %v351
  %1167 = vmatpush.msra.mxu0 %v348
  %1168 = vmatpush.msra.mxu0 %v345
  %1169 = vmatpush.msra.mxu0 %v342
  %1170 = vmatpush.msra.mxu0 %v339
  %1171 = vmatpush.msra.mxu0 %v336
  %1172 = vmatpush.msra.mxu0 %v333
  %1173 = vmatpush.msra.mxu0 %v330
  %1174 = vmatpush.msra.mxu0 %v327
  %1175 = vmatpush.msra.mxu0 %v324
  %1176 = vmatmul.f32.gmra.mxu0 %v1068
  %v1177 = vpop.f32.mrf.mxu0
  %v1178 = vadd.f32 0.0, %v1177
  %1179 = vdwg.mxu0
  %1180 = vmatpush.msra.mxu0 %v370
  %1181 = vmatpush.msra.mxu0 %v367
  %1182 = vmatpush.msra.mxu0 %v364
  %1183 = vmatpush.msra.mxu0 %v361
  %1184 = vmatpush.msra.mxu0 %v358
  %1185 = vmatpush.msra.mxu0 %v355
  %1186 = vmatpush.msra.mxu0 %v352
  %1187 = vmatpush.msra.mxu0 %v349
  %1188 = vmatpush.msra.mxu0 %v346
  %1189 = vmatpush.msra.mxu0 %v343
  %1190 = vmatpush.msra.mxu0 %v340
  %1191 = vmatpush.msra.mxu0 %v337
  %1192 = vmatpush.msra.mxu0 %v334
  %1193 = vmatpush.msra.mxu0 %v331
  %1194 = vmatpush.msra.mxu0 %v328
  %1195 = vmatpush.msra.mxu0 %v325
  %1196 = vmatmul.f32.gmra.mxu0 %v1068
  %v1197 = vpop.f32.mrf.mxu0
  %v1198 = vadd.f32 0.0, %v1197
  %1199 = vdwg.mxu0
  %1200 = vmatpush.msra.mxu0 %v371
  %1201 = vmatpush.msra.mxu0 %v368
  %1202 = vmatpush.msra.mxu0 %v365
  %1203 = vmatpush.msra.mxu0 %v362
  %1204 = vmatpush.msra.mxu0 %v359
  %1205 = vmatpush.msra.mxu0 %v356
  %1206 = vmatpush.msra.mxu0 %v353
  %1207 = vmatpush.msra.mxu0 %v350
  %1208 = vmatpush.msra.mxu0 %v347
  %1209 = vmatpush.msra.mxu0 %v344
  %1210 = vmatpush.msra.mxu0 %v341
  %1211 = vmatpush.msra.mxu0 %v338
  %1212 = vmatpush.msra.mxu0 %v335
  %1213 = vmatpush.msra.mxu0 %v332
  %1214 = vmatpush.msra.mxu0 %v329
  %1215 = vmatpush.msra.mxu0 %v326
  %1216 = vmatmul.f32.gmra.mxu0 %v1068
  %v1217 = vpop.f32.mrf.mxu0
  %v1218 = vadd.f32 0.0, %v1217
  %1219 = vdwg.mxu0
  %v1220 = vadd.f32 %v1159, %v1178
  %v1221 = vmul.f32 %v1220, 0.5
  %v1222 = vtanh.pop %v1221
  %v1223 = vadd.f32 %v1222, 1.0
  %v1224 = vmul.f32 %v1223, 0.5
  %v1226 = vrot.slane %v1159, 2
  %v1228 = vadd.f32 %v1226, %v1198
  %v1229 = vmul.f32 %v1228, 0.5
  %v1230 = vtanh.pop %v1229
  %v1231 = vadd.f32 %v1230, 1.0
  %v1232 = vmul.f32 %v1231, 0.5
  %v1233 = vadd.f32 %v1218, %v374
  %v1234 = vmul.f32 %v1224, %v1233
  %v1235 = vrot.slane %v1159, 4
  %v1237 = vadd.f32 %v1235, %v1234
  %v1238 = vtanh.pop %v1237
  %v1239 = vsub.f32 1.0, %v1232
  %v1240 = vmul.f32 %v1239, %v1238
  %v1241 = vmul.f32 %v1232, %v1068
  %v1242 = vadd.f32 %v1240, %v1241
  %s1243 = scalar_lea.vmem %s53, 6
  %1244 = vst [vmem:[%s1243] sm:$0x3] %v1242
  %s1245 = scalar_lea.vmem %s0, 30
  %v1246 = vld [vmem:[%s1245] sm:$0x3f]
  %1247 = vmatpush.msra.mxu0 %v320
  %1248 = vmatpush.msra.mxu0 %v317
  %1249 = vmatpush.msra.mxu0 %v314
  %1250 = vmatpush.msra.mxu0 %v311
  %1251 = vmatpush.msra.mxu0 %v308
  %1252 = vmatpush.msra.mxu0 %v305
  %1253 = vmatpush.msra.mxu0 %v302
  %1254 = vmatpush.msra.mxu0 %v299
  %1255 = vmatpush.msra.mxu0 %v296
  %1256 = vmatpush.msra.mxu0 %v293
  %1257 = vmatpush.msra.mxu0 %v290
  %1258 = vmatpush.msra.mxu0 %v287
  %1259 = vmatpush.msra.mxu0 %v284
  %1260 = vmatpush.msra.mxu0 %v281
  %1261 = vmatpush.msra.mxu0 %v278
  %1262 = vmatpush.msra.mxu0 %v275
  %1263 = vmatmul.f32.gmra.mxu0 %v1155
  %v1264 = vpop.f32.mrf.mxu0
  %v1265 = vadd.f32 0.0, %v1264
  %1266 = vdwg.mxu0
  %1267 = vmatpush.msra.mxu0 %v321
  %1268 = vmatpush.msra.mxu0 %v318
  %1269 = vmatpush.msra.mxu0 %v315
  %1270 = vmatpush.msra.mxu0 %v312
  %1271 = vmatpush.msra.mxu0 %v309
  %1272 = vmatpush.msra.mxu0 %v306
  %1273 = vmatpush.msra.mxu0 %v303
  %1274 = vmatpush.msra.mxu0 %v300
  %1275 = vmatpush.msra.mxu0 %v297
  %1276 = vmatpush.msra.mxu0 %v294
  %1277 = vmatpush.msra.mxu0 %v291
  %1278 = vmatpush.msra.mxu0 %v288
  %1279 = vmatpush.msra.mxu0 %v285
  %1280 = vmatpush.msra.mxu0 %v282
  %1281 = vmatpush.msra.mxu0 %v279
  %1282 = vmatpush.msra.mxu0 %v276
  %1283 = vmatmul.f32.gmra.mxu0 %v1155
  %v1284 = vpop.f32.mrf.mxu0
  %v1285 = vadd.f32 0.0, %v1284
  %1286 = vdwg.mxu0
  %1287 = vmatpush.msra.mxu0 %v322
  %1288 = vmatpush.msra.mxu0 %v319
  %1289 = vmatpush.msra.mxu0 %v316
  %1290 = vmatpush.msra.mxu0 %v313
  %1291 = vmatpush.msra.mxu0 %v310
  %1292 = vmatpush.msra.mxu0 %v307
  %1293 = vmatpush.msra.mxu0 %v304
  %1294 = vmatpush.msra.mxu0 %v301
  %1295 = vmatpush.msra.mxu0 %v298
  %1296 = vmatpush.msra.mxu0 %v295
  %1297 = vmatpush.msra.mxu0 %v292
  %1298 = vmatpush.msra.mxu0 %v289
  %1299 = vmatpush.msra.mxu0 %v286
  %1300 = vmatpush.msra.mxu0 %v283
  %1301 = vmatpush.msra.mxu0 %v280
  %1302 = vmatpush.msra.mxu0 %v277
  %1303 = vmatmul.f32.gmra.mxu0 %v1155
  %v1304 = vpop.f32.mrf.mxu0
  %v1305 = vadd.f32 0.0, %v1304
  %1306 = vdwg.mxu0
  %v1307 = vadd.f32 %v1246, %v1265
  %v1308 = vmul.f32 %v1307, 0.5
  %v1309 = vtanh.pop %v1308
  %v1310 = vadd.f32 %v1309, 1.0
  %v1311 = vmul.f32 %v1310, 0.5
  %v1313 = vrot.slane %v1246, 2
  %v1315 = vadd.f32 %v1313, %v1285
  %v1316 = vmul.f32 %v1315, 0.5
  %v1317 = vtanh.pop %v1316
  %v1318 = vadd.f32 %v1317, 1.0
  %v1319 = vmul.f32 %v1318, 0.5
  %v1320 = vadd.f32 %v1305, %v372
  %v1321 = vmul.f32 %v1311, %v1320
  %v1322 = vrot.slane %v1246, 4
  %v1324 = vadd.f32 %v1322, %v1321
  %v1325 = vtanh.pop %v1324
  %v1326 = vsub.f32 1.0, %v1319
  %v1327 = vmul.f32 %v1326, %v1325
  %v1328 = vmul.f32 %v1319, %v1155
  %v1329 = vadd.f32 %v1327, %v1328
  %s1330 = scalar_lea.vmem %s4, 10
  %1331 = vst [vmem:[%s1330] sm:$0x3] %v1329
  %s1332 = scalar_lea.vmem %s45, 12
  %v1333 = vld [vmem:[%s1332] sm:$0x3f]
  %1334 = vmatpush.msra.mxu0 %v369
  %1335 = vmatpush.msra.mxu0 %v366
  %1336 = vmatpush.msra.mxu0 %v363
  %1337 = vmatpush.msra.mxu0 %v360
  %1338 = vmatpush.msra.mxu0 %v357
  %1339 = vmatpush.msra.mxu0 %v354
  %1340 = vmatpush.msra.mxu0 %v351
  %1341 = vmatpush.msra.mxu0 %v348
  %1342 = vmatpush.msra.mxu0 %v345
  %1343 = vmatpush.msra.mxu0 %v342
  %1344 = vmatpush.msra.mxu0 %v339
  %1345 = vmatpush.msra.mxu0 %v336
  %1346 = vmatpush.msra.mxu0 %v333
  %1347 = vmatpush.msra.mxu0 %v330
  %1348 = vmatpush.msra.mxu0 %v327
  %1349 = vmatpush.msra.mxu0 %v324
  %1350 = vmatmul.f32.gmra.mxu0 %v1242
  %v1351 = vpop.f32.mrf.mxu0
  %v1352 = vadd.f32 0.0, %v1351
  %1353 = vdwg.mxu0
  %1354 = vmatpush.msra.mxu0 %v370
  %1355 = vmatpush.msra.mxu0 %v367
  %1356 = vmatpush.msra.mxu0 %v364
  %1357 = vmatpush.msra.mxu0 %v361
  %1358 = vmatpush.msra.mxu0 %v358
  %1359 = vmatpush.msra.mxu0 %v355
  %1360 = vmatpush.msra.mxu0 %v352
  %1361 = vmatpush.msra.mxu0 %v349
  %1362 = vmatpush.msra.mxu0 %v346
  %1363 = vmatpush.msra.mxu0 %v343
  %1364 = vmatpush.msra.mxu0 %v340
  %1365 = vmatpush.msra.mxu0 %v337
  %1366 = vmatpush.msra.mxu0 %v334
  %1367 = vmatpush.msra.mxu0 %v331
  %1368 = vmatpush.msra.mxu0 %v328
  %1369 = vmatpush.msra.mxu0 %v325
  %1370 = vmatmul.f32.gmra.mxu0 %v1242
  %v1371 = vpop.f32.mrf.mxu0
  %v1372 = vadd.f32 0.0, %v1371
  %1373 = vdwg.mxu0
  %1374 = vmatpush.msra.mxu0 %v371
  %1375 = vmatpush.msra.mxu0 %v368
  %1376 = vmatpush.msra.mxu0 %v365
  %1377 = vmatpush.msra.mxu0 %v362
  %1378 = vmatpush.msra.mxu0 %v359
  %1379 = vmatpush.msra.mxu0 %v356
  %1380 = vmatpush.msra.mxu0 %v353
  %1381 = vmatpush.msra.mxu0 %v350
  %1382 = vmatpush.msra.mxu0 %v347
  %1383 = vmatpush.msra.mxu0 %v344
  %1384 = vmatpush.msra.mxu0 %v341
  %1385 = vmatpush.msra.mxu0 %v338
  %1386 = vmatpush.msra.mxu0 %v335
  %1387 = vmatpush.msra.mxu0 %v332
  %1388 = vmatpush.msra.mxu0 %v329
  %1389 = vmatpush.msra.mxu0 %v326
  %1390 = vmatmul.f32.gmra.mxu0 %v1242
  %v1391 = vpop.f32.mrf.mxu0
  %v1392 = vadd.f32 0.0, %v1391
  %1393 = vdwg.mxu0
  %v1394 = vadd.f32 %v1333, %v1352
  %v1395 = vmul.f32 %v1394, 0.5
  %v1396 = vtanh.pop %v1395
  %v1397 = vadd.f32 %v1396, 1.0
  %v1398 = vmul.f32 %v1397, 0.5
  %v1400 = vrot.slane %v1333, 2
  %v1402 = vadd.f32 %v1400, %v1372
  %v1403 = vmul.f32 %v1402, 0.5
  %v1404 = vtanh.pop %v1403
  %v1405 = vadd.f32 %v1404, 1.0
  %v1406 = vmul.f32 %v1405, 0.5
  %v1407 = vadd.f32 %v1392, %v374
  %v1408 = vmul.f32 %v1398, %v1407
  %v1409 = vrot.slane %v1333, 4
  %v1411 = vadd.f32 %v1409, %v1408
  %v1412 = vtanh.pop %v1411
  %v1413 = vsub.f32 1.0, %v1406
  %v1414 = vmul.f32 %v1413, %v1412
  %v1415 = vmul.f32 %v1406, %v1242
  %v1416 = vadd.f32 %v1414, %v1415
  %s1417 = scalar_lea.vmem %s53, 4
  %1418 = vst [vmem:[%s1417] sm:$0x3] %v1416
  %s1419 = scalar_lea.vmem %s0, 36
  %v1420 = vld [vmem:[%s1419] sm:$0x3f]
  %1421 = vmatpush.msra.mxu0 %v320
  %1422 = vmatpush.msra.mxu0 %v317
  %1423 = vmatpush.msra.mxu0 %v314
  %1424 = vmatpush.msra.mxu0 %v311
  %1425 = vmatpush.msra.mxu0 %v308
  %1426 = vmatpush.msra.mxu0 %v305
  %1427 = vmatpush.msra.mxu0 %v302
  %1428 = vmatpush.msra.mxu0 %v299
  %1429 = vmatpush.msra.mxu0 %v296
  %1430 = vmatpush.msra.mxu0 %v293
  %1431 = vmatpush.msra.mxu0 %v290
  %1432 = vmatpush.msra.mxu0 %v287
  %1433 = vmatpush.msra.mxu0 %v284
  %1434 = vmatpush.msra.mxu0 %v281
  %1435 = vmatpush.msra.mxu0 %v278
  %1436 = vmatpush.msra.mxu0 %v275
  %1437 = vmatmul.f32.gmra.mxu0 %v1329
  %v1438 = vpop.f32.mrf.mxu0
  %v1439 = vadd.f32 0.0, %v1438
  %1440 = vdwg.mxu0
  %1441 = vmatpush.msra.mxu0 %v321
  %1442 = vmatpush.msra.mxu0 %v318
  %1443 = vmatpush.msra.mxu0 %v315
  %1444 = vmatpush.msra.mxu0 %v312
  %1445 = vmatpush.msra.mxu0 %v309
  %1446 = vmatpush.msra.mxu0 %v306
  %1447 = vmatpush.msra.mxu0 %v303
  %1448 = vmatpush.msra.mxu0 %v300
  %1449 = vmatpush.msra.mxu0 %v297
  %1450 = vmatpush.msra.mxu0 %v294
  %1451 = vmatpush.msra.mxu0 %v291
  %1452 = vmatpush.msra.mxu0 %v288
  %1453 = vmatpush.msra.mxu0 %v285
  %1454 = vmatpush.msra.mxu0 %v282
  %1455 = vmatpush.msra.mxu0 %v279
  %1456 = vmatpush.msra.mxu0 %v276
  %1457 = vmatmul.f32.gmra.mxu0 %v1329
  %v1458 = vpop.f32.mrf.mxu0
  %v1459 = vadd.f32 0.0, %v1458
  %1460 = vdwg.mxu0
  %1461 = vmatpush.msra.mxu0 %v322
  %1462 = vmatpush.msra.mxu0 %v319
  %1463 = vmatpush.msra.mxu0 %v316
  %1464 = vmatpush.msra.mxu0 %v313
  %1465 = vmatpush.msra.mxu0 %v310
  %1466 = vmatpush.msra.mxu0 %v307
  %1467 = vmatpush.msra.mxu0 %v304
  %1468 = vmatpush.msra.mxu0 %v301
  %1469 = vmatpush.msra.mxu0 %v298
  %1470 = vmatpush.msra.mxu0 %v295
  %1471 = vmatpush.msra.mxu0 %v292
  %1472 = vmatpush.msra.mxu0 %v289
  %1473 = vmatpush.msra.mxu0 %v286
  %1474 = vmatpush.msra.mxu0 %v283
  %1475 = vmatpush.msra.mxu0 %v280
  %1476 = vmatpush.msra.mxu0 %v277
  %1477 = vmatmul.f32.gmra.mxu0 %v1329
  %v1478 = vpop.f32.mrf.mxu0
  %v1479 = vadd.f32 0.0, %v1478
  %1480 = vdwg.mxu0
  %v1481 = vadd.f32 %v1420, %v1439
  %v1482 = vmul.f32 %v1481, 0.5
  %v1483 = vtanh.pop %v1482
  %v1484 = vadd.f32 %v1483, 1.0
  %v1485 = vmul.f32 %v1484, 0.5
  %v1487 = vrot.slane %v1420, 2
  %v1489 = vadd.f32 %v1487, %v1459
  %v1490 = vmul.f32 %v1489, 0.5
  %v1491 = vtanh.pop %v1490
  %v1492 = vadd.f32 %v1491, 1.0
  %v1493 = vmul.f32 %v1492, 0.5
  %v1494 = vadd.f32 %v1479, %v372
  %v1495 = vmul.f32 %v1485, %v1494
  %v1496 = vrot.slane %v1420, 4
  %v1498 = vadd.f32 %v1496, %v1495
  %v1499 = vtanh.pop %v1498
  %v1500 = vsub.f32 1.0, %v1493
  %v1501 = vmul.f32 %v1500, %v1499
  %v1502 = vmul.f32 %v1493, %v1329
  %v1503 = vadd.f32 %v1501, %v1502
  %s1504 = scalar_lea.vmem %s4, 12
  %1505 = vst [vmem:[%s1504] sm:$0x3] %v1503
  %s1506 = scalar_lea.vmem %s45, 6
  %v1507 = vld [vmem:[%s1506] sm:$0x3f]
  %1508 = vmatpush.msra.mxu0 %v369
  %1509 = vmatpush.msra.mxu0 %v366
  %1510 = vmatpush.msra.mxu0 %v363
  %1511 = vmatpush.msra.mxu0 %v360
  %1512 = vmatpush.msra.mxu0 %v357
  %1513 = vmatpush.msra.mxu0 %v354
  %1514 = vmatpush.msra.mxu0 %v351
  %1515 = vmatpush.msra.mxu0 %v348
  %1516 = vmatpush.msra.mxu0 %v345
  %1517 = vmatpush.msra.mxu0 %v342
  %1518 = vmatpush.msra.mxu0 %v339
  %1519 = vmatpush.msra.mxu0 %v336
  %1520 = vmatpush.msra.mxu0 %v333
  %1521 = vmatpush.msra.mxu0 %v330
  %1522 = vmatpush.msra.mxu0 %v327
  %1523 = vmatpush.msra.mxu0 %v324
  %1524 = vmatmul.f32.gmra.mxu0 %v1416
  %v1525 = vpop.f32.mrf.mxu0
  %v1526 = vadd.f32 0.0, %v1525
  %1527 = vdwg.mxu0
  %1528 = vmatpush.msra.mxu0 %v370
  %1529 = vmatpush.msra.mxu0 %v367
  %1530 = vmatpush.msra.mxu0 %v364
  %1531 = vmatpush.msra.mxu0 %v361
  %1532 = vmatpush.msra.mxu0 %v358
  %1533 = vmatpush.msra.mxu0 %v355
  %1534 = vmatpush.msra.mxu0 %v352
  %1535 = vmatpush.msra.mxu0 %v349
  %1536 = vmatpush.msra.mxu0 %v346
  %1537 = vmatpush.msra.mxu0 %v343
  %1538 = vmatpush.msra.mxu0 %v340
  %1539 = vmatpush.msra.mxu0 %v337
  %1540 = vmatpush.msra.mxu0 %v334
  %1541 = vmatpush.msra.mxu0 %v331
  %1542 = vmatpush.msra.mxu0 %v328
  %1543 = vmatpush.msra.mxu0 %v325
  %1544 = vmatmul.f32.gmra.mxu0 %v1416
  %v1545 = vpop.f32.mrf.mxu0
  %v1546 = vadd.f32 0.0, %v1545
  %1547 = vdwg.mxu0
  %1548 = vmatpush.msra.mxu0 %v371
  %1549 = vmatpush.msra.mxu0 %v368
  %1550 = vmatpush.msra.mxu0 %v365
  %1551 = vmatpush.msra.mxu0 %v362
  %1552 = vmatpush.msra.mxu0 %v359
  %1553 = vmatpush.msra.mxu0 %v356
  %1554 = vmatpush.msra.mxu0 %v353
  %1555 = vmatpush.msra.mxu0 %v350
  %1556 = vmatpush.msra.mxu0 %v347
  %1557 = vmatpush.msra.mxu0 %v344
  %1558 = vmatpush.msra.mxu0 %v341
  %1559 = vmatpush.msra.mxu0 %v338
  %1560 = vmatpush.msra.mxu0 %v335
  %1561 = vmatpush.msra.mxu0 %v332
  %1562 = vmatpush.msra.mxu0 %v329
  %1563 = vmatpush.msra.mxu0 %v326
  %1564 = vmatmul.f32.gmra.mxu0 %v1416
  %v1565 = vpop.f32.mrf.mxu0
  %v1566 = vadd.f32 0.0, %v1565
  %1567 = vdwg.mxu0
  %v1568 = vadd.f32 %v1507, %v1526
  %v1569 = vmul.f32 %v1568, 0.5
  %v1570 = vtanh.pop %v1569
  %v1571 = vadd.f32 %v1570, 1.0
  %v1572 = vmul.f32 %v1571, 0.5
  %v1574 = vrot.slane %v1507, 2
  %v1576 = vadd.f32 %v1574, %v1546
  %v1577 = vmul.f32 %v1576, 0.5
  %v1578 = vtanh.pop %v1577
  %v1579 = vadd.f32 %v1578, 1.0
  %v1580 = vmul.f32 %v1579, 0.5
  %v1581 = vadd.f32 %v1566, %v374
  %v1582 = vmul.f32 %v1572, %v1581
  %v1583 = vrot.slane %v1507, 4
  %v1585 = vadd.f32 %v1583, %v1582
  %v1586 = vtanh.pop %v1585
  %v1587 = vsub.f32 1.0, %v1580
  %v1588 = vmul.f32 %v1587, %v1586
  %v1589 = vmul.f32 %v1580, %v1416
  %v1590 = vadd.f32 %v1588, %v1589
  %s1591 = scalar_lea.vmem %s53, 2
  %1592 = vst [vmem:[%s1591] sm:$0x3] %v1590
  %s1593 = scalar_lea.vmem %s0, 42
  %v1594 = vld [vmem:[%s1593] sm:$0x3f]
  %1595 = vmatpush.msra.mxu0 %v320
  %1596 = vmatpush.msra.mxu0 %v317
  %1597 = vmatpush.msra.mxu0 %v314
  %1598 = vmatpush.msra.mxu0 %v311
  %1599 = vmatpush.msra.mxu0 %v308
  %1600 = vmatpush.msra.mxu0 %v305
  %1601 = vmatpush.msra.mxu0 %v302
  %1602 = vmatpush.msra.mxu0 %v299
  %1603 = vmatpush.msra.mxu0 %v296
  %1604 = vmatpush.msra.mxu0 %v293
  %1605 = vmatpush.msra.mxu0 %v290
  %1606 = vmatpush.msra.mxu0 %v287
  %1607 = vmatpush.msra.mxu0 %v284
  %1608 = vmatpush.msra.mxu0 %v281
  %1609 = vmatpush.msra.mxu0 %v278
  %1610 = vmatpush.msra.mxu0 %v275
  %1611 = vmatmul.f32.gmra.mxu0 %v1503
  %v1612 = vpop.f32.mrf.mxu0
  %v1613 = vadd.f32 0.0, %v1612
  %1614 = vdwg.mxu0
  %1615 = vmatpush.msra.mxu0 %v321
  %1616 = vmatpush.msra.mxu0 %v318
  %1617 = vmatpush.msra.mxu0 %v315
  %1618 = vmatpush.msra.mxu0 %v312
  %1619 = vmatpush.msra.mxu0 %v309
  %1620 = vmatpush.msra.mxu0 %v306
  %1621 = vmatpush.msra.mxu0 %v303
  %1622 = vmatpush.msra.mxu0 %v300
  %1623 = vmatpush.msra.mxu0 %v297
  %1624 = vmatpush.msra.mxu0 %v294
  %1625 = vmatpush.msra.mxu0 %v291
  %1626 = vmatpush.msra.mxu0 %v288
  %1627 = vmatpush.msra.mxu0 %v285
  %1628 = vmatpush.msra.mxu0 %v282
  %1629 = vmatpush.msra.mxu0 %v279
  %1630 = vmatpush.msra.mxu0 %v276
  %1631 = vmatmul.f32.gmra.mxu0 %v1503
  %v1632 = vpop.f32.mrf.mxu0
  %v1633 = vadd.f32 0.0, %v1632
  %1634 = vdwg.mxu0
  %1635 = vmatpush.msra.mxu0 %v322
  %1636 = vmatpush.msra.mxu0 %v319
  %1637 = vmatpush.msra.mxu0 %v316
  %1638 = vmatpush.msra.mxu0 %v313
  %1639 = vmatpush.msra.mxu0 %v310
  %1640 = vmatpush.msra.mxu0 %v307
  %1641 = vmatpush.msra.mxu0 %v304
  %1642 = vmatpush.msra.mxu0 %v301
  %1643 = vmatpush.msra.mxu0 %v298
  %1644 = vmatpush.msra.mxu0 %v295
  %1645 = vmatpush.msra.mxu0 %v292
  %1646 = vmatpush.msra.mxu0 %v289
  %1647 = vmatpush.msra.mxu0 %v286
  %1648 = vmatpush.msra.mxu0 %v283
  %1649 = vmatpush.msra.mxu0 %v280
  %1650 = vmatpush.msra.mxu0 %v277
  %1651 = vmatmul.f32.gmra.mxu0 %v1503
  %v1652 = vpop.f32.mrf.mxu0
  %v1653 = vadd.f32 0.0, %v1652
  %1654 = vdwg.mxu0
  %v1655 = vadd.f32 %v1594, %v1613
  %v1656 = vmul.f32 %v1655, 0.5
  %v1657 = vtanh.pop %v1656
  %v1658 = vadd.f32 %v1657, 1.0
  %v1659 = vmul.f32 %v1658, 0.5
  %v1661 = vrot.slane %v1594, 2
  %v1663 = vadd.f32 %v1661, %v1633
  %v1664 = vmul.f32 %v1663, 0.5
  %v1665 = vtanh.pop %v1664
  %v1666 = vadd.f32 %v1665, 1.0
  %v1667 = vmul.f32 %v1666, 0.5
  %v1668 = vadd.f32 %v1653, %v372
  %v1669 = vmul.f32 %v1659, %v1668
  %v1670 = vrot.slane %v1594, 4
  %v1672 = vadd.f32 %v1670, %v1669
  %v1673 = vtanh.pop %v1672
  %v1674 = vsub.f32 1.0, %v1667
  %v1675 = vmul.f32 %v1674, %v1673
  %v1676 = vmul.f32 %v1667, %v1503
  %v1677 = vadd.f32 %v1675, %v1676
  %s1678 = scalar_lea.vmem %s4, 14
  %1679 = vst [vmem:[%s1678] sm:$0x3] %v1677
  %v1680 = vld [vmem:[%s45] sm:$0x3f]
  %1681 = vmatpush.msra.mxu0 %v369
  %1682 = vmatpush.msra.mxu0 %v366
  %1683 = vmatpush.msra.mxu0 %v363
  %1684 = vmatpush.msra.mxu0 %v360
  %1685 = vmatpush.msra.mxu0 %v357
  %1686 = vmatpush.msra.mxu0 %v354
  %1687 = vmatpush.msra.mxu0 %v351
  %1688 = vmatpush.msra.mxu0 %v348
  %1689 = vmatpush.msra.mxu0 %v345
  %1690 = vmatpush.msra.mxu0 %v342
  %1691 = vmatpush.msra.mxu0 %v339
  %1692 = vmatpush.msra.mxu0 %v336
  %1693 = vmatpush.msra.mxu0 %v333
  %1694 = vmatpush.msra.mxu0 %v330
  %1695 = vmatpush.msra.mxu0 %v327
  %1696 = vmatpush.msra.mxu0 %v324
  %1697 = vmatmul.f32.gmra.mxu0 %v1590
  %v1698 = vpop.f32.mrf.mxu0
  %v1699 = vadd.f32 0.0, %v1698
  %1700 = vdwg.mxu0
  %1701 = vmatpush.msra.mxu0 %v370
  %1702 = vmatpush.msra.mxu0 %v367
  %1703 = vmatpush.msra.mxu0 %v364
  %1704 = vmatpush.msra.mxu0 %v361
  %1705 = vmatpush.msra.mxu0 %v358
  %1706 = vmatpush.msra.mxu0 %v355
  %1707 = vmatpush.msra.mxu0 %v352
  %1708 = vmatpush.msra.mxu0 %v349
  %1709 = vmatpush.msra.mxu0 %v346
  %1710 = vmatpush.msra.mxu0 %v343
  %1711 = vmatpush.msra.mxu0 %v340
  %1712 = vmatpush.msra.mxu0 %v337
  %1713 = vmatpush.msra.mxu0 %v334
  %1714 = vmatpush.msra.mxu0 %v331
  %1715 = vmatpush.msra.mxu0 %v328
  %1716 = vmatpush.msra.mxu0 %v325
  %1717 = vmatmul.f32.gmra.mxu0 %v1590
  %v1718 = vpop.f32.mrf.mxu0
  %v1719 = vadd.f32 0.0, %v1718
  %1720 = vdwg.mxu0
  %1721 = vmatpush.msra.mxu0 %v371
  %1722 = vmatpush.msra.mxu0 %v368
  %1723 = vmatpush.msra.mxu0 %v365
  %1724 = vmatpush.msra.mxu0 %v362
  %1725 = vmatpush.msra.mxu0 %v359
  %1726 = vmatpush.msra.mxu0 %v356
  %1727 = vmatpush.msra.mxu0 %v353
  %1728 = vmatpush.msra.mxu0 %v350
  %1729 = vmatpush.msra.mxu0 %v347
  %1730 = vmatpush.msra.mxu0 %v344
  %1731 = vmatpush.msra.mxu0 %v341
  %1732 = vmatpush.msra.mxu0 %v338
  %1733 = vmatpush.msra.mxu0 %v335
  %1734 = vmatpush.msra.mxu0 %v332
  %1735 = vmatpush.msra.mxu0 %v329
  %1736 = vmatpush.msra.mxu0 %v326
  %1737 = vmatmul.f32.gmra.mxu0 %v1590
  %v1738 = vpop.f32.mrf.mxu0
  %v1739 = vadd.f32 0.0, %v1738
  %1740 = vdwg.mxu0
  %v1741 = vadd.f32 %v1680, %v1699
  %v1742 = vmul.f32 %v1741, 0.5
  %v1743 = vtanh.pop %v1742
  %v1744 = vadd.f32 %v1743, 1.0
  %v1745 = vmul.f32 %v1744, 0.5
  %v1747 = vrot.slane %v1680, 2
  %v1749 = vadd.f32 %v1747, %v1719
  %v1750 = vmul.f32 %v1749, 0.5
  %v1751 = vtanh.pop %v1750
  %v1752 = vadd.f32 %v1751, 1.0
  %v1753 = vmul.f32 %v1752, 0.5
  %v1754 = vadd.f32 %v1739, %v374
  %v1755 = vmul.f32 %v1745, %v1754
  %v1756 = vrot.slane %v1680, 4
  %v1758 = vadd.f32 %v1756, %v1755
  %v1759 = vtanh.pop %v1758
  %v1760 = vsub.f32 1.0, %v1753
  %v1761 = vmul.f32 %v1760, %v1759
  %v1762 = vmul.f32 %v1753, %v1590
  %v1763 = vadd.f32 %v1761, %v1762
  %1764 = vst [vmem:[%s53] sm:$0x3] %v1763
  %1765 = vst [vmem:[#allocation4] sm:$0x3] %v1677
  %1766 = vst [vmem:[#allocation5] sm:$0x3] %v1763
  %s1767 = ssub.s32 0, 0
  %s1768 = smul.u32 8, %s1767
  %p1769 = scmp.lt.s32.totalorder %s1768, 7
  %s1770 = scalar_select %p1769, %s1768, 7
  %s1771 = smul.addr %s1770, 2
  %s1772 = scalar_lea.vmem %s5, %s1771
  // Predicated region
  $region37: #{encoder_forward.1} parent=0 // pred_check
    _
  $region38: #{encoder_forward.1} parent=0 // pred_check_branch
    %1774 = sbr.rel (0) target = $region40
  $region39: #{encoder_forward.1} parent=0 // pred_region
    _
  $region40: #{encoder_forward.1} parent=0 // pred_fallthru
    _
  // Predicated region
  $region41: #{encoder_forward.1} parent=0 // pred_check
    _
  $region42: #{encoder_forward.1} parent=0 // pred_check_branch
    %1776 = sbr.rel (0) target = $region44
  $region43: #{encoder_forward.1} parent=0 // pred_region
    %s1777 = ssub.s32 0, 0
    %s1778 = smul.u32 8, %s1777
  $region44: #{encoder_forward.1} parent=0 // pred_fallthru
    _
  // Predicated region
  $region45: #{encoder_forward.1} parent=0 // pred_check
    _
  $region46: #{encoder_forward.1} parent=0 // pred_check_branch
    %1780 = sbr.rel (0) target = $region48
  $region47: #{encoder_forward.1} parent=0 // pred_region
    _
  $region48: #{encoder_forward.1} parent=0 // pred_fallthru
    _
  // Predicated region
  $region49: #{encoder_forward.1} parent=0 // pred_check
    _
  $region50: #{encoder_forward.1} parent=0 // pred_check_branch
    %1782 = sbr.rel (0) target = $region52
  $region51: #{encoder_forward.1} parent=0 // pred_region
    %s1783 = ssub.s32 0, 0
    %s1784 = smul.u32 8, %s1783
    %p1785 = scmp.lt.s32.totalorder %s1784, 7
    %s1786 = scalar_select %p1785, %s1784, 7
    %s1787 = smul.addr %s1786, 2
    %s1788 = scalar_lea.vmem %s5, %s1787
  $region52: #{encoder_forward.1} parent=0 // pred_fallthru
    _
  %1789 = vsyncmov [#allocation3]
  %s1790 = vpop.sfrf %1789
  %p1791 = scmp.eq.s32.totalorder %s1790, 0
  %p1792 = pneg %p1791
  %1794 = shalt.err (%p1792)

</llo_original>
